<compile_context>
chip_gen: v5e
topology: v5e:2x2
jax: 0.10.0
libtpu: 0.0.40
codegen_flags: <defaults>
</compile_context>

<pallas_src>
import functools
import math

import jax
import jax.numpy as jnp
from jax.experimental import pallas as pl
from jax.experimental.pallas import tpu as pltpu

ACT_DTYPE = jnp.bfloat16


def _round_up(x, m):
    return (x + m - 1) // m * m


def _largest_divisor(n, limit):
    limit = max(1, min(n, limit))
    for d in range(limit, 0, -1):
        if n % d == 0:
            return d
    return 1


def _vmem_limit_bytes():
    # Per-generation scoped-VMEM budget (v5e/v6e: 128 MiB physical,
    # v7x: 64 MiB per TensorCore).  Conservative fallback if query fails.
    try:
        cap = int(pltpu.get_tpu_info().vmem_capacity_bytes)
        return min(3 * cap // 4, 96 * 1024 * 1024)
    except Exception:
        return 40 * 1024 * 1024


VMEM_LIMIT = _vmem_limit_bytes()


def _compiler_params(sem):
    return pltpu.CompilerParams(dimension_semantics=sem,
                                vmem_limit_bytes=VMEM_LIMIT)


def _apply_epilogue(y, s, b, res, act, slope):
    y = y * s + b
    if res is not None:
        y = y + res
    if act == "relu":
        y = jnp.maximum(y, 0.0)
    elif act == "leaky":
        y = jnp.where(y >= 0.0, y, y * slope)
    elif act == "sigmoid":
        y = jax.nn.sigmoid(y)
    return y


# ----------------------------------------------------------------------------
# Fused matmul + per-channel scale/bias (+ residual) + activation
# ----------------------------------------------------------------------------
def _mm_kernel_single(x_ref, w_ref, s_ref, b_ref, o_ref, *, act, slope):
    y = jnp.dot(x_ref[...], w_ref[...], preferred_element_type=jnp.float32)
    o_ref[...] = _apply_epilogue(y, s_ref[...], b_ref[...], None, act,
                                 slope).astype(o_ref.dtype)


def _mm_kernel_single_res(x_ref, w_ref, s_ref, b_ref, r_ref, o_ref, *, act,
                          slope):
    y = jnp.dot(x_ref[...], w_ref[...], preferred_element_type=jnp.float32)
    res = r_ref[...].astype(jnp.float32)
    o_ref[...] = _apply_epilogue(y, s_ref[...], b_ref[...], res, act,
                                 slope).astype(o_ref.dtype)


def _mm_kernel_multi(x_ref, w_ref, s_ref, b_ref, o_ref, acc_ref, *, act,
                     slope):
    @pl.when(pl.program_id(2) == 0)
    def _():
        acc_ref[...] = jnp.zeros_like(acc_ref)

    acc_ref[...] += jnp.dot(x_ref[...], w_ref[...],
                            preferred_element_type=jnp.float32)

    @pl.when(pl.program_id(2) == pl.num_programs(2) - 1)
    def _():
        o_ref[...] = _apply_epilogue(acc_ref[...], s_ref[...], b_ref[...],
                                     None, act, slope).astype(o_ref.dtype)


_MM_CACHE = {}


def _mm_single_call(Mp, K, N, tm, tn, act, slope, out_dtype, with_res):
    key = ("mm1", Mp, K, N, tm, tn, act, slope, out_dtype, with_res)
    if key not in _MM_CACHE:
        base_specs = [
            pl.BlockSpec((tm, K), lambda i, j: (i, 0)),
            pl.BlockSpec((K, tn), lambda i, j: (0, j)),
            pl.BlockSpec((1, tn), lambda i, j: (0, j)),
            pl.BlockSpec((1, tn), lambda i, j: (0, j)),
        ]
        if with_res:
            kernel = functools.partial(_mm_kernel_single_res, act=act,
                                       slope=slope)
            in_specs = base_specs + [pl.BlockSpec((tm, tn),
                                                  lambda i, j: (i, j))]
        else:
            kernel = functools.partial(_mm_kernel_single, act=act, slope=slope)
            in_specs = base_specs
        _MM_CACHE[key] = pl.pallas_call(
            kernel,
            out_shape=jax.ShapeDtypeStruct((Mp, N), out_dtype),
            grid_spec=pltpu.PrefetchScalarGridSpec(
                num_scalar_prefetch=0,
                grid=(Mp // tm, N // tn),
                in_specs=in_specs,
                out_specs=pl.BlockSpec((tm, tn), lambda i, j: (i, j)),
            ),
            compiler_params=_compiler_params(("parallel", "parallel")),
        )
    return _MM_CACHE[key]


def _mm_multi_call(Mp, Kp, N, tm, tk, tn, act, slope, out_dtype):
    key = ("mmk", Mp, Kp, N, tm, tk, tn, act, slope, out_dtype)
    if key not in _MM_CACHE:
        _MM_CACHE[key] = pl.pallas_call(
            functools.partial(_mm_kernel_multi, act=act, slope=slope),
            out_shape=jax.ShapeDtypeStruct((Mp, N), out_dtype),
            grid_spec=pltpu.PrefetchScalarGridSpec(
                num_scalar_prefetch=0,
                grid=(Mp // tm, N // tn, Kp // tk),
                in_specs=[
                    pl.BlockSpec((tm, tk), lambda i, j, k: (i, k)),
                    pl.BlockSpec((tk, tn), lambda i, j, k: (k, j)),
                    pl.BlockSpec((1, tn), lambda i, j, k: (0, j)),
                    pl.BlockSpec((1, tn), lambda i, j, k: (0, j)),
                ],
                out_specs=pl.BlockSpec((tm, tn), lambda i, j, k: (i, j)),
                scratch_shapes=[pltpu.VMEM((tm, tn), jnp.float32)],
            ),
            compiler_params=_compiler_params(
                ("parallel", "parallel", "arbitrary")),
        )
    return _MM_CACHE[key]


def _pick_tm(M):
    """Adaptive M-tile: minimize zero-padding while staying MXU friendly."""
    if M <= 512:
        return _round_up(M, 8)
    best_tm, best_pad = 512, _round_up(M, 512) - M
    for tm in (448, 384, 320, 256, 192, 128):
        pad = _round_up(M, tm) - M
        if pad < best_pad:
            best_tm, best_pad = tm, pad
    return best_tm


def _pick_tk(K):
    if K <= 4096:
        return K, K
    for d in range(K // 128, 0, -1):
        tk = 128 * d
        if tk <= 4096 and K % tk == 0:
            return tk, K
    return 2048, _round_up(K, 2048)


def matmul_bn_act(x, w, scale, bias, act="none", slope=0.0, residual=None,
                  out_dtype=ACT_DTYPE):
    """(M,K) @ (K,N) * scale[N] + bias[N] (+ residual) (+ act), bf16 MXU."""
    M, K = x.shape
    K2, N = w.shape
    assert K == K2, (x.shape, w.shape)

    tm = _pick_tm(M)
    Mp = _round_up(M, tm)
    tk, Kp = _pick_tk(K)
    # Full-N resident weights; split N when the M grid collapses to one tile
    # so a second TensorCore still gets a parallel block.
    if Mp == tm and N >= 256 and N % 256 == 0:
        tn = N // 2
    else:
        tn = N

    xb = x.astype(jnp.bfloat16)
    if Mp != M or Kp != K:
        xb = jnp.pad(xb, ((0, Mp - M), (0, Kp - K)))
    wb = w.astype(jnp.bfloat16)
    if Kp != K:
        wb = jnp.pad(wb, ((0, Kp - K), (0, 0)))
    s2 = scale.reshape(1, N).astype(jnp.float32)
    b2 = bias.reshape(1, N).astype(jnp.float32)

    if residual is not None:
        assert Kp // tk == 1, "fused residual requires the single-K path"
        rb = residual.astype(ACT_DTYPE)
        if Mp != M:
            rb = jnp.pad(rb, ((0, Mp - M), (0, 0)))
        out = _mm_single_call(Mp, K, N, tm, tn, act, slope, out_dtype,
                              True)(xb, wb, s2, b2, rb)
    elif Kp // tk == 1:
        out = _mm_single_call(Mp, K, N, tm, tn, act, slope, out_dtype,
                              False)(xb, wb, s2, b2)
    else:
        out = _mm_multi_call(Mp, Kp, N, tm, tk, tn, act, slope,
                             out_dtype)(xb, wb, s2, b2)
    if Mp != M:
        out = out[:M]
    return out


# ----------------------------------------------------------------------------
# 3x3 stride-1 conv: taps accumulated from a resident padded NHWC sample
# ----------------------------------------------------------------------------
def _conv3x3_kernel(x_ref, w_ref, s_ref, b_ref, o_ref, *, th, wo, ws, act,
                    slope):
    # x_ref: (1, H+2, ws+2, C)   w_ref: (9, C, tn)   o_ref: (1, th, wo, tn)
    row0 = pl.program_id(2) * th
    c = w_ref.shape[1]
    tn = w_ref.shape[2]
    acc = jnp.zeros((th * ws, tn), jnp.float32)
    for di in range(3):
        for dj in range(3):
            patch = x_ref[:, pl.ds(row0 + di, th), pl.ds(dj, ws), :]
            acc = acc + jnp.dot(patch.reshape(th * ws, c),
                                w_ref[di * 3 + dj],
                                preferred_element_type=jnp.float32)
    y = _apply_epilogue(acc, s_ref[...], b_ref[...], None, act, slope)
    y = y.reshape(th, ws, tn)
    if wo != ws:
        y = y[:, :wo, :]
    o_ref[...] = y[None].astype(o_ref.dtype)


_CONV3_CACHE = {}


def conv3x3_iabn(x, p, act="leaky", slope=1e-3):
    """3x3 stride-1 'same' conv + folded eval InplaceABN + activation."""
    n, h, w, c = x.shape
    wgt = p["w"]                        # (9, Cin, Cout)
    assert wgt.shape[1] == c, (wgt.shape, x.shape)
    cout = wgt.shape[2]

    ws = _round_up(w, 8)                # lane/sublane friendly column span
    xp = jnp.pad(x.astype(ACT_DTYPE),
                 ((0, 0), (1, 1), (1, ws - w + 1), (0, 0)))

    tn = cout
    while tn % 256 == 0 and 9 * c * tn * 2 > 6 * 1024 * 1024:
        tn //= 2
    mt = max(8, (2 * 1024 * 1024) // (tn * 4))
    th = 1
    for d in range(1, h + 1):
        if h % d == 0 and d * ws <= mt:
            th = d

    key = (n, h, w, c, cout, tn, th, act, slope)
    if key not in _CONV3_CACHE:
        _CONV3_CACHE[key] = pl.pallas_call(
            functools.partial(_conv3x3_kernel, th=th, wo=w, ws=ws, act=act,
                              slope=slope),
            out_shape=jax.ShapeDtypeStruct((n, h, w, cout), ACT_DTYPE),
            grid_spec=pltpu.PrefetchScalarGridSpec(
                num_scalar_prefetch=0,
                grid=(n, cout // tn, h // th),
                in_specs=[
                    pl.BlockSpec((1, h + 2, ws + 2, c),
                                 lambda b, j, r: (b, 0, 0, 0)),
                    pl.BlockSpec((9, c, tn), lambda b, j, r: (0, 0, j)),
                    pl.BlockSpec((1, tn), lambda b, j, r: (0, j)),
                    pl.BlockSpec((1, tn), lambda b, j, r: (0, j)),
                ],
                out_specs=pl.BlockSpec((1, th, w, tn),
                                       lambda b, j, r: (b, r, 0, j)),
            ),
            compiler_params=_compiler_params(
                ("parallel", "parallel", "parallel")),
        )
    s2 = p["scale"].reshape(1, cout).astype(jnp.float32)
    b2 = p["bias"].reshape(1, cout).astype(jnp.float32)
    return _CONV3_CACHE[key](xp, wgt.astype(jnp.bfloat16), s2, b2)


# ----------------------------------------------------------------------------
# Blur pool (anti-aliasing) / 2x2 avg pool: in-kernel shifted tap sums over
# parity sub-grids (no T-way slice stacking in HBM)
# ----------------------------------------------------------------------------
def _pool_kernel(e0_ref, e1_ref, e2_ref, e3_ref, o_ref, *, toh, ow, taps):
    refs = (e0_ref, e1_ref, e2_ref, e3_ref)
    r0 = pl.program_id(1) * toh
    acc = None
    for idx, da, db, wt in taps:
        v = refs[idx][:, pl.ds(r0 + da, toh), pl.ds(db, ow), :]
        v = v.astype(jnp.float32) * wt
        acc = v if acc is None else acc + v
    o_ref[...] = acc.astype(o_ref.dtype)


_POOL_CACHE = {}


def _pool_call(n, he, we, c, oh, ow, toh, taps):
    key = (n, he, we, c, oh, ow, toh, taps)
    if key not in _POOL_CACHE:
        espec = pl.BlockSpec((1, he, we, c), lambda b, r: (b, 0, 0, 0))
        _POOL_CACHE[key] = pl.pallas_call(
            functools.partial(_pool_kernel, toh=toh, ow=ow, taps=taps),
            out_shape=jax.ShapeDtypeStruct((n, oh, ow, c), ACT_DTYPE),
            grid_spec=pltpu.PrefetchScalarGridSpec(
                num_scalar_prefetch=0,
                grid=(n, oh // toh),
                in_specs=[espec, espec, espec, espec],
                out_specs=pl.BlockSpec((1, toh, ow, c),
                                       lambda b, r: (b, r, 0, 0)),
            ),
            compiler_params=_compiler_params(("parallel", "parallel")),
        )
    return _POOL_CACHE[key]


def _parity_split(x):
    return [x[:, p::2, q::2, :] for p in (0, 1) for q in (0, 1)]


def blur_pool(x):
    """TResNet aa_layer: reflect-pad, depthwise [1,2,1]x[1,2,1]/16, stride 2."""
    n, h, w, c = x.shape
    oh, ow = h // 2, w // 2
    xp = jnp.pad(x, ((0, 0), (1, 1), (1, 1), (0, 0)), mode="reflect")
    es = _parity_split(xp)                       # 4 x (n, oh+1, ow+1, c)
    f = (1.0, 2.0, 1.0)
    taps = []
    for di in range(3):
        for dj in range(3):
            taps.append((2 * (di % 2) + (dj % 2), di // 2, dj // 2,
                         f[di] * f[dj] / 16.0))
    taps = tuple(taps)
    toh = _largest_divisor(oh, max(1, (1 << 20) // max(1, ow * c * 4)))
    call = _pool_call(n, oh + 1, ow + 1, c, oh, ow, toh, taps)
    return call(*[e.astype(ACT_DTYPE) for e in es])


def avg_pool_2x2(x):
    n, h, w, c = x.shape
    oh, ow = h // 2, w // 2
    es = _parity_split(x)                        # 4 x (n, oh, ow, c)
    taps = tuple((2 * p + q, 0, 0, 0.25) for p in (0, 1) for q in (0, 1))
    toh = _largest_divisor(oh, max(1, (1 << 20) // max(1, ow * c * 4)))
    call = _pool_call(n, oh, ow, c, oh, ow, toh, taps)
    return call(*[e.astype(ACT_DTYPE) for e in es])


# ----------------------------------------------------------------------------
# Fused SE: global-avg-pool -> fc1+ReLU -> fc2+sigmoid -> gate
#           (+ optional residual add + ReLU), one kernel per sample
# ----------------------------------------------------------------------------
def _se_core(x_ref, w1_ref, s1_ref, b1_ref, w2_ref, s2_ref, b2_ref, *, chunks,
             chunk, inv_hw):
    c = x_ref.shape[2]
    acc = jnp.zeros((1, 1, c), jnp.float32)
    for t in range(chunks):
        acc = acc + jnp.sum(
            x_ref[:, t * chunk:(t + 1) * chunk, :].astype(jnp.float32),
            axis=1, keepdims=True)
    pooled = (acc * inv_hw).reshape(1, c).astype(jnp.bfloat16)
    z = jnp.dot(pooled, w1_ref[...], preferred_element_type=jnp.float32)
    z = jnp.maximum(z * s1_ref[...] + b1_ref[...], 0.0)
    g = jnp.dot(z.astype(jnp.bfloat16), w2_ref[...],
                preferred_element_type=jnp.float32)
    return jax.nn.sigmoid(g * s2_ref[...] + b2_ref[...])      # (1, C)


def _se_gate_kernel(x_ref, w1_ref, s1_ref, b1_ref, w2_ref, s2_ref, b2_ref,
                    o_ref, *, chunks, chunk, inv_hw):
    g = _se_core(x_ref, w1_ref, s1_ref, b1_ref, w2_ref, s2_ref, b2_ref,
                 chunks=chunks, chunk=chunk, inv_hw=inv_hw)
    for t in range(chunks):
        sl = slice(t * chunk, (t + 1) * chunk)
        xs = x_ref[:, sl, :].astype(jnp.float32)
        o_ref[:, sl, :] = (xs * g).astype(o_ref.dtype)


def _se_res_gate_kernel(x_ref, sc_ref, w1_ref, s1_ref, b1_ref, w2_ref, s2_ref,
                        b2_ref, o_ref, *, chunks, chunk, inv_hw):
    g = _se_core(x_ref, w1_ref, s1_ref, b1_ref, w2_ref, s2_ref, b2_ref,
                 chunks=chunks, chunk=chunk, inv_hw=inv_hw)
    for t in range(chunks):
        sl = slice(t * chunk, (t + 1) * chunk)
        y = (x_ref[:, sl, :].astype(jnp.float32) * g
             + sc_ref[:, sl, :].astype(jnp.float32))
        o_ref[:, sl, :] = jnp.maximum(y, 0.0).astype(o_ref.dtype)


_SE_CACHE = {}


def se_apply(x, p, shortcut=None):
    n, h, w, c = x.shape
    hw = h * w
    rp = p["fc1"]["w"].shape[1]
    chunk = _largest_divisor(hw, 512)
    chunks = hw // chunk
    has_res = shortcut is not None
    key = (n, hw, c, rp, chunk, has_res)
    if key not in _SE_CACHE:
        big = pl.BlockSpec((1, hw, c), lambda b: (b, 0, 0))
        w1s = pl.BlockSpec((c, rp), lambda b: (0, 0))
        v1s = pl.BlockSpec((1, rp), lambda b: (0, 0))
        w2s = pl.BlockSpec((rp, c), lambda b: (0, 0))
        v2s = pl.BlockSpec((1, c), lambda b: (0, 0))
        if has_res:
            kern = functools.partial(_se_res_gate_kernel, chunks=chunks,
                                     chunk=chunk, inv_hw=1.0 / hw)
            in_specs = [big, big, w1s, v1s, v1s, w2s, v2s, v2s]
        else:
            kern = functools.partial(_se_gate_kernel, chunks=chunks,
                                     chunk=chunk, inv_hw=1.0 / hw)
            in_specs = [big, w1s, v1s, v1s, w2s, v2s, v2s]
        _SE_CACHE[key] = pl.pallas_call(
            kern,
            out_shape=jax.ShapeDtypeStruct((n, hw, c), ACT_DTYPE),
            grid_spec=pltpu.PrefetchScalarGridSpec(
                num_scalar_prefetch=0,
                grid=(n,),
                in_specs=in_specs,
                out_specs=pl.BlockSpec((1, hw, c), lambda b: (b, 0, 0)),
            ),
            compiler_params=_compiler_params(("parallel",)),
        )
    f1, f2 = p["fc1"], p["fc2"]
    args = [x.reshape(n, hw, c).astype(ACT_DTYPE)]
    if has_res:
        args.append(shortcut.reshape(n, hw, c).astype(ACT_DTYPE))
    args += [f1["w"].astype(jnp.bfloat16),
             f1["scale"].reshape(1, rp).astype(jnp.float32),
             f1["bias"].reshape(1, rp).astype(jnp.float32),
             f2["w"].astype(jnp.bfloat16),
             f2["scale"].reshape(1, c).astype(jnp.float32),
             f2["bias"].reshape(1, c).astype(jnp.float32)]
    out = _SE_CACHE[key](*args)
    return out.reshape(n, h, w, c)


# ----------------------------------------------------------------------------
# ML-Decoder kernels: residual add + LayerNorm, cross-attention, group FC
# ----------------------------------------------------------------------------
def _add_ln_kernel(a_ref, b_ref, g_ref, bt_ref, o_ref, *, eps):
    x = a_ref[...].astype(jnp.float32) + b_ref[...].astype(jnp.float32)
    mu = jnp.mean(x, axis=-1, keepdims=True)
    xc = x - mu
    var = jnp.mean(xc * xc, axis=-1, keepdims=True)
    y = xc * jax.lax.rsqrt(var + eps)
    o_ref[...] = (y * g_ref[...] + bt_ref[...]).astype(o_ref.dtype)


_LN_CACHE = {}


def add_layernorm(a, b, gamma, beta, eps=1e-5):
    r, d = a.shape
    tm = min(256, _round_up(r, 8))
    rp = _round_up(r, tm)
    key = (rp, d, tm)
    if key not in _LN_CACHE:
        _LN_CACHE[key] = pl.pallas_call(
            functools.partial(_add_ln_kernel, eps=eps),
            out_shape=jax.ShapeDtypeStruct((rp, d), ACT_DTYPE),
            grid_spec=pltpu.PrefetchScalarGridSpec(
                num_scalar_prefetch=0,
                grid=(rp // tm,),
                in_specs=[
                    pl.BlockSpec((tm, d), lambda i: (i, 0)),
                    pl.BlockSpec((tm, d), lambda i: (i, 0)),
                    pl.BlockSpec((1, d), lambda i: (0, 0)),
                    pl.BlockSpec((1, d), lambda i: (0, 0)),
                ],
                out_specs=pl.BlockSpec((tm, d), lambda i: (i, 0)),
            ),
            compiler_params=_compiler_params(("parallel",)),
        )
    af = a.astype(ACT_DTYPE)
    bf = b.astype(ACT_DTYPE)
    if rp != r:
        af = jnp.pad(af, ((0, rp - r), (0, 0)))
        bf = jnp.pad(bf, ((0, rp - r), (0, 0)))
    out = _LN_CACHE[key](af, bf, gamma.reshape(1, d).astype(jnp.float32),
                         beta.reshape(1, d).astype(jnp.float32))
    return out[:r]


def _attn_kernel(q_ref, k_ref, v_ref, o_ref, *, scale, kv_len):
    q = q_ref[0]
    k = k_ref[0]
    v = v_ref[0]
    s = jnp.einsum("hqd,hkd->hqk", q, k,
                   preferred_element_type=jnp.float32) * scale
    mask = jax.lax.broadcasted_iota(jnp.int32, s.shape, 2) < kv_len
    s = jnp.where(mask, s, -1e30)
    m = jnp.max(s, axis=-1, keepdims=True)
    p = jnp.exp(s - m)
    p = p / jnp.sum(p, axis=-1, keepdims=True)
    o = jnp.einsum("hqk,hkd->hqd", p.astype(v.dtype), v,
                   preferred_element_type=jnp.float32)
    o_ref[...] = o[None].astype(o_ref.dtype)


_ATTN_CACHE = {}


def mha_attention(q, k, v, nheads, head_dim):
    """q: (B, Lq, D), k/v: (B, Lk, D) -> (B, Lq, D), D = nheads*head_dim."""
    bsz, lq, d = q.shape
    lk = k.shape[1]
    lqp = _round_up(lq, 16)
    lkp = _round_up(lk, 16)
    dhp = _round_up(head_dim, 128)

    def split(t, lp):
        t = t.reshape(bsz, t.shape[1], nheads, head_dim).transpose(0, 2, 1, 3)
        t = jnp.pad(t, ((0, 0), (0, 0), (0, lp - t.shape[2]),
                        (0, dhp - head_dim)))
        return t.astype(ACT_DTYPE)

    qh, kh, vh = split(q, lqp), split(k, lkp), split(v, lkp)
    key = (bsz, nheads, lqp, lkp, dhp, lk)
    if key not in _ATTN_CACHE:
        _ATTN_CACHE[key] = pl.pallas_call(
            functools.partial(_attn_kernel, scale=1.0 / math.sqrt(head_dim),
                              kv_len=lk),
            out_shape=jax.ShapeDtypeStruct((bsz, nheads, lqp, dhp),
                                           jnp.float32),
            grid_spec=pltpu.PrefetchScalarGridSpec(
                num_scalar_prefetch=0,
                grid=(bsz,),
                in_specs=[
                    pl.BlockSpec((1, nheads, lqp, dhp),
                                 lambda b: (b, 0, 0, 0)),
                    pl.BlockSpec((1, nheads, lkp, dhp),
                                 lambda b: (b, 0, 0, 0)),
                    pl.BlockSpec((1, nheads, lkp, dhp),
                                 lambda b: (b, 0, 0, 0)),
                ],
                out_specs=pl.BlockSpec((1, nheads, lqp, dhp),
                                       lambda b: (b, 0, 0, 0)),
            ),
            compiler_params=_compiler_params(("parallel",)),
        )
    oh = _ATTN_CACHE[key](qh, kh, vh)
    oh = oh[:, :, :lq, :head_dim].transpose(0, 2, 1, 3).reshape(bsz, lq, d)
    return oh


def _groupfc_kernel(h_ref, w_ref, b_ref, o_ref):
    prod = h_ref[0].astype(jnp.float32) * w_ref[...].astype(jnp.float32)
    s = jnp.sum(prod, axis=-1, keepdims=True) + b_ref[...]
    o_ref[...] = s[None]


_GFC_CACHE = {}


def group_fc(h, w, bias):
    """ML-Decoder group FC with duplicate_factor == 1: (B,G,D) -> (B,G)."""
    bsz, g, d = h.shape
    gp = _round_up(g, 8)
    hp = jnp.pad(h.astype(jnp.float32), ((0, 0), (0, gp - g), (0, 0)))
    wp = jnp.pad(w.astype(jnp.float32), ((0, gp - g), (0, 0)))
    bp = jnp.pad(bias.astype(jnp.float32), (0, gp - g)).reshape(gp, 1)
    key = (bsz, gp, d)
    if key not in _GFC_CACHE:
        _GFC_CACHE[key] = pl.pallas_call(
            _groupfc_kernel,
            out_shape=jax.ShapeDtypeStruct((bsz, gp, 1), jnp.float32),
            grid_spec=pltpu.PrefetchScalarGridSpec(
                num_scalar_prefetch=0,
                grid=(bsz,),
                in_specs=[
                    pl.BlockSpec((1, gp, d), lambda b: (b, 0, 0)),
                    pl.BlockSpec((gp, d), lambda b: (0, 0)),
                    pl.BlockSpec((gp, 1), lambda b: (0, 0)),
                ],
                out_specs=pl.BlockSpec((1, gp, 1), lambda b: (b, 0, 0)),
            ),
            compiler_params=_compiler_params(("parallel",)),
        )
    out = _GFC_CACHE[key](hp, wp, bp)
    return out[:, :g, 0]


# ----------------------------------------------------------------------------
# TResNet blocks / stem / ML-Decoder
# ----------------------------------------------------------------------------
def conv1x1_iabn(x, p, act="none", slope=1e-3, residual=None):
    n, h, w, c = x.shape
    cout = p["w"].shape[1]
    res2 = residual.reshape(n * h * w, cout) if residual is not None else None
    y = matmul_bn_act(x.reshape(n * h * w, c), p["w"], p["scale"], p["bias"],
                      act=act, slope=slope, residual=res2)
    return y.reshape(n, h, w, cout)


def basic_block(x, p, *, stride):
    out = conv3x3_iabn(x, p["conv1"], act="leaky", slope=1e-3)
    if stride == 2:
        out = blur_pool(out)
    out = conv3x3_iabn(out, p["conv2"], act="none")
    if "down" in p:
        sc = avg_pool_2x2(x) if stride == 2 else x
        sc = conv1x1_iabn(sc, p["down"], act="none")
    else:
        sc = x
    # fused SE: relu(out * gate + shortcut)
    return se_apply(out, p["se"], shortcut=sc)


def bottleneck_block(x, p, *, stride, use_se):
    out = conv1x1_iabn(x, p["conv1"], act="leaky", slope=1e-3)
    out = conv3x3_iabn(out, p["conv2"], act="leaky", slope=1e-3)
    if stride == 2:
        out = blur_pool(out)
    if use_se:
        out = se_apply(out, p["se"])
    if "down" in p:
        sc = avg_pool_2x2(x) if stride == 2 else x
        sc = conv1x1_iabn(sc, p["down"], act="none")
    else:
        sc = x
    # conv3 with fused residual add + ReLU epilogue
    return conv1x1_iabn(out, p["conv3"], act="relu", residual=sc)


def stem(images_nchw, p):
    # NCHW -> NHWC, SpaceToDepth(4) (channel order (bh, bw, c) as in timm),
    # conv3x3 48 -> 83 + IABN (leaky 1e-2).
    x = jnp.transpose(images_nchw, (0, 2, 3, 1)).astype(jnp.float32)
    n, h, w, c = x.shape
    x = x.reshape(n, h // 4, 4, w // 4, 4, c)
    x = x.transpose(0, 1, 3, 2, 4, 5).reshape(n, h // 4, w // 4, 16 * c)
    return conv3x3_iabn(x.astype(ACT_DTYPE), p, act="leaky", slope=1e-2)


def ml_decoder(feat_nhwc, p):
    n, h, w, c = feat_nhwc.shape
    hw = h * w
    mem = matmul_bn_act(feat_nhwc.reshape(n * hw, c), p["embed"]["w"],
                        p["embed"]["scale"], p["embed"]["bias"], act="relu")
    d = mem.shape[-1]
    g = p["query"].shape[0]

    def lin(t, lp, act="none"):
        return matmul_bn_act(t, lp["w"], lp["scale"], lp["bias"], act=act)

    # decoder layer (eval): tgt = norm1(tgt + dropout1(tgt)) == norm1(2*tgt)
    # which equals norm1(tgt) by LayerNorm scale-invariance.
    tgt = jnp.broadcast_to(p["query"][None], (n, g, d)).reshape(n * g, d)
    tgt = add_layernorm(tgt, tgt, p["ln1_g"], p["ln1_b"])

    q = lin(tgt, p["q"])
    k = lin(mem, p["k"])
    v = lin(mem, p["v"])
    attn = mha_attention(q.reshape(n, g, d), k.reshape(n, hw, d),
                         v.reshape(n, hw, d), nheads=8, head_dim=d // 8)
    attn = lin(attn.reshape(n * g, d), p["o"])
    tgt = add_layernorm(tgt, attn, p["ln2_g"], p["ln2_b"])

    ff = lin(tgt, p["ff1"], act="relu")
    ff = lin(ff, p["ff2"])
    tgt = add_layernorm(tgt, ff, p["ln3_g"], p["ln3_b"])

    return group_fc(tgt.reshape(n, g, d), p["gfc_w"], p["gfc_b"])  # (N, 60)


# Block-level jit + per-stage lax.scan over the identical "tail" blocks.
_stem_jit = jax.jit(stem)
_basic_block_jit = jax.jit(basic_block, static_argnames=("stride",))
_bottleneck_block_jit = jax.jit(bottleneck_block,
                                static_argnames=("stride", "use_se"))


@jax.jit
def _basic_tail(x, stacked):
    def body(h, bp):
        return basic_block(h, bp, stride=1), None
    x, _ = jax.lax.scan(body, x, stacked)
    return x


@functools.partial(jax.jit, static_argnames=("use_se",))
def _bottleneck_tail(x, stacked, use_se):
    def body(h, bp):
        return bottleneck_block(h, bp, stride=1, use_se=use_se), None
    x, _ = jax.lax.scan(body, x, stacked)
    return x


_mldecoder_jit = jax.jit(ml_decoder)


# ----------------------------------------------------------------------------
# Deterministic parameter synthesis (TResNet-XL: planes=83, layers=[4,5,24,3])
# ----------------------------------------------------------------------------
_LAYER_CFG = (
    ("basic", 4, 83, 1, True),
    ("basic", 5, 166, 2, True),
    ("bottleneck", 24, 332, 2, True),
    ("bottleneck", 3, 664, 2, False),
)


def _conv_params(key, ksize, cin, cout, cout_p, bn=True):
    kw, ks, kb = jax.random.split(key, 3)
    kk = ksize * ksize * cin
    w = jax.random.normal(kw, (kk, cout_p), jnp.float32) * (2.0 / kk) ** 0.5
    if ksize == 3:
        w = w.reshape(9, cin, cout_p)
    mask = (jnp.arange(cout_p) < cout).astype(jnp.float32)
    if bn:  # folded eval-mode (Inplace)ABN -> per-channel affine
        scale = 1.0 + 0.05 * jax.random.normal(ks, (cout_p,), jnp.float32)
        bias = 0.02 * jax.random.normal(kb, (cout_p,), jnp.float32)
    else:   # plain conv/linear with bias
        scale = jnp.ones((cout_p,), jnp.float32)
        bias = 0.05 * jax.random.normal(kb, (cout_p,), jnp.float32)
    return {"w": w.astype(jnp.bfloat16), "scale": scale * mask,
            "bias": bias * mask}


def _se_params(key, c, c_p, rd, rd_p):
    k1, k2 = jax.random.split(key)
    return {"fc1": _conv_params(k1, 1, c_p, rd, rd_p, bn=False),
            "fc2": _conv_params(k2, 1, rd_p, c, c_p, bn=False)}


def make_params(key):
    def nk():
        nonlocal key
        key, sub = jax.random.split(key)
        return sub

    planes0 = 83     # int(64 * 1.3) -> num_features = 83 * 8 * 4 = 2656
    params = {"stem": _conv_params(nk(), 3, 48, planes0,
                                   _round_up(planes0, 128))}

    layer_params = []
    inplanes, in_p = planes0, _round_up(planes0, 128)
    for kind, nblocks, width, stride, use_se in _LAYER_CFG:
        out_c = width * (4 if kind == "bottleneck" else 1)
        out_p = _round_up(out_c, 128)
        width_p = _round_up(width, 128)
        blocks = []
        for bi in range(nblocks):
            s = stride if bi == 0 else 1
            bp = {}
            if kind == "basic":
                bp["conv1"] = _conv_params(nk(), 3, in_p, width, width_p)
                bp["conv2"] = _conv_params(nk(), 3, width_p, width, width_p)
                rd = max(width // 4, 64)
                bp["se"] = _se_params(nk(), width, width_p, rd,
                                      _round_up(rd, 128))
            else:
                bp["conv1"] = _conv_params(nk(), 1, in_p, width, width_p)
                bp["conv2"] = _conv_params(nk(), 3, width_p, width, width_p)
                if use_se:
                    rd = max(width // 2, 64)
                    bp["se"] = _se_params(nk(), width, width_p, rd,
                                          _round_up(rd, 128))
                bp["conv3"] = _conv_params(nk(), 1, width_p, out_c, out_p)
            if s == 2 or inplanes != out_c:
                bp["down"] = _conv_params(nk(), 1, in_p, out_c, out_p)
            blocks.append(bp)
            inplanes, in_p = out_c, out_p
        entry = {"first": blocks[0]}
        if len(blocks) > 1:
            entry["tail"] = jax.tree_util.tree_map(
                lambda *a: jnp.stack(a), *blocks[1:])
        layer_params.append(entry)
    params["layers"] = layer_params

    # ML-Decoder (num_classes = 60 -> 60 groups, duplicate_factor = 1)
    d = 768
    dec = {"embed": _conv_params(nk(), 1, in_p, d, d, bn=False),
           "query": jax.random.normal(nk(), (60, d), jnp.float32)}
    for name in ("q", "k", "v", "o"):
        dec[name] = _conv_params(nk(), 1, d, d, d, bn=False)
    dec["ff1"] = _conv_params(nk(), 1, d, 2048, 2048, bn=False)
    dec["ff2"] = _conv_params(nk(), 1, 2048, d, d, bn=False)
    for i in (1, 2, 3):
        dec[f"ln{i}_g"] = jnp.ones((d,), jnp.float32)
        dec[f"ln{i}_b"] = jnp.zeros((d,), jnp.float32)
    dec["gfc_w"] = jax.random.normal(nk(), (60, d), jnp.float32) * d ** -0.5
    dec["gfc_b"] = jnp.zeros((60,), jnp.float32)
    params["decoder"] = dec
    return params


# ----------------------------------------------------------------------------
# Full forward: backbone(images) -> ML-Decoder -> (N, 60) logits
# ----------------------------------------------------------------------------
def tresnet_xl_mldecoder_forward(params, images_nchw):
    x = _stem_jit(images_nchw, params["stem"])
    for (kind, _, _, stride, use_se), entry in zip(_LAYER_CFG,
                                                   params["layers"]):
        if kind == "basic":
            x = _basic_block_jit(x, entry["first"], stride=stride)
            if "tail" in entry:
                x = _basic_tail(x, entry["tail"])
        else:
            x = _bottleneck_block_jit(x, entry["first"], stride=stride,
                                      use_se=use_se)
            if "tail" in entry:
                x = _bottleneck_tail(x, entry["tail"], use_se=use_se)
    return _mldecoder_jit(x, params["decoder"])


if __name__ == "__main__":
    key = jax.random.PRNGKey(0)
    params = make_params(jax.random.fold_in(key, 1))
    # TResNet needs spatial dims divisible by 32 (space-to-depth + 3 stride-2
    # stages); keep it small: batch 2, 64x64 RGB.
    images = jax.random.normal(jax.random.fold_in(key, 2), (2, 3, 64, 64),
                               jnp.float32)
    out = tresnet_xl_mldecoder_forward(params, images)
    out = jax.block_until_ready(out)
    assert out.shape == (2, 60), out.shape
    assert bool(jnp.all(jnp.isfinite(out)))
    print("KERNEL_OK")
</pallas_src>

<mosaic_0001>
module attributes {stable_mosaic.version = 11 : i64} {
  func.func @_conv3x3_kernel(%arg0: i32, %arg1: i32, %arg2: i32, %arg3: memref<1x18x18x48xbf16, #tpu.memory_space<vmem>>, %arg4: memref<9x48x128xbf16, #tpu.memory_space<vmem>>, %arg5: memref<1x128xf32, #tpu.memory_space<vmem>>, %arg6: memref<1x128xf32, #tpu.memory_space<vmem>>, %arg7: memref<1x16x16x128xbf16, #tpu.memory_space<vmem>>) attributes {dimension_semantics = [#tpu.dimension_semantics<parallel>, #tpu.dimension_semantics<parallel>, #tpu.dimension_semantics<parallel>], iteration_bounds = array<i64: 2, 1, 1>, scalar_prefetch = 0 : i64, scratch_operands = 0 : i64, tpu.core_type = #tpu.core_type<tc>, window_params = [{transform_indices = @transform_0, window_bounds = array<i64: 1, 18, 18, 48>}, {transform_indices = @transform_1, window_bounds = array<i64: 9, 48, 128>}, {transform_indices = @transform_2, window_bounds = array<i64: 1, 128>}, {transform_indices = @transform_3, window_bounds = array<i64: 1, 128>}, {transform_indices = @transform_4, window_bounds = array<i64: 1, 16, 16, 128>}]} {
    %c16_i32 = arith.constant 16 : i32
    %0 = arith.muli %arg2, %c16_i32 : i32
    %cst = arith.constant 0.000000e+00 : f32
    %1 = vector.broadcast %cst : f32 to vector<256x128xf32>
    %c0_i32 = arith.constant 0 : i32
    %2 = arith.addi %0, %c0_i32 : i32
    %c0 = arith.constant 0 : index
    %3 = arith.index_cast %2 : i32 to index
    %c0_0 = arith.constant 0 : index
    %c0_1 = arith.constant 0 : index
    %4 = vector.load %arg3[%c0, %3, %c0_0, %c0_1] : memref<1x18x18x48xbf16, #tpu.memory_space<vmem>>, vector<1x16x16x48xbf16>
    %5 = vector.shape_cast %4 : vector<1x16x16x48xbf16> to vector<256x48xbf16>
    %c0_2 = arith.constant 0 : index
    %c0_3 = arith.constant 0 : index
    %c0_4 = arith.constant 0 : index
    %6 = vector.load %arg4[%c0_2, %c0_3, %c0_4] : memref<9x48x128xbf16, #tpu.memory_space<vmem>>, vector<1x48x128xbf16>
    %7 = vector.shape_cast %6 : vector<1x48x128xbf16> to vector<48x128xbf16>
    %cst_5 = arith.constant dense<0.000000e+00> : vector<256x128xf32>
    %8 = tpu.matmul %5, %7, %cst_5 {dimension_numbers = #tpu.dot_dimension_numbers<[1], [0], [0], [1], [0, 0, 1, 1], [], []>} : vector<256x48xbf16>, vector<48x128xbf16>, vector<256x128xf32> -> vector<256x128xf32>
    %9 = arith.addf %1, %8 : vector<256x128xf32>
    %c0_i32_6 = arith.constant 0 : i32
    %10 = arith.addi %0, %c0_i32_6 : i32
    %c0_7 = arith.constant 0 : index
    %11 = arith.index_cast %10 : i32 to index
    %c1 = arith.constant 1 : index
    %c0_8 = arith.constant 0 : index
    %12 = vector.load %arg3[%c0_7, %11, %c1, %c0_8] : memref<1x18x18x48xbf16, #tpu.memory_space<vmem>>, vector<1x16x16x48xbf16>
    %13 = vector.shape_cast %12 : vector<1x16x16x48xbf16> to vector<256x48xbf16>
    %c1_9 = arith.constant 1 : index
    %c0_10 = arith.constant 0 : index
    %c0_11 = arith.constant 0 : index
    %14 = vector.load %arg4[%c1_9, %c0_10, %c0_11] : memref<9x48x128xbf16, #tpu.memory_space<vmem>>, vector<1x48x128xbf16>
    %15 = vector.shape_cast %14 : vector<1x48x128xbf16> to vector<48x128xbf16>
    %cst_12 = arith.constant dense<0.000000e+00> : vector<256x128xf32>
    %16 = tpu.matmul %13, %15, %cst_12 {dimension_numbers = #tpu.dot_dimension_numbers<[1], [0], [0], [1], [0, 0, 1, 1], [], []>} : vector<256x48xbf16>, vector<48x128xbf16>, vector<256x128xf32> -> vector<256x128xf32>
    %17 = arith.addf %9, %16 : vector<256x128xf32>
    %c0_i32_13 = arith.constant 0 : i32
    %18 = arith.addi %0, %c0_i32_13 : i32
    %c0_14 = arith.constant 0 : index
    %19 = arith.index_cast %18 : i32 to index
    %c2 = arith.constant 2 : index
    %c0_15 = arith.constant 0 : index
    %20 = vector.load %arg3[%c0_14, %19, %c2, %c0_15] : memref<1x18x18x48xbf16, #tpu.memory_space<vmem>>, vector<1x16x16x48xbf16>
    %21 = vector.shape_cast %20 : vector<1x16x16x48xbf16> to vector<256x48xbf16>
    %c2_16 = arith.constant 2 : index
    %c0_17 = arith.constant 0 : index
    %c0_18 = arith.constant 0 : index
    %22 = vector.load %arg4[%c2_16, %c0_17, %c0_18] : memref<9x48x128xbf16, #tpu.memory_space<vmem>>, vector<1x48x128xbf16>
    %23 = vector.shape_cast %22 : vector<1x48x128xbf16> to vector<48x128xbf16>
    %cst_19 = arith.constant dense<0.000000e+00> : vector<256x128xf32>
    %24 = tpu.matmul %21, %23, %cst_19 {dimension_numbers = #tpu.dot_dimension_numbers<[1], [0], [0], [1], [0, 0, 1, 1], [], []>} : vector<256x48xbf16>, vector<48x128xbf16>, vector<256x128xf32> -> vector<256x128xf32>
    %25 = arith.addf %17, %24 : vector<256x128xf32>
    %c1_i32 = arith.constant 1 : i32
    %26 = arith.addi %0, %c1_i32 : i32
    %c0_20 = arith.constant 0 : index
    %27 = arith.index_cast %26 : i32 to index
    %c0_21 = arith.constant 0 : index
    %c0_22 = arith.constant 0 : index
    %28 = vector.load %arg3[%c0_20, %27, %c0_21, %c0_22] : memref<1x18x18x48xbf16, #tpu.memory_space<vmem>>, vector<1x16x16x48xbf16>
    %29 = vector.shape_cast %28 : vector<1x16x16x48xbf16> to vector<256x48xbf16>
    %c3 = arith.constant 3 : index
    %c0_23 = arith.constant 0 : index
    %c0_24 = arith.constant 0 : index
    %30 = vector.load %arg4[%c3, %c0_23, %c0_24] : memref<9x48x128xbf16, #tpu.memory_space<vmem>>, vector<1x48x128xbf16>
    %31 = vector.shape_cast %30 : vector<1x48x128xbf16> to vector<48x128xbf16>
    %cst_25 = arith.constant dense<0.000000e+00> : vector<256x128xf32>
    %32 = tpu.matmul %29, %31, %cst_25 {dimension_numbers = #tpu.dot_dimension_numbers<[1], [0], [0], [1], [0, 0, 1, 1], [], []>} : vector<256x48xbf16>, vector<48x128xbf16>, vector<256x128xf32> -> vector<256x128xf32>
    %33 = arith.addf %25, %32 : vector<256x128xf32>
    %c1_i32_26 = arith.constant 1 : i32
    %34 = arith.addi %0, %c1_i32_26 : i32
    %c0_27 = arith.constant 0 : index
    %35 = arith.index_cast %34 : i32 to index
    %c1_28 = arith.constant 1 : index
    %c0_29 = arith.constant 0 : index
    %36 = vector.load %arg3[%c0_27, %35, %c1_28, %c0_29] : memref<1x18x18x48xbf16, #tpu.memory_space<vmem>>, vector<1x16x16x48xbf16>
    %37 = vector.shape_cast %36 : vector<1x16x16x48xbf16> to vector<256x48xbf16>
    %c4 = arith.constant 4 : index
    %c0_30 = arith.constant 0 : index
    %c0_31 = arith.constant 0 : index
    %38 = vector.load %arg4[%c4, %c0_30, %c0_31] : memref<9x48x128xbf16, #tpu.memory_space<vmem>>, vector<1x48x128xbf16>
    %39 = vector.shape_cast %38 : vector<1x48x128xbf16> to vector<48x128xbf16>
    %cst_32 = arith.constant dense<0.000000e+00> : vector<256x128xf32>
    %40 = tpu.matmul %37, %39, %cst_32 {dimension_numbers = #tpu.dot_dimension_numbers<[1], [0], [0], [1], [0, 0, 1, 1], [], []>} : vector<256x48xbf16>, vector<48x128xbf16>, vector<256x128xf32> -> vector<256x128xf32>
    %41 = arith.addf %33, %40 : vector<256x128xf32>
    %c1_i32_33 = arith.constant 1 : i32
    %42 = arith.addi %0, %c1_i32_33 : i32
    %c0_34 = arith.constant 0 : index
    %43 = arith.index_cast %42 : i32 to index
    %c2_35 = arith.constant 2 : index
    %c0_36 = arith.constant 0 : index
    %44 = vector.load %arg3[%c0_34, %43, %c2_35, %c0_36] : memref<1x18x18x48xbf16, #tpu.memory_space<vmem>>, vector<1x16x16x48xbf16>
    %45 = vector.shape_cast %44 : vector<1x16x16x48xbf16> to vector<256x48xbf16>
    %c5 = arith.constant 5 : index
    %c0_37 = arith.constant 0 : index
    %c0_38 = arith.constant 0 : index
    %46 = vector.load %arg4[%c5, %c0_37, %c0_38] : memref<9x48x128xbf16, #tpu.memory_space<vmem>>, vector<1x48x128xbf16>
    %47 = vector.shape_cast %46 : vector<1x48x128xbf16> to vector<48x128xbf16>
    %cst_39 = arith.constant dense<0.000000e+00> : vector<256x128xf32>
    %48 = tpu.matmul %45, %47, %cst_39 {dimension_numbers = #tpu.dot_dimension_numbers<[1], [0], [0], [1], [0, 0, 1, 1], [], []>} : vector<256x48xbf16>, vector<48x128xbf16>, vector<256x128xf32> -> vector<256x128xf32>
    %49 = arith.addf %41, %48 : vector<256x128xf32>
    %c2_i32 = arith.constant 2 : i32
    %50 = arith.addi %0, %c2_i32 : i32
    %c0_40 = arith.constant 0 : index
    %51 = arith.index_cast %50 : i32 to index
    %c0_41 = arith.constant 0 : index
    %c0_42 = arith.constant 0 : index
    %52 = vector.load %arg3[%c0_40, %51, %c0_41, %c0_42] : memref<1x18x18x48xbf16, #tpu.memory_space<vmem>>, vector<1x16x16x48xbf16>
    %53 = vector.shape_cast %52 : vector<1x16x16x48xbf16> to vector<256x48xbf16>
    %c6 = arith.constant 6 : index
    %c0_43 = arith.constant 0 : index
    %c0_44 = arith.constant 0 : index
    %54 = vector.load %arg4[%c6, %c0_43, %c0_44] : memref<9x48x128xbf16, #tpu.memory_space<vmem>>, vector<1x48x128xbf16>
    %55 = vector.shape_cast %54 : vector<1x48x128xbf16> to vector<48x128xbf16>
    %cst_45 = arith.constant dense<0.000000e+00> : vector<256x128xf32>
    %56 = tpu.matmul %53, %55, %cst_45 {dimension_numbers = #tpu.dot_dimension_numbers<[1], [0], [0], [1], [0, 0, 1, 1], [], []>} : vector<256x48xbf16>, vector<48x128xbf16>, vector<256x128xf32> -> vector<256x128xf32>
    %57 = arith.addf %49, %56 : vector<256x128xf32>
    %c2_i32_46 = arith.constant 2 : i32
    %58 = arith.addi %0, %c2_i32_46 : i32
    %c0_47 = arith.constant 0 : index
    %59 = arith.index_cast %58 : i32 to index
    %c1_48 = arith.constant 1 : index
    %c0_49 = arith.constant 0 : index
    %60 = vector.load %arg3[%c0_47, %59, %c1_48, %c0_49] : memref<1x18x18x48xbf16, #tpu.memory_space<vmem>>, vector<1x16x16x48xbf16>
    %61 = vector.shape_cast %60 : vector<1x16x16x48xbf16> to vector<256x48xbf16>
    %c7 = arith.constant 7 : index
    %c0_50 = arith.constant 0 : index
    %c0_51 = arith.constant 0 : index
    %62 = vector.load %arg4[%c7, %c0_50, %c0_51] : memref<9x48x128xbf16, #tpu.memory_space<vmem>>, vector<1x48x128xbf16>
    %63 = vector.shape_cast %62 : vector<1x48x128xbf16> to vector<48x128xbf16>
    %cst_52 = arith.constant dense<0.000000e+00> : vector<256x128xf32>
    %64 = tpu.matmul %61, %63, %cst_52 {dimension_numbers = #tpu.dot_dimension_numbers<[1], [0], [0], [1], [0, 0, 1, 1], [], []>} : vector<256x48xbf16>, vector<48x128xbf16>, vector<256x128xf32> -> vector<256x128xf32>
    %65 = arith.addf %57, %64 : vector<256x128xf32>
    %c2_i32_53 = arith.constant 2 : i32
    %66 = arith.addi %0, %c2_i32_53 : i32
    %c0_54 = arith.constant 0 : index
    %67 = arith.index_cast %66 : i32 to index
    %c2_55 = arith.constant 2 : index
    %c0_56 = arith.constant 0 : index
    %68 = vector.load %arg3[%c0_54, %67, %c2_55, %c0_56] : memref<1x18x18x48xbf16, #tpu.memory_space<vmem>>, vector<1x16x16x48xbf16>
    %69 = vector.shape_cast %68 : vector<1x16x16x48xbf16> to vector<256x48xbf16>
    %c8 = arith.constant 8 : index
    %c0_57 = arith.constant 0 : index
    %c0_58 = arith.constant 0 : index
    %70 = vector.load %arg4[%c8, %c0_57, %c0_58] : memref<9x48x128xbf16, #tpu.memory_space<vmem>>, vector<1x48x128xbf16>
    %71 = vector.shape_cast %70 : vector<1x48x128xbf16> to vector<48x128xbf16>
    %cst_59 = arith.constant dense<0.000000e+00> : vector<256x128xf32>
    %72 = tpu.matmul %69, %71, %cst_59 {dimension_numbers = #tpu.dot_dimension_numbers<[1], [0], [0], [1], [0, 0, 1, 1], [], []>} : vector<256x48xbf16>, vector<48x128xbf16>, vector<256x128xf32> -> vector<256x128xf32>
    %73 = arith.addf %65, %72 : vector<256x128xf32>
    %c0_60 = arith.constant 0 : index
    %c0_61 = arith.constant 0 : index
    %74 = vector.load %arg5[%c0_60, %c0_61] : memref<1x128xf32, #tpu.memory_space<vmem>>, vector<1x128xf32>
    %c0_62 = arith.constant 0 : index
    %c0_63 = arith.constant 0 : index
    %75 = vector.load %arg6[%c0_62, %c0_63] : memref<1x128xf32, #tpu.memory_space<vmem>>, vector<1x128xf32>
    %76 = vector.broadcast %74 : vector<1x128xf32> to vector<256x128xf32>
    %77 = arith.mulf %73, %76 : vector<256x128xf32>
    %78 = vector.broadcast %75 : vector<1x128xf32> to vector<256x128xf32>
    %79 = arith.addf %77, %78 : vector<256x128xf32>
    %cst_64 = arith.constant 0.000000e+00 : f32
    %80 = vector.broadcast %cst_64 : f32 to vector<256x128xf32>
    %81 = arith.cmpf oge, %79, %80 : vector<256x128xf32>
    %cst_65 = arith.constant 0.00999999977 : f32
    %82 = vector.broadcast %cst_65 : f32 to vector<256x128xf32>
    %83 = arith.mulf %79, %82 : vector<256x128xf32>
    %84 = arith.select %81, %79, %83 : vector<256x128xi1>, vector<256x128xf32>
    %85 = vector.shape_cast %84 : vector<256x128xf32> to vector<16x16x128xf32>
    %86 = vector.shape_cast %85 : vector<16x16x128xf32> to vector<1x16x16x128xf32>
    %87 = arith.truncf %86 : vector<1x16x16x128xf32> to vector<1x16x16x128xbf16>
    %c0_66 = arith.constant 0 : index
    %c0_67 = arith.constant 0 : index
    %c0_68 = arith.constant 0 : index
    %c0_69 = arith.constant 0 : index
    %88 = vector.load %arg7[%c0_66, %c0_67, %c0_68, %c0_69] : memref<1x16x16x128xbf16, #tpu.memory_space<vmem>>, vector<1x16x16x128xbf16>
    tpu.vector_store %arg7[%c0_66, %c0_67, %c0_68, %c0_69], %87 {strides = array<i32>} : memref<1x16x16x128xbf16, #tpu.memory_space<vmem>>, vector<1x16x16x128xbf16>,
    return
  }
  func.func @transform_0(%arg0: i32, %arg1: i32, %arg2: i32) -> (i32, i32, i32, i32) {
    %c0_i32 = arith.constant 0 : i32
    %c0_i32_0 = arith.constant 0 : i32
    %c0_i32_1 = arith.constant 0 : i32
    %c0_i32_2 = arith.constant 0 : i32
    return %arg0, %c0_i32, %c0_i32_0, %c0_i32_1 : i32, i32, i32, i32
  }
  func.func @transform_1(%arg0: i32, %arg1: i32, %arg2: i32) -> (i32, i32, i32) {
    %c0_i32 = arith.constant 0 : i32
    %c0_i32_0 = arith.constant 0 : i32
    %c0_i32_1 = arith.constant 0 : i32
    return %c0_i32, %c0_i32_0, %arg1 : i32, i32, i32
  }
  func.func @transform_2(%arg0: i32, %arg1: i32, %arg2: i32) -> (i32, i32) {
    %c0_i32 = arith.constant 0 : i32
    %c0_i32_0 = arith.constant 0 : i32
    return %c0_i32, %arg1 : i32, i32
  }
  func.func @transform_3(%arg0: i32, %arg1: i32, %arg2: i32) -> (i32, i32) {
    %c0_i32 = arith.constant 0 : i32
    %c0_i32_0 = arith.constant 0 : i32
    return %c0_i32, %arg1 : i32, i32
  }
  func.func @transform_4(%arg0: i32, %arg1: i32, %arg2: i32) -> (i32, i32, i32, i32) {
    %c0_i32 = arith.constant 0 : i32
    %c0_i32_0 = arith.constant 0 : i32
    return %arg0, %arg2, %c0_i32, %arg1 : i32, i32, i32, i32
  }
}

</mosaic_0001>

<llo_original>
// kernel: stem.1
$region0: #{stem.1}
  #allocation0 [shape = 'u32[]', space=smem, size = 0x4, offset = 0x4, fixed_abs, tag = 'smem constant byte address 0x4 - core index']
  #allocation1 [shape = 'u32[72,128]{1,0:T(1,128)}', space=vmem, size = 0x9000, scoped, tag = 'internal scratch']
  %s0 = inlined_call_operand.vmem [shape: bf16[2,18,18,48], index: 0, kind: input, shape index: {}]
  %s1 = inlined_call_operand.vmem [shape: bf16[9,48,128], index: 1, kind: input, shape index: {}]
  %s2 = inlined_call_operand.vmem [shape: f32[1,128], index: 2, kind: input, shape index: {}]
  %s3 = inlined_call_operand.vmem [shape: f32[1,128], index: 3, kind: input, shape index: {}]
  %s4 = inlined_call_operand.hbm [shape: bf16[2,16,16,128], index: 4, kind: output, shape index: {}]
  %s5 = sld [smem:[#allocation0]]
  $region49: #{stem.1} parent=0
    _
  %s7 = ssub.s32 1, %s5
  %s8 = scalar_select 0, %s7, %s5
  $region1: #{stem.1} parent=0
    #allocation2 [shape = 'u8[131072]{0}', space=vmem, size = 0x20000, scoped, tag = 'output window, operand 0']
    #allocation3 [shape = 's32[2]{0}', space=sflag, size = 0x8, scoped, tag = 'scoped memory for stem.1']
    %9 = vsyncpa [#allocation3], 0
    %s10 = scalar_lea.sflag [#allocation3], 1
    %11 = vsyncpa %s10, 0
    loop: start=0, step=1, limit=4
    $region2: #{stem.1} parent=1 // loop_pre_header
      _
    $region3: #{stem.1} parent=1 // loop_header
      %s13 = sphi 0, %s17
      %p14 = scmp.ge.s32.totalorder %s13, 4
      %s20 = sphi 0, %s39
      %s21 = sphi 0, %s35
      %s22 = sphi 0, %s31
      %s23 = sphi 0, %s20
      %s24 = sphi 0, %s21
      %s25 = sphi 0, %s22
      %s26 = sphi 0, %s23
      %s27 = sphi 0, %s24
      %s28 = sphi 0, %s25
      %s42 = sphi 0, %s44
      %s45 = sphi 0, %s42
      %s46 = sphi 0, %s45
      %s62 = sphi 0, %s46
      %s68 = sphi 0, %s70
      %s71 = sphi 0, %s68
      %s72 = sphi 0, %s71
      %s88 = sphi 0, %s72
      %s94 = sphi 0, %s96
      %s97 = sphi 0, %s94
      %s98 = sphi 0, %s97
      %s114 = sphi 0, %s98
      %s120 = sphi 0, %s122
      %s123 = sphi 0, %s120
      %s124 = sphi 0, %s123
      %s140 = sphi 0, %s124
      %s150 = sphi 0, %s152
      %s153 = sphi 0, %s150
      %s154 = sphi 0, %s153
      %s170 = sphi 0, %s154
    $region4: #{stem.1} parent=1 // loop_header_branch
      %16 = sbr.rel (%p14) target = $region8
    $region5: #{stem.1} parent=1 // loop_body
      %s18 = ssub.s32 %s13, 1
      %s19 = ssub.s32 %s13, 2
      %s29 = sadd.s32 1, %s22
      %p30 = scmp.ge.s32.totalorder %s29, 1
      %s31 = scalar_select %p30, 0, %s29
      %s32 = sadd.s32 1, %s21
      %s33 = scalar_select %p30, %s32, %s21
      %p34 = scmp.ge.s32.totalorder %s33, 1
      %s35 = scalar_select %p34, 0, %s33
      %s36 = sadd.s32 1, %s20
      %s37 = scalar_select %p34, %s36, %s20
      %p38 = scmp.ge.s32.totalorder %s37, 2
      %s39 = scalar_select %p38, 0, %s37
      %s40 = ssub.s32 %s20, %s39
      %p41 = scmp.eq.s32.totalorder %s40, 0
      %s43 = sadd.s32 %s42, 1
      %s44 = scalar_select %p41, %s42, %s43
      %p47 = pneg %p41
      %p48 = scmp.eq.s32.totalorder %s13, 1
      %p49 = por %p47, %p48
      %p50 = scmp.ne.s32.totalorder %s42, %s45
      %p51 = scmp.eq.s32.totalorder %s13, 0
      %p52 = por %p50, %p51
      %p53 = scmp.ne.s32.totalorder %s42, %s45
      %p54 = scmp.eq.s32.totalorder %s18, 1
      %p55 = por %p53, %p54
      %p56 = scmp.ne.s32.totalorder %s45, %s46
      %p57 = scmp.eq.s32.totalorder %s18, 0
      %p58 = por %p56, %p57
      %p59 = scmp.ne.s32.totalorder %s45, %s46
      %p60 = scmp.eq.s32.totalorder %s19, 1
      %p61 = por %p59, %p60
      %p63 = scmp.ne.s32.totalorder %s46, %s62
      %p64 = scmp.eq.s32.totalorder %s19, 0
      %p65 = por %p63, %p64
      %s66 = ssub.s32 %s21, %s35
      %p67 = scmp.eq.s32.totalorder %s66, 0
      %s69 = sadd.s32 %s68, 1
      %s70 = scalar_select %p67, %s68, %s69
      %p73 = pneg %p67
      %p74 = scmp.eq.s32.totalorder %s13, 1
      %p75 = por %p73, %p74
      %p76 = scmp.ne.s32.totalorder %s68, %s71
      %p77 = scmp.eq.s32.totalorder %s13, 0
      %p78 = por %p76, %p77
      %p79 = scmp.ne.s32.totalorder %s68, %s71
      %p80 = scmp.eq.s32.totalorder %s18, 1
      %p81 = por %p79, %p80
      %p82 = scmp.ne.s32.totalorder %s71, %s72
      %p83 = scmp.eq.s32.totalorder %s18, 0
      %p84 = por %p82, %p83
      %p85 = scmp.ne.s32.totalorder %s71, %s72
      %p86 = scmp.eq.s32.totalorder %s19, 1
      %p87 = por %p85, %p86
      %p89 = scmp.ne.s32.totalorder %s72, %s88
      %p90 = scmp.eq.s32.totalorder %s19, 0
      %p91 = por %p89, %p90
      %s92 = ssub.s32 %s21, %s35
      %p93 = scmp.eq.s32.totalorder %s92, 0
      %s95 = sadd.s32 %s94, 1
      %s96 = scalar_select %p93, %s94, %s95
      %p99 = pneg %p93
      %p100 = scmp.eq.s32.totalorder %s13, 1
      %p101 = por %p99, %p100
      %p102 = scmp.ne.s32.totalorder %s94, %s97
      %p103 = scmp.eq.s32.totalorder %s13, 0
      %p104 = por %p102, %p103
      %p105 = scmp.ne.s32.totalorder %s94, %s97
      %p106 = scmp.eq.s32.totalorder %s18, 1
      %p107 = por %p105, %p106
      %p108 = scmp.ne.s32.totalorder %s97, %s98
      %p109 = scmp.eq.s32.totalorder %s18, 0
      %p110 = por %p108, %p109
      %p111 = scmp.ne.s32.totalorder %s97, %s98
      %p112 = scmp.eq.s32.totalorder %s19, 1
      %p113 = por %p111, %p112
      %p115 = scmp.ne.s32.totalorder %s98, %s114
      %p116 = scmp.eq.s32.totalorder %s19, 0
      %p117 = por %p115, %p116
      %s118 = ssub.s32 %s21, %s35
      %p119 = scmp.eq.s32.totalorder %s118, 0
      %s121 = sadd.s32 %s120, 1
      %s122 = scalar_select %p119, %s120, %s121
      %p125 = pneg %p119
      %p126 = scmp.eq.s32.totalorder %s13, 1
      %p127 = por %p125, %p126
      %p128 = scmp.ne.s32.totalorder %s120, %s123
      %p129 = scmp.eq.s32.totalorder %s13, 0
      %p130 = por %p128, %p129
      %p131 = scmp.ne.s32.totalorder %s120, %s123
      %p132 = scmp.eq.s32.totalorder %s18, 1
      %p133 = por %p131, %p132
      %p134 = scmp.ne.s32.totalorder %s123, %s124
      %p135 = scmp.eq.s32.totalorder %s18, 0
      %p136 = por %p134, %p135
      %p137 = scmp.ne.s32.totalorder %s123, %s124
      %p138 = scmp.eq.s32.totalorder %s19, 1
      %p139 = por %p137, %p138
      %p141 = scmp.ne.s32.totalorder %s124, %s140
      %p142 = scmp.eq.s32.totalorder %s19, 0
      %p143 = por %p141, %p142
      %s144 = ssub.s32 %s20, %s39
      %s145 = ssub.s32 %s22, %s31
      %s146 = sor.u32 %s144, %s145
      %s147 = ssub.s32 %s21, %s35
      %s148 = sor.u32 %s146, %s147
      %p149 = scmp.eq.s32.totalorder %s148, 0
      %s151 = sadd.s32 %s150, 1
      %s152 = scalar_select %p149, %s150, %s151
      %p155 = pneg %p149
      %p156 = scmp.eq.s32.totalorder %s13, 1
      %p157 = por %p155, %p156
      %p158 = scmp.ne.s32.totalorder %s150, %s153
      %p159 = scmp.eq.s32.totalorder %s13, 0
      %p160 = por %p158, %p159
      %p161 = scmp.ne.s32.totalorder %s150, %s153
      %p162 = scmp.eq.s32.totalorder %s18, 1
      %p163 = por %p161, %p162
      %p164 = scmp.ne.s32.totalorder %s153, %s154
      %p165 = scmp.eq.s32.totalorder %s18, 0
      %p166 = por %p164, %p165
      %p167 = scmp.ne.s32.totalorder %s153, %s154
      %p168 = scmp.eq.s32.totalorder %s19, 1
      %p169 = por %p167, %p168
      %p171 = scmp.ne.s32.totalorder %s154, %s170
      %p172 = scmp.eq.s32.totalorder %s19, 0
      %p173 = por %p171, %p172
      %p174 = scmp.le.s32.totalorder 1, %s13
      %p175 = scmp.lt.s32.totalorder %s13, 3
      %p176 = pnand %p174, %p175
      %p177 = pneg %p176
      // Predicated region
      $region9: #{stem.1} parent=5 // pred_check
        _
      $region10: #{stem.1} parent=5 // pred_check_branch
        %179 = sbr.rel (%p176) target = $region12
      $region11: #{stem.1} parent=5 // pred_region
        %s180 = ssub.s32 %s13, 1
        // Predicated region
        $region13: #{stem.1} parent=11 // pred_check
          %p181 = pneg %p84
        $region14: #{stem.1} parent=11 // pred_check_branch
          %183 = sbr.rel (%p181) target = $region16
        $region15: #{stem.1} parent=11 // pred_region
          %p184 = scmp.lt.s32.totalorder %s24, 0
          %s185 = scalar_select %p184, %s24, 0
          %s186 = smul.addr %s185, 4
          %s187 = scalar_lea.vmem %s1, %s186
        $region16: #{stem.1} parent=11 // pred_fallthru
          _
        // Predicated region
        $region17: #{stem.1} parent=11 // pred_check
          %p188 = pneg %p110
        $region18: #{stem.1} parent=11 // pred_check_branch
          %190 = sbr.rel (%p188) target = $region20
        $region19: #{stem.1} parent=11 // pred_region
          %p191 = scmp.lt.s32.totalorder %s24, 0
          %s192 = scalar_select %p191, %s24, 0
          %s193 = scalar_lea.vmem %s2, %s192
        $region20: #{stem.1} parent=11 // pred_fallthru
          _
        // Predicated region
        $region21: #{stem.1} parent=11 // pred_check
          %p194 = pneg %p136
        $region22: #{stem.1} parent=11 // pred_check_branch
          %196 = sbr.rel (%p194) target = $region24
        $region23: #{stem.1} parent=11 // pred_region
          %p197 = scmp.lt.s32.totalorder %s24, 0
          %s198 = scalar_select %p197, %s24, 0
          %s199 = scalar_lea.vmem %s3, %s198
        $region24: #{stem.1} parent=11 // pred_fallthru
          _
      $region12: #{stem.1} parent=5 // pred_fallthru
        _
      %p200 = scmp.lt.s32.totalorder %s13, 2
      // Predicated region
      $region25: #{stem.1} parent=5 // pred_check
        %p201 = pneg %p200
      $region26: #{stem.1} parent=5 // pred_check_branch
        %203 = sbr.rel (%p201) target = $region28
      $region27: #{stem.1} parent=5 // pred_region
        // Predicated region
        $region29: #{stem.1} parent=27 // pred_check
          %p204 = pneg %p52
        $region30: #{stem.1} parent=27 // pred_check_branch
          %206 = sbr.rel (%p204) target = $region32
        $region31: #{stem.1} parent=27 // pred_region
          %p207 = scmp.lt.s32.totalorder %s20, 1
          %s208 = scalar_select %p207, %s20, 1
          %s209 = smul.addr %s208, 54
          %s210 = smul.addr %s209, 4
          %s211 = scalar_lea.vmem %s0, %s210
        $region32: #{stem.1} parent=27 // pred_fallthru
          _
      $region28: #{stem.1} parent=5 // pred_fallthru
        _
      %p212 = scmp.le.s32.totalorder 1, %s13
      %p213 = scmp.lt.s32.totalorder %s13, 3
      %p214 = pnand %p212, %p213
      %p215 = pneg %p214
      // Predicated region
      $region33: #{stem.1} parent=5 // pred_check
        _
      $region34: #{stem.1} parent=5 // pred_check_branch
        %217 = sbr.rel (%p214) target = $region36
      $region35: #{stem.1} parent=5 // pred_region
        %s218 = ssub.s32 %s13, 1
        %p219 = scmp.lt.s32.totalorder %s23, 1
        %s220 = scalar_select %p219, %s23, 1
        %s221 = smul.addr %s220, 54
        %s222 = smul.addr %s221, 4
        %s223 = scalar_lea.vmem %s0, %s222
        %p224 = pneg %p58
        %p225 = pneg %p55
        %p226 = scmp.lt.s32.totalorder %s24, 0
        %s227 = scalar_select %p226, %s24, 0
        %s228 = smul.addr %s227, 4
        %s229 = scalar_lea.vmem %s1, %s228
        %p230 = pneg %p84
        %p231 = pneg %p81
        %p232 = scmp.lt.s32.totalorder %s24, 0
        %s233 = scalar_select %p232, %s24, 0
        %s234 = scalar_lea.vmem %s2, %s233
        %p235 = pneg %p110
        %p236 = pneg %p107
        %p237 = scmp.lt.s32.totalorder %s24, 0
        %s238 = scalar_select %p237, %s24, 0
        %s239 = scalar_lea.vmem %s3, %s238
        %p240 = pneg %p136
        %p241 = pneg %p133
        %p242 = pneg %p166
        %p243 = pneg %p163
        %s244 = sand.u32 %s153, 1
        %s245 = scalar_lea.sflag [#allocation3], %s244
        %s246 = sand.u32 %s153, 1
        %s247 = smul.addr %s246, 128
        %s248 = scalar_lea.vmem [#allocation2], %s247
        %p249 = scmp.lt.s32.totalorder %s23, 1
        %s250 = scalar_select %p249, %s23, 1
        %s251 = smul.addr %s250, 54
        %s252 = smul.addr %s251, 4
        %s253 = scalar_lea.vmem %s0, %s252
        %p254 = scmp.lt.s32.totalorder %s24, 0
        %s255 = scalar_select %p254, %s24, 0
        %s256 = smul.addr %s255, 4
        %s257 = scalar_lea.vmem %s1, %s256
        %p258 = scmp.lt.s32.totalorder %s24, 0
        %s259 = scalar_select %p258, %s24, 0
        %s260 = scalar_lea.vmem %s2, %s259
        %p261 = scmp.lt.s32.totalorder %s24, 0
        %s262 = scalar_select %p261, %s24, 0
        %s263 = scalar_lea.vmem %s3, %s262
        %s264 = smul.u32 16, %s25
        %s266 = smul.u32 %s25, 16
        %s267 = smul.u32 %s266, 3
        %s268 = smul.addr %s267, 4
        %s269 = scalar_lea.vmem %s253, %s268
        %v270 = vld [vmem:[%s269] sm:$0xf]
        %v271 = vld [vmem:[%s269 + $0x4] sm:$0xf]
        %v272 = vld [vmem:[%s269 + $0xc] sm:$0xf]
        %v273 = vld [vmem:[%s269 + $0x10] sm:$0xf]
        %v274 = vld [vmem:[%s269 + $0x18] sm:$0xf]
        %v275 = vld [vmem:[%s269 + $0x1c] sm:$0xf]
        %v276 = vld [vmem:[%s269 + $0x24] sm:$0xf]
        %v277 = vld [vmem:[%s269 + $0x28] sm:$0xf]
        %v278 = vld [vmem:[%s269 + $0x30] sm:$0xf]
        %v279 = vld [vmem:[%s269 + $0x34] sm:$0xf]
        %v280 = vld [vmem:[%s269 + $0x3c] sm:$0xf]
        %v281 = vld [vmem:[%s269 + $0x40] sm:$0xf]
        %v282 = vld [vmem:[%s269 + $0x48] sm:$0xf]
        %v283 = vld [vmem:[%s269 + $0x4c] sm:$0xf]
        %v284 = vld [vmem:[%s269 + $0x54] sm:$0xf]
        %v285 = vld [vmem:[%s269 + $0x58] sm:$0xf]
        %v286 = vld [vmem:[%s269 + $0x60] sm:$0xf]
        %v287 = vld [vmem:[%s269 + $0x64] sm:$0xf]
        %v288 = vld [vmem:[%s269 + $0x6c] sm:$0xf]
        %v289 = vld [vmem:[%s269 + $0x70] sm:$0xf]
        %v290 = vld [vmem:[%s269 + $0x78] sm:$0xf]
        %v291 = vld [vmem:[%s269 + $0x7c] sm:$0xf]
        %v292 = vld [vmem:[%s269 + $0x84] sm:$0xf]
        %v293 = vld [vmem:[%s269 + $0x88] sm:$0xf]
        %v294 = vld [vmem:[%s269 + $0x90] sm:$0xf]
        %v295 = vld [vmem:[%s269 + $0x94] sm:$0xf]
        %v296 = vld [vmem:[%s269 + $0x9c] sm:$0xf]
        %v297 = vld [vmem:[%s269 + $0xa0] sm:$0xf]
        %v298 = vld [vmem:[%s269 + $0xa8] sm:$0xf]
        %v299 = vld [vmem:[%s269 + $0xac] sm:$0xf]
        %v300 = vld [vmem:[%s269 + $0xb4] sm:$0xf]
        %v301 = vld [vmem:[%s269 + $0xb8] sm:$0xf]
        %v302 = vld [vmem:[%s257] sm:$0xf]
        %v303 = vld [vmem:[%s257 + $0x4] sm:$0xf]
        %v304 = vld [vmem:[%s257 + $0x8] sm:$0xf]
        %v305 = vld [vmem:[%s257 + $0xc] sm:$0xf]
        %v306 = vld [vmem:[%s257 + $0x10] sm:$0xf]
        %v307 = vld [vmem:[%s257 + $0x14] sm:$0xf]
        %v308 = vld [vmem:[%s269 + $0x8] sm:$0x1]
        %v309 = vld [vmem:[%s269 + $0x14] sm:$0x1]
        %v310 = vld [vmem:[%s269 + $0x20] sm:$0x1]
        %v311 = vld [vmem:[%s269 + $0x2c] sm:$0x1]
        %v312 = vld [vmem:[%s269 + $0x38] sm:$0x1]
        %v313 = vld [vmem:[%s269 + $0x44] sm:$0x1]
        %v314 = vld [vmem:[%s269 + $0x50] sm:$0x1]
        %v315 = vld [vmem:[%s269 + $0x5c] sm:$0x1]
        %v316 = vld [vmem:[%s269 + $0x68] sm:$0x1]
        %v317 = vld [vmem:[%s269 + $0x74] sm:$0x1]
        %v318 = vld [vmem:[%s269 + $0x80] sm:$0x1]
        %v319 = vld [vmem:[%s269 + $0x8c] sm:$0x1]
        %v320 = vld [vmem:[%s269 + $0x98] sm:$0x1]
        %v321 = vld [vmem:[%s269 + $0xa4] sm:$0x1]
        %v322 = vld [vmem:[%s269 + $0xb0] sm:$0x1]
        %v323 = vld [vmem:[%s269 + $0xbc] sm:$0x1]
        %vm324 = vsmask.f32 3328
        %vm325 = vsmask.f32 7440
        %vm326 = vmor %vm324, %vm325
        %v328 = vshrl.u32 %v270, 16
        %v330 = vrot.slane %v328, 4
        %v331 = vshll.u32 %v270, 16
        %v333 = vrot.slane %v331, 5
        %v334 = vor.u32 %v330, %v333
        %v335 = vrot.slane %v334, 4
        %v337 = vshll.u32 %v271, 16
        %v339 = vrot.slane %v337, 5
        %v340 = vsel %vm326, %v335, %v339
        %v341 = vshrl.u32 %v271, 16
        %v343 = vrot.slane %v341, 4
        %v344 = vor.u32 %v343, %v339
        %v345 = vrot.slane %v344, 4
        %v347 = vshll.u32 %v308, 16
        %v349 = vrot.slane %v347, 5
        %v350 = vsel %vm326, %v345, %v349
        %v352 = vshrl.u32 %v272, 16
        %v354 = vrot.slane %v352, 4
        %v355 = vshll.u32 %v272, 16
        %v357 = vrot.slane %v355, 5
        %v358 = vor.u32 %v354, %v357
        %v359 = vrot.slane %v358, 4
        %v361 = vshll.u32 %v273, 16
        %v363 = vrot.slane %v361, 5
        %v364 = vsel %vm326, %v359, %v363
        %v365 = vshrl.u32 %v273, 16
        %v367 = vrot.slane %v365, 4
        %v368 = vor.u32 %v367, %v363
        %v369 = vrot.slane %v368, 4
        %v371 = vshll.u32 %v309, 16
        %v373 = vrot.slane %v371, 5
        %v374 = vsel %vm326, %v369, %v373
        %v376 = vshrl.u32 %v274, 16
        %v378 = vrot.slane %v376, 4
        %v379 = vshll.u32 %v274, 16
        %v381 = vrot.slane %v379, 5
        %v382 = vor.u32 %v378, %v381
        %v383 = vrot.slane %v382, 4
        %v385 = vshll.u32 %v275, 16
        %v387 = vrot.slane %v385, 5
        %v388 = vsel %vm326, %v383, %v387
        %v389 = vshrl.u32 %v275, 16
        %v391 = vrot.slane %v389, 4
        %v392 = vor.u32 %v391, %v387
        %v393 = vrot.slane %v392, 4
        %v395 = vshll.u32 %v310, 16
        %v397 = vrot.slane %v395, 5
        %v398 = vsel %vm326, %v393, %v397
        %v400 = vshrl.u32 %v276, 16
        %v402 = vrot.slane %v400, 4
        %v403 = vshll.u32 %v276, 16
        %v405 = vrot.slane %v403, 5
        %v406 = vor.u32 %v402, %v405
        %v407 = vrot.slane %v406, 4
        %v409 = vshll.u32 %v277, 16
        %v411 = vrot.slane %v409, 5
        %v412 = vsel %vm326, %v407, %v411
        %v413 = vshrl.u32 %v277, 16
        %v415 = vrot.slane %v413, 4
        %v416 = vor.u32 %v415, %v411
        %v417 = vrot.slane %v416, 4
        %v419 = vshll.u32 %v311, 16
        %v421 = vrot.slane %v419, 5
        %v422 = vsel %vm326, %v417, %v421
        %v424 = vshrl.u32 %v278, 16
        %v426 = vrot.slane %v424, 4
        %v427 = vshll.u32 %v278, 16
        %v429 = vrot.slane %v427, 5
        %v430 = vor.u32 %v426, %v429
        %v431 = vrot.slane %v430, 4
        %v433 = vshll.u32 %v279, 16
        %v435 = vrot.slane %v433, 5
        %v436 = vsel %vm326, %v431, %v435
        %v437 = vshrl.u32 %v279, 16
        %v439 = vrot.slane %v437, 4
        %v440 = vor.u32 %v439, %v435
        %v441 = vrot.slane %v440, 4
        %v443 = vshll.u32 %v312, 16
        %v445 = vrot.slane %v443, 5
        %v446 = vsel %vm326, %v441, %v445
        %v448 = vshrl.u32 %v280, 16
        %v450 = vrot.slane %v448, 4
        %v451 = vshll.u32 %v280, 16
        %v453 = vrot.slane %v451, 5
        %v454 = vor.u32 %v450, %v453
        %v455 = vrot.slane %v454, 4
        %v457 = vshll.u32 %v281, 16
        %v459 = vrot.slane %v457, 5
        %v460 = vsel %vm326, %v455, %v459
        %v461 = vshrl.u32 %v281, 16
        %v463 = vrot.slane %v461, 4
        %v464 = vor.u32 %v463, %v459
        %v465 = vrot.slane %v464, 4
        %v467 = vshll.u32 %v313, 16
        %v469 = vrot.slane %v467, 5
        %v470 = vsel %vm326, %v465, %v469
        %v472 = vshrl.u32 %v282, 16
        %v474 = vrot.slane %v472, 4
        %v475 = vshll.u32 %v282, 16
        %v477 = vrot.slane %v475, 5
        %v478 = vor.u32 %v474, %v477
        %v479 = vrot.slane %v478, 4
        %v481 = vshll.u32 %v283, 16
        %v483 = vrot.slane %v481, 5
        %v484 = vsel %vm326, %v479, %v483
        %v485 = vshrl.u32 %v283, 16
        %v487 = vrot.slane %v485, 4
        %v488 = vor.u32 %v487, %v483
        %v489 = vrot.slane %v488, 4
        %v491 = vshll.u32 %v314, 16
        %v493 = vrot.slane %v491, 5
        %v494 = vsel %vm326, %v489, %v493
        %v496 = vshrl.u32 %v284, 16
        %v498 = vrot.slane %v496, 4
        %v499 = vshll.u32 %v284, 16
        %v501 = vrot.slane %v499, 5
        %v502 = vor.u32 %v498, %v501
        %v503 = vrot.slane %v502, 4
        %v505 = vshll.u32 %v285, 16
        %v507 = vrot.slane %v505, 5
        %v508 = vsel %vm326, %v503, %v507
        %v509 = vshrl.u32 %v285, 16
        %v511 = vrot.slane %v509, 4
        %v512 = vor.u32 %v511, %v507
        %v513 = vrot.slane %v512, 4
        %v515 = vshll.u32 %v315, 16
        %v517 = vrot.slane %v515, 5
        %v518 = vsel %vm326, %v513, %v517
        %v520 = vshrl.u32 %v286, 16
        %v522 = vrot.slane %v520, 4
        %v523 = vshll.u32 %v286, 16
        %v525 = vrot.slane %v523, 5
        %v526 = vor.u32 %v522, %v525
        %v527 = vrot.slane %v526, 4
        %v529 = vshll.u32 %v287, 16
        %v531 = vrot.slane %v529, 5
        %v532 = vsel %vm326, %v527, %v531
        %v533 = vshrl.u32 %v287, 16
        %v535 = vrot.slane %v533, 4
        %v536 = vor.u32 %v535, %v531
        %v537 = vrot.slane %v536, 4
        %v539 = vshll.u32 %v316, 16
        %v541 = vrot.slane %v539, 5
        %v542 = vsel %vm326, %v537, %v541
        %v544 = vshrl.u32 %v288, 16
        %v546 = vrot.slane %v544, 4
        %v547 = vshll.u32 %v288, 16
        %v549 = vrot.slane %v547, 5
        %v550 = vor.u32 %v546, %v549
        %v551 = vrot.slane %v550, 4
        %v553 = vshll.u32 %v289, 16
        %v555 = vrot.slane %v553, 5
        %v556 = vsel %vm326, %v551, %v555
        %v557 = vshrl.u32 %v289, 16
        %v559 = vrot.slane %v557, 4
        %v560 = vor.u32 %v559, %v555
        %v561 = vrot.slane %v560, 4
        %v563 = vshll.u32 %v317, 16
        %v565 = vrot.slane %v563, 5
        %v566 = vsel %vm326, %v561, %v565
        %v568 = vshrl.u32 %v290, 16
        %v570 = vrot.slane %v568, 4
        %v571 = vshll.u32 %v290, 16
        %v573 = vrot.slane %v571, 5
        %v574 = vor.u32 %v570, %v573
        %v575 = vrot.slane %v574, 4
        %v577 = vshll.u32 %v291, 16
        %v579 = vrot.slane %v577, 5
        %v580 = vsel %vm326, %v575, %v579
        %v581 = vshrl.u32 %v291, 16
        %v583 = vrot.slane %v581, 4
        %v584 = vor.u32 %v583, %v579
        %v585 = vrot.slane %v584, 4
        %v587 = vshll.u32 %v318, 16
        %v589 = vrot.slane %v587, 5
        %v590 = vsel %vm326, %v585, %v589
        %v592 = vshrl.u32 %v292, 16
        %v594 = vrot.slane %v592, 4
        %v595 = vshll.u32 %v292, 16
        %v597 = vrot.slane %v595, 5
        %v598 = vor.u32 %v594, %v597
        %v599 = vrot.slane %v598, 4
        %v601 = vshll.u32 %v293, 16
        %v603 = vrot.slane %v601, 5
        %v604 = vsel %vm326, %v599, %v603
        %v605 = vshrl.u32 %v293, 16
        %v607 = vrot.slane %v605, 4
        %v608 = vor.u32 %v607, %v603
        %v609 = vrot.slane %v608, 4
        %v611 = vshll.u32 %v319, 16
        %v613 = vrot.slane %v611, 5
        %v614 = vsel %vm326, %v609, %v613
        %v616 = vshrl.u32 %v294, 16
        %v618 = vrot.slane %v616, 4
        %v619 = vshll.u32 %v294, 16
        %v621 = vrot.slane %v619, 5
        %v622 = vor.u32 %v618, %v621
        %v623 = vrot.slane %v622, 4
        %v625 = vshll.u32 %v295, 16
        %v627 = vrot.slane %v625, 5
        %v628 = vsel %vm326, %v623, %v627
        %v629 = vshrl.u32 %v295, 16
        %v631 = vrot.slane %v629, 4
        %v632 = vor.u32 %v631, %v627
        %v633 = vrot.slane %v632, 4
        %v635 = vshll.u32 %v320, 16
        %v637 = vrot.slane %v635, 5
        %v638 = vsel %vm326, %v633, %v637
        %v640 = vshrl.u32 %v296, 16
        %v642 = vrot.slane %v640, 4
        %v643 = vshll.u32 %v296, 16
        %v645 = vrot.slane %v643, 5
        %v646 = vor.u32 %v642, %v645
        %v647 = vrot.slane %v646, 4
        %v649 = vshll.u32 %v297, 16
        %v651 = vrot.slane %v649, 5
        %v652 = vsel %vm326, %v647, %v651
        %v653 = vshrl.u32 %v297, 16
        %v655 = vrot.slane %v653, 4
        %v656 = vor.u32 %v655, %v651
        %v657 = vrot.slane %v656, 4
        %v659 = vshll.u32 %v321, 16
        %v661 = vrot.slane %v659, 5
        %v662 = vsel %vm326, %v657, %v661
        %v664 = vshrl.u32 %v298, 16
        %v666 = vrot.slane %v664, 4
        %v667 = vshll.u32 %v298, 16
        %v669 = vrot.slane %v667, 5
        %v670 = vor.u32 %v666, %v669
        %v671 = vrot.slane %v670, 4
        %v673 = vshll.u32 %v299, 16
        %v675 = vrot.slane %v673, 5
        %v676 = vsel %vm326, %v671, %v675
        %v677 = vshrl.u32 %v299, 16
        %v679 = vrot.slane %v677, 4
        %v680 = vor.u32 %v679, %v675
        %v681 = vrot.slane %v680, 4
        %v683 = vshll.u32 %v322, 16
        %v685 = vrot.slane %v683, 5
        %v686 = vsel %vm326, %v681, %v685
        %v688 = vshrl.u32 %v300, 16
        %v690 = vrot.slane %v688, 4
        %v691 = vshll.u32 %v300, 16
        %v693 = vrot.slane %v691, 5
        %v694 = vor.u32 %v690, %v693
        %v695 = vrot.slane %v694, 4
        %v697 = vshll.u32 %v301, 16
        %v699 = vrot.slane %v697, 5
        %v700 = vsel %vm326, %v695, %v699
        %v701 = vshrl.u32 %v301, 16
        %v703 = vrot.slane %v701, 4
        %v704 = vor.u32 %v703, %v699
        %v705 = vrot.slane %v704, 4
        %v707 = vshll.u32 %v323, 16
        %v709 = vrot.slane %v707, 5
        %v710 = vsel %vm326, %v705, %v709
        %s711 = scalar_lea.vmem %s257, 24
        %v712 = vld [vmem:[%s711] sm:$0xf]
        %v713 = vld [vmem:[%s711 + $0x4] sm:$0xf]
        %v714 = vld [vmem:[%s711 + $0x8] sm:$0xf]
        %v715 = vld [vmem:[%s711 + $0xc] sm:$0xf]
        %v716 = vld [vmem:[%s711 + $0x10] sm:$0xf]
        %v717 = vld [vmem:[%s711 + $0x14] sm:$0xf]
        %v718 = vunpack.c.l.b16 %v340
        %v719 = vunpack.c.l.b16 %v350
        %v720 = vunpack.c.l.b16 %v364
        %v721 = vunpack.c.l.b16 %v374
        %v722 = vunpack.c.l.b16 %v388
        %v723 = vunpack.c.l.b16 %v398
        %v724 = vunpack.c.l.b16 %v412
        %v725 = vunpack.c.l.b16 %v422
        %v726 = vunpack.c.l.b16 %v436
        %v727 = vunpack.c.l.b16 %v446
        %v728 = vunpack.c.l.b16 %v460
        %v729 = vunpack.c.l.b16 %v470
        %v730 = vunpack.c.l.b16 %v484
        %v731 = vunpack.c.l.b16 %v494
        %v732 = vunpack.c.l.b16 %v508
        %v733 = vunpack.c.l.b16 %v518
        %v734 = vunpack.c.l.b16 %v532
        %v735 = vunpack.c.l.b16 %v542
        %v736 = vunpack.c.l.b16 %v556
        %v737 = vunpack.c.l.b16 %v566
        %v738 = vunpack.c.l.b16 %v580
        %v739 = vunpack.c.l.b16 %v590
        %v740 = vunpack.c.l.b16 %v604
        %v741 = vunpack.c.l.b16 %v614
        %v742 = vunpack.c.l.b16 %v628
        %v743 = vunpack.c.l.b16 %v638
        %v744 = vunpack.c.l.b16 %v652
        %v745 = vunpack.c.l.b16 %v662
        %v746 = vunpack.c.l.b16 %v676
        %v747 = vunpack.c.l.b16 %v686
        %v748 = vunpack.c.l.b16 %v700
        %v749 = vunpack.c.l.b16 %v710
        %v750 = vpack.c.b16 %v719, %v718
        %v751 = vpack.c.b16 %v721, %v720
        %v752 = vpack.c.b16 %v723, %v722
        %v753 = vpack.c.b16 %v725, %v724
        %v754 = vpack.c.b16 %v727, %v726
        %v755 = vpack.c.b16 %v729, %v728
        %v756 = vpack.c.b16 %v731, %v730
        %v757 = vpack.c.b16 %v733, %v732
        %v758 = vpack.c.b16 %v735, %v734
        %v759 = vpack.c.b16 %v737, %v736
        %v760 = vpack.c.b16 %v739, %v738
        %v761 = vpack.c.b16 %v741, %v740
        %v762 = vpack.c.b16 %v743, %v742
        %v763 = vpack.c.b16 %v745, %v744
        %v764 = vpack.c.b16 %v747, %v746
        %v765 = vpack.c.b16 %v749, %v748
        %v772 = vunpack.c.l.b16 %v712
        %v773 = vunpack.c.l.b16 %v713
        %v774 = vunpack.c.l.b16 %v714
        %v775 = vunpack.c.l.b16 %v715
        %v776 = vunpack.c.l.b16 %v716
        %v777 = vunpack.c.l.b16 %v717
        %v778 = vpack.c.b16 %v773, %v772
        %v779 = vpack.c.b16 %v775, %v774
        %v780 = vpack.c.b16 %v777, %v776
        %vm784 = vcmask 392192
        %v786 = vsel %vm784, %v750, 0
        %v789 = vsel %vm784, %v751, 0
        %v792 = vsel %vm784, %v752, 0
        %v795 = vsel %vm784, %v753, 0
        %v798 = vsel %vm784, %v754, 0
        %v801 = vsel %vm784, %v755, 0
        %v804 = vsel %vm784, %v756, 0
        %v807 = vsel %vm784, %v757, 0
        %v810 = vsel %vm784, %v758, 0
        %v813 = vsel %vm784, %v759, 0
        %v816 = vsel %vm784, %v760, 0
        %v819 = vsel %vm784, %v761, 0
        %v822 = vsel %vm784, %v762, 0
        %v825 = vsel %vm784, %v763, 0
        %v828 = vsel %vm784, %v764, 0
        %v831 = vsel %vm784, %v765, 0
        %833 = vmatpush.bf16.msra.mxu0 0
        %834 = vmatpush.bf16.msra.mxu0 0
        %835 = vmatpush.bf16.msra.mxu0 0
        %836 = vmatpush.bf16.msra.mxu0 0
        %837 = vmatpush.bf16.msra.mxu0 0
        %838 = vmatpush.bf16.msra.mxu0 %v780
        %839 = vmatpush.bf16.msra.mxu0 %v779
        %840 = vmatpush.bf16.msra.mxu0 %v778
        %841 = vmatmul.bf16.gmra.mxu0 %v786
        %v842 = vpop.f32.mrf.mxu0
        %v843 = vadd.f32 0.0, %v842
        %v844 = vpop.f32.mrf.mxu0
        %v845 = vadd.f32 0.0, %v844
        %846 = vmatmul.bf16.gmra.mxu0 %v789
        %v847 = vpop.f32.mrf.mxu0
        %v848 = vadd.f32 0.0, %v847
        %v849 = vpop.f32.mrf.mxu0
        %v850 = vadd.f32 0.0, %v849
        %851 = vmatmul.bf16.gmra.mxu0 %v792
        %v852 = vpop.f32.mrf.mxu0
        %v853 = vadd.f32 0.0, %v852
        %v854 = vpop.f32.mrf.mxu0
        %v855 = vadd.f32 0.0, %v854
        %856 = vmatmul.bf16.gmra.mxu0 %v795
        %v857 = vpop.f32.mrf.mxu0
        %v858 = vadd.f32 0.0, %v857
        %v859 = vpop.f32.mrf.mxu0
        %v860 = vadd.f32 0.0, %v859
        %861 = vmatmul.bf16.gmra.mxu0 %v798
        %v862 = vpop.f32.mrf.mxu0
        %v863 = vadd.f32 0.0, %v862
        %v864 = vpop.f32.mrf.mxu0
        %v865 = vadd.f32 0.0, %v864
        %866 = vmatmul.bf16.gmra.mxu0 %v801
        %v867 = vpop.f32.mrf.mxu0
        %v868 = vadd.f32 0.0, %v867
        %v869 = vpop.f32.mrf.mxu0
        %v870 = vadd.f32 0.0, %v869
        %871 = vmatmul.bf16.gmra.mxu0 %v804
        %v872 = vpop.f32.mrf.mxu0
        %v873 = vadd.f32 0.0, %v872
        %v874 = vpop.f32.mrf.mxu0
        %v875 = vadd.f32 0.0, %v874
        %876 = vmatmul.bf16.gmra.mxu0 %v807
        %v877 = vpop.f32.mrf.mxu0
        %v878 = vadd.f32 0.0, %v877
        %v879 = vpop.f32.mrf.mxu0
        %v880 = vadd.f32 0.0, %v879
        %881 = vmatmul.bf16.gmra.mxu0 %v810
        %v882 = vpop.f32.mrf.mxu0
        %v883 = vadd.f32 0.0, %v882
        %v884 = vpop.f32.mrf.mxu0
        %v885 = vadd.f32 0.0, %v884
        %886 = vmatmul.bf16.gmra.mxu0 %v813
        %v887 = vpop.f32.mrf.mxu0
        %v888 = vadd.f32 0.0, %v887
        %v889 = vpop.f32.mrf.mxu0
        %v890 = vadd.f32 0.0, %v889
        %891 = vmatmul.bf16.gmra.mxu0 %v816
        %v892 = vpop.f32.mrf.mxu0
        %v893 = vadd.f32 0.0, %v892
        %v894 = vpop.f32.mrf.mxu0
        %v895 = vadd.f32 0.0, %v894
        %896 = vmatmul.bf16.gmra.mxu0 %v819
        %v897 = vpop.f32.mrf.mxu0
        %v898 = vadd.f32 0.0, %v897
        %v899 = vpop.f32.mrf.mxu0
        %v900 = vadd.f32 0.0, %v899
        %901 = vmatmul.bf16.gmra.mxu0 %v822
        %v902 = vpop.f32.mrf.mxu0
        %v903 = vadd.f32 0.0, %v902
        %v904 = vpop.f32.mrf.mxu0
        %v905 = vadd.f32 0.0, %v904
        %906 = vmatmul.bf16.gmra.mxu0 %v825
        %v907 = vpop.f32.mrf.mxu0
        %v908 = vadd.f32 0.0, %v907
        %v909 = vpop.f32.mrf.mxu0
        %v910 = vadd.f32 0.0, %v909
        %911 = vmatmul.bf16.gmra.mxu0 %v828
        %v912 = vpop.f32.mrf.mxu0
        %v913 = vadd.f32 0.0, %v912
        %v914 = vpop.f32.mrf.mxu0
        %v915 = vadd.f32 0.0, %v914
        %916 = vmatmul.bf16.gmra.mxu0 %v831
        %v917 = vpop.f32.mrf.mxu0
        %v918 = vadd.f32 0.0, %v917
        %v919 = vpop.f32.mrf.mxu0
        %v920 = vadd.f32 0.0, %v919
        %921 = vdwg.mxu0
        %v954 = vunpack.c.l.b16 %v270
        %v955 = vunpack.c.l.b16 %v271
        %v956 = vunpack.c.l.b16 %v272
        %v957 = vunpack.c.l.b16 %v273
        %v958 = vunpack.c.l.b16 %v274
        %v959 = vunpack.c.l.b16 %v275
        %v960 = vunpack.c.l.b16 %v276
        %v961 = vunpack.c.l.b16 %v277
        %v962 = vunpack.c.l.b16 %v278
        %v963 = vunpack.c.l.b16 %v279
        %v964 = vunpack.c.l.b16 %v280
        %v965 = vunpack.c.l.b16 %v281
        %v966 = vunpack.c.l.b16 %v282
        %v967 = vunpack.c.l.b16 %v283
        %v968 = vunpack.c.l.b16 %v284
        %v969 = vunpack.c.l.b16 %v285
        %v970 = vunpack.c.l.b16 %v286
        %v971 = vunpack.c.l.b16 %v287
        %v972 = vunpack.c.l.b16 %v288
        %v973 = vunpack.c.l.b16 %v289
        %v974 = vunpack.c.l.b16 %v290
        %v975 = vunpack.c.l.b16 %v291
        %v976 = vunpack.c.l.b16 %v292
        %v977 = vunpack.c.l.b16 %v293
        %v978 = vunpack.c.l.b16 %v294
        %v979 = vunpack.c.l.b16 %v295
        %v980 = vunpack.c.l.b16 %v296
        %v981 = vunpack.c.l.b16 %v297
        %v982 = vunpack.c.l.b16 %v298
        %v983 = vunpack.c.l.b16 %v299
        %v984 = vunpack.c.l.b16 %v300
        %v985 = vunpack.c.l.b16 %v301
        %v986 = vpack.c.b16 %v955, %v954
        %v987 = vpack.c.b16 %v957, %v956
        %v988 = vpack.c.b16 %v959, %v958
        %v989 = vpack.c.b16 %v961, %v960
        %v990 = vpack.c.b16 %v963, %v962
        %v991 = vpack.c.b16 %v965, %v964
        %v992 = vpack.c.b16 %v967, %v966
        %v993 = vpack.c.b16 %v969, %v968
        %v994 = vpack.c.b16 %v971, %v970
        %v995 = vpack.c.b16 %v973, %v972
        %v996 = vpack.c.b16 %v975, %v974
        %v997 = vpack.c.b16 %v977, %v976
        %v998 = vpack.c.b16 %v979, %v978
        %v999 = vpack.c.b16 %v981, %v980
        %v1000 = vpack.c.b16 %v983, %v982
        %v1001 = vpack.c.b16 %v985, %v984
        %v1008 = vunpack.c.l.b16 %v302
        %v1009 = vunpack.c.l.b16 %v303
        %v1010 = vunpack.c.l.b16 %v304
        %v1011 = vunpack.c.l.b16 %v305
        %v1012 = vunpack.c.l.b16 %v306
        %v1013 = vunpack.c.l.b16 %v307
        %v1014 = vpack.c.b16 %v1009, %v1008
        %v1015 = vpack.c.b16 %v1011, %v1010
        %v1016 = vpack.c.b16 %v1013, %v1012
        %v1021 = vsel %vm784, %v986, 0
        %v1024 = vsel %vm784, %v987, 0
        %v1027 = vsel %vm784, %v988, 0
        %v1030 = vsel %vm784, %v989, 0
        %v1033 = vsel %vm784, %v990, 0
        %v1036 = vsel %vm784, %v991, 0
        %v1039 = vsel %vm784, %v992, 0
        %v1042 = vsel %vm784, %v993, 0
        %v1045 = vsel %vm784, %v994, 0
        %v1048 = vsel %vm784, %v995, 0
        %v1051 = vsel %vm784, %v996, 0
        %v1054 = vsel %vm784, %v997, 0
        %v1057 = vsel %vm784, %v998, 0
        %v1060 = vsel %vm784, %v999, 0
        %v1063 = vsel %vm784, %v1000, 0
        %v1066 = vsel %vm784, %v1001, 0
        %1068 = vmatpush.bf16.msra.mxu0 0
        %1069 = vmatpush.bf16.msra.mxu0 0
        %1070 = vmatpush.bf16.msra.mxu0 0
        %1071 = vmatpush.bf16.msra.mxu0 0
        %1072 = vmatpush.bf16.msra.mxu0 0
        %1073 = vmatpush.bf16.msra.mxu0 %v1016
        %1074 = vmatpush.bf16.msra.mxu0 %v1015
        %1075 = vmatpush.bf16.msra.mxu0 %v1014
        %1076 = vmatmul.bf16.gmra.mxu0 %v1021
        %v1077 = vpop.f32.mrf.mxu0
        %v1078 = vadd.f32 %v843, %v1077
        %v1079 = vpop.f32.mrf.mxu0
        %v1080 = vadd.f32 %v845, %v1079
        %1081 = vmatmul.bf16.gmra.mxu0 %v1024
        %v1082 = vpop.f32.mrf.mxu0
        %v1083 = vadd.f32 %v848, %v1082
        %v1084 = vpop.f32.mrf.mxu0
        %v1085 = vadd.f32 %v850, %v1084
        %1086 = vmatmul.bf16.gmra.mxu0 %v1027
        %v1087 = vpop.f32.mrf.mxu0
        %v1088 = vadd.f32 %v853, %v1087
        %v1089 = vpop.f32.mrf.mxu0
        %v1090 = vadd.f32 %v855, %v1089
        %1091 = vmatmul.bf16.gmra.mxu0 %v1030
        %v1092 = vpop.f32.mrf.mxu0
        %v1093 = vadd.f32 %v858, %v1092
        %v1094 = vpop.f32.mrf.mxu0
        %v1095 = vadd.f32 %v860, %v1094
        %1096 = vmatmul.bf16.gmra.mxu0 %v1033
        %v1097 = vpop.f32.mrf.mxu0
        %v1098 = vadd.f32 %v863, %v1097
        %v1099 = vpop.f32.mrf.mxu0
        %v1100 = vadd.f32 %v865, %v1099
        %1101 = vmatmul.bf16.gmra.mxu0 %v1036
        %v1102 = vpop.f32.mrf.mxu0
        %v1103 = vadd.f32 %v868, %v1102
        %v1104 = vpop.f32.mrf.mxu0
        %v1105 = vadd.f32 %v870, %v1104
        %1106 = vmatmul.bf16.gmra.mxu0 %v1039
        %v1107 = vpop.f32.mrf.mxu0
        %v1108 = vadd.f32 %v873, %v1107
        %v1109 = vpop.f32.mrf.mxu0
        %v1110 = vadd.f32 %v875, %v1109
        %1111 = vmatmul.bf16.gmra.mxu0 %v1042
        %v1112 = vpop.f32.mrf.mxu0
        %v1113 = vadd.f32 %v878, %v1112
        %v1114 = vpop.f32.mrf.mxu0
        %v1115 = vadd.f32 %v880, %v1114
        %1116 = vmatmul.bf16.gmra.mxu0 %v1045
        %v1117 = vpop.f32.mrf.mxu0
        %v1118 = vadd.f32 %v883, %v1117
        %v1119 = vpop.f32.mrf.mxu0
        %v1120 = vadd.f32 %v885, %v1119
        %1121 = vmatmul.bf16.gmra.mxu0 %v1048
        %v1122 = vpop.f32.mrf.mxu0
        %v1123 = vadd.f32 %v888, %v1122
        %v1124 = vpop.f32.mrf.mxu0
        %v1125 = vadd.f32 %v890, %v1124
        %1126 = vmatmul.bf16.gmra.mxu0 %v1051
        %v1127 = vpop.f32.mrf.mxu0
        %v1128 = vadd.f32 %v893, %v1127
        %v1129 = vpop.f32.mrf.mxu0
        %v1130 = vadd.f32 %v895, %v1129
        %1131 = vmatmul.bf16.gmra.mxu0 %v1054
        %v1132 = vpop.f32.mrf.mxu0
        %v1133 = vadd.f32 %v898, %v1132
        %v1134 = vpop.f32.mrf.mxu0
        %v1135 = vadd.f32 %v900, %v1134
        %1136 = vmatmul.bf16.gmra.mxu0 %v1057
        %v1137 = vpop.f32.mrf.mxu0
        %v1138 = vadd.f32 %v903, %v1137
        %v1139 = vpop.f32.mrf.mxu0
        %v1140 = vadd.f32 %v905, %v1139
        %1141 = vmatmul.bf16.gmra.mxu0 %v1060
        %v1142 = vpop.f32.mrf.mxu0
        %v1143 = vadd.f32 %v908, %v1142
        %v1144 = vpop.f32.mrf.mxu0
        %v1145 = vadd.f32 %v910, %v1144
        %1146 = vmatmul.bf16.gmra.mxu0 %v1063
        %v1147 = vpop.f32.mrf.mxu0
        %v1148 = vadd.f32 %v913, %v1147
        %v1149 = vpop.f32.mrf.mxu0
        %v1150 = vadd.f32 %v915, %v1149
        %1151 = vmatmul.bf16.gmra.mxu0 %v1066
        %v1152 = vpop.f32.mrf.mxu0
        %v1153 = vadd.f32 %v918, %v1152
        %v1154 = vpop.f32.mrf.mxu0
        %v1155 = vadd.f32 %v920, %v1154
        %1156 = vdwg.mxu0
        %v1157 = vld [vmem:[%s269] sm:$0xe]
        %v1158 = vld [vmem:[%s269 + $0xc] sm:$0xe]
        %v1159 = vld [vmem:[%s269 + $0x18] sm:$0xe]
        %v1160 = vld [vmem:[%s269 + $0x24] sm:$0xe]
        %v1161 = vld [vmem:[%s269 + $0x30] sm:$0xe]
        %v1162 = vld [vmem:[%s269 + $0x3c] sm:$0xe]
        %v1163 = vld [vmem:[%s269 + $0x48] sm:$0xe]
        %v1164 = vld [vmem:[%s269 + $0x54] sm:$0xe]
        %v1165 = vld [vmem:[%s269 + $0x60] sm:$0xe]
        %v1166 = vld [vmem:[%s269 + $0x6c] sm:$0xe]
        %v1167 = vld [vmem:[%s269 + $0x78] sm:$0xe]
        %v1168 = vld [vmem:[%s269 + $0x84] sm:$0xe]
        %v1169 = vld [vmem:[%s269 + $0x90] sm:$0xe]
        %v1170 = vld [vmem:[%s269 + $0x9c] sm:$0xe]
        %v1171 = vld [vmem:[%s269 + $0xa8] sm:$0xe]
        %v1172 = vld [vmem:[%s269 + $0xb4] sm:$0xe]
        %vm1205 = vcmask 1042432
        %vm1206 = vcmask 1046532
        %vm1207 = vmor %vm1205, %vm1206
        %v1208 = vrot.slane %v1157, 5
        %v1209 = vrot.slane %v1208, 4
        %v1210 = vrot.slane %v271, 5
        %v1211 = vsel %vm1207, %v1209, %v1210
        %v1212 = vrot.slane %v1210, 4
        %v1213 = vrot.slane %v308, 5
        %v1214 = vsel %vm1207, %v1212, %v1213
        %v1215 = vrot.slane %v1158, 5
        %v1216 = vrot.slane %v1215, 4
        %v1217 = vrot.slane %v273, 5
        %v1218 = vsel %vm1207, %v1216, %v1217
        %v1219 = vrot.slane %v1217, 4
        %v1220 = vrot.slane %v309, 5
        %v1221 = vsel %vm1207, %v1219, %v1220
        %v1222 = vrot.slane %v1159, 5
        %v1223 = vrot.slane %v1222, 4
        %v1224 = vrot.slane %v275, 5
        %v1225 = vsel %vm1207, %v1223, %v1224
        %v1226 = vrot.slane %v1224, 4
        %v1227 = vrot.slane %v310, 5
        %v1228 = vsel %vm1207, %v1226, %v1227
        %v1229 = vrot.slane %v1160, 5
        %v1230 = vrot.slane %v1229, 4
        %v1231 = vrot.slane %v277, 5
        %v1232 = vsel %vm1207, %v1230, %v1231
        %v1233 = vrot.slane %v1231, 4
        %v1234 = vrot.slane %v311, 5
        %v1235 = vsel %vm1207, %v1233, %v1234
        %v1236 = vrot.slane %v1161, 5
        %v1237 = vrot.slane %v1236, 4
        %v1238 = vrot.slane %v279, 5
        %v1239 = vsel %vm1207, %v1237, %v1238
        %v1240 = vrot.slane %v1238, 4
        %v1241 = vrot.slane %v312, 5
        %v1242 = vsel %vm1207, %v1240, %v1241
        %v1243 = vrot.slane %v1162, 5
        %v1244 = vrot.slane %v1243, 4
        %v1245 = vrot.slane %v281, 5
        %v1246 = vsel %vm1207, %v1244, %v1245
        %v1247 = vrot.slane %v1245, 4
        %v1248 = vrot.slane %v313, 5
        %v1249 = vsel %vm1207, %v1247, %v1248
        %v1250 = vrot.slane %v1163, 5
        %v1251 = vrot.slane %v1250, 4
        %v1252 = vrot.slane %v283, 5
        %v1253 = vsel %vm1207, %v1251, %v1252
        %v1254 = vrot.slane %v1252, 4
        %v1255 = vrot.slane %v314, 5
        %v1256 = vsel %vm1207, %v1254, %v1255
        %v1257 = vrot.slane %v1164, 5
        %v1258 = vrot.slane %v1257, 4
        %v1259 = vrot.slane %v285, 5
        %v1260 = vsel %vm1207, %v1258, %v1259
        %v1261 = vrot.slane %v1259, 4
        %v1262 = vrot.slane %v315, 5
        %v1263 = vsel %vm1207, %v1261, %v1262
        %v1264 = vrot.slane %v1165, 5
        %v1265 = vrot.slane %v1264, 4
        %v1266 = vrot.slane %v287, 5
        %v1267 = vsel %vm1207, %v1265, %v1266
        %v1268 = vrot.slane %v1266, 4
        %v1269 = vrot.slane %v316, 5
        %v1270 = vsel %vm1207, %v1268, %v1269
        %v1271 = vrot.slane %v1166, 5
        %v1272 = vrot.slane %v1271, 4
        %v1273 = vrot.slane %v289, 5
        %v1274 = vsel %vm1207, %v1272, %v1273
        %v1275 = vrot.slane %v1273, 4
        %v1276 = vrot.slane %v317, 5
        %v1277 = vsel %vm1207, %v1275, %v1276
        %v1278 = vrot.slane %v1167, 5
        %v1279 = vrot.slane %v1278, 4
        %v1280 = vrot.slane %v291, 5
        %v1281 = vsel %vm1207, %v1279, %v1280
        %v1282 = vrot.slane %v1280, 4
        %v1283 = vrot.slane %v318, 5
        %v1284 = vsel %vm1207, %v1282, %v1283
        %v1285 = vrot.slane %v1168, 5
        %v1286 = vrot.slane %v1285, 4
        %v1287 = vrot.slane %v293, 5
        %v1288 = vsel %vm1207, %v1286, %v1287
        %v1289 = vrot.slane %v1287, 4
        %v1290 = vrot.slane %v319, 5
        %v1291 = vsel %vm1207, %v1289, %v1290
        %v1292 = vrot.slane %v1169, 5
        %v1293 = vrot.slane %v1292, 4
        %v1294 = vrot.slane %v295, 5
        %v1295 = vsel %vm1207, %v1293, %v1294
        %v1296 = vrot.slane %v1294, 4
        %v1297 = vrot.slane %v320, 5
        %v1298 = vsel %vm1207, %v1296, %v1297
        %v1299 = vrot.slane %v1170, 5
        %v1300 = vrot.slane %v1299, 4
        %v1301 = vrot.slane %v297, 5
        %v1302 = vsel %vm1207, %v1300, %v1301
        %v1303 = vrot.slane %v1301, 4
        %v1304 = vrot.slane %v321, 5
        %v1305 = vsel %vm1207, %v1303, %v1304
        %v1306 = vrot.slane %v1171, 5
        %v1307 = vrot.slane %v1306, 4
        %v1308 = vrot.slane %v299, 5
        %v1309 = vsel %vm1207, %v1307, %v1308
        %v1310 = vrot.slane %v1308, 4
        %v1311 = vrot.slane %v322, 5
        %v1312 = vsel %vm1207, %v1310, %v1311
        %v1313 = vrot.slane %v1172, 5
        %v1314 = vrot.slane %v1313, 4
        %v1315 = vrot.slane %v301, 5
        %v1316 = vsel %vm1207, %v1314, %v1315
        %v1317 = vrot.slane %v1315, 4
        %v1318 = vrot.slane %v323, 5
        %v1319 = vsel %vm1207, %v1317, %v1318
        %s1320 = scalar_lea.vmem %s257, 48
        %v1321 = vld [vmem:[%s1320] sm:$0xf]
        %v1322 = vld [vmem:[%s1320 + $0x4] sm:$0xf]
        %v1323 = vld [vmem:[%s1320 + $0x8] sm:$0xf]
        %v1324 = vld [vmem:[%s1320 + $0xc] sm:$0xf]
        %v1325 = vld [vmem:[%s1320 + $0x10] sm:$0xf]
        %v1326 = vld [vmem:[%s1320 + $0x14] sm:$0xf]
        %v1327 = vunpack.c.l.b16 %v1211
        %v1328 = vunpack.c.l.b16 %v1214
        %v1329 = vunpack.c.l.b16 %v1218
        %v1330 = vunpack.c.l.b16 %v1221
        %v1331 = vunpack.c.l.b16 %v1225
        %v1332 = vunpack.c.l.b16 %v1228
        %v1333 = vunpack.c.l.b16 %v1232
        %v1334 = vunpack.c.l.b16 %v1235
        %v1335 = vunpack.c.l.b16 %v1239
        %v1336 = vunpack.c.l.b16 %v1242
        %v1337 = vunpack.c.l.b16 %v1246
        %v1338 = vunpack.c.l.b16 %v1249
        %v1339 = vunpack.c.l.b16 %v1253
        %v1340 = vunpack.c.l.b16 %v1256
        %v1341 = vunpack.c.l.b16 %v1260
        %v1342 = vunpack.c.l.b16 %v1263
        %v1343 = vunpack.c.l.b16 %v1267
        %v1344 = vunpack.c.l.b16 %v1270
        %v1345 = vunpack.c.l.b16 %v1274
        %v1346 = vunpack.c.l.b16 %v1277
        %v1347 = vunpack.c.l.b16 %v1281
        %v1348 = vunpack.c.l.b16 %v1284
        %v1349 = vunpack.c.l.b16 %v1288
        %v1350 = vunpack.c.l.b16 %v1291
        %v1351 = vunpack.c.l.b16 %v1295
        %v1352 = vunpack.c.l.b16 %v1298
        %v1353 = vunpack.c.l.b16 %v1302
        %v1354 = vunpack.c.l.b16 %v1305
        %v1355 = vunpack.c.l.b16 %v1309
        %v1356 = vunpack.c.l.b16 %v1312
        %v1357 = vunpack.c.l.b16 %v1316
        %v1358 = vunpack.c.l.b16 %v1319
        %v1359 = vpack.c.b16 %v1328, %v1327
        %v1360 = vpack.c.b16 %v1330, %v1329
        %v1361 = vpack.c.b16 %v1332, %v1331
        %v1362 = vpack.c.b16 %v1334, %v1333
        %v1363 = vpack.c.b16 %v1336, %v1335
        %v1364 = vpack.c.b16 %v1338, %v1337
        %v1365 = vpack.c.b16 %v1340, %v1339
        %v1366 = vpack.c.b16 %v1342, %v1341
        %v1367 = vpack.c.b16 %v1344, %v1343
        %v1368 = vpack.c.b16 %v1346, %v1345
        %v1369 = vpack.c.b16 %v1348, %v1347
        %v1370 = vpack.c.b16 %v1350, %v1349
        %v1371 = vpack.c.b16 %v1352, %v1351
        %v1372 = vpack.c.b16 %v1354, %v1353
        %v1373 = vpack.c.b16 %v1356, %v1355
        %v1374 = vpack.c.b16 %v1358, %v1357
        %v1381 = vunpack.c.l.b16 %v1321
        %v1382 = vunpack.c.l.b16 %v1322
        %v1383 = vunpack.c.l.b16 %v1323
        %v1384 = vunpack.c.l.b16 %v1324
        %v1385 = vunpack.c.l.b16 %v1325
        %v1386 = vunpack.c.l.b16 %v1326
        %v1387 = vpack.c.b16 %v1382, %v1381
        %v1388 = vpack.c.b16 %v1384, %v1383
        %v1389 = vpack.c.b16 %v1386, %v1385
        %v1394 = vsel %vm784, %v1359, 0
        %v1397 = vsel %vm784, %v1360, 0
        %v1400 = vsel %vm784, %v1361, 0
        %v1403 = vsel %vm784, %v1362, 0
        %v1406 = vsel %vm784, %v1363, 0
        %v1409 = vsel %vm784, %v1364, 0
        %v1412 = vsel %vm784, %v1365, 0
        %v1415 = vsel %vm784, %v1366, 0
        %v1418 = vsel %vm784, %v1367, 0
        %v1421 = vsel %vm784, %v1368, 0
        %v1424 = vsel %vm784, %v1369, 0
        %v1427 = vsel %vm784, %v1370, 0
        %v1430 = vsel %vm784, %v1371, 0
        %v1433 = vsel %vm784, %v1372, 0
        %v1436 = vsel %vm784, %v1373, 0
        %v1439 = vsel %vm784, %v1374, 0
        %1441 = vmatpush.bf16.msra.mxu0 0
        %1442 = vmatpush.bf16.msra.mxu0 0
        %1443 = vmatpush.bf16.msra.mxu0 0
        %1444 = vmatpush.bf16.msra.mxu0 0
        %1445 = vmatpush.bf16.msra.mxu0 0
        %1446 = vmatpush.bf16.msra.mxu0 %v1389
        %1447 = vmatpush.bf16.msra.mxu0 %v1388
        %1448 = vmatpush.bf16.msra.mxu0 %v1387
        %1449 = vmatmul.bf16.gmra.mxu0 %v1394
        %v1450 = vpop.f32.mrf.mxu0
        %v1451 = vadd.f32 0.0, %v1450
        %v1452 = vpop.f32.mrf.mxu0
        %v1453 = vadd.f32 0.0, %v1452
        %1454 = vmatmul.bf16.gmra.mxu0 %v1397
        %v1455 = vpop.f32.mrf.mxu0
        %v1456 = vadd.f32 0.0, %v1455
        %v1457 = vpop.f32.mrf.mxu0
        %v1458 = vadd.f32 0.0, %v1457
        %1459 = vmatmul.bf16.gmra.mxu0 %v1400
        %v1460 = vpop.f32.mrf.mxu0
        %v1461 = vadd.f32 0.0, %v1460
        %v1462 = vpop.f32.mrf.mxu0
        %v1463 = vadd.f32 0.0, %v1462
        %1464 = vmatmul.bf16.gmra.mxu0 %v1403
        %v1465 = vpop.f32.mrf.mxu0
        %v1466 = vadd.f32 0.0, %v1465
        %v1467 = vpop.f32.mrf.mxu0
        %v1468 = vadd.f32 0.0, %v1467
        %1469 = vmatmul.bf16.gmra.mxu0 %v1406
        %v1470 = vpop.f32.mrf.mxu0
        %v1471 = vadd.f32 0.0, %v1470
        %v1472 = vpop.f32.mrf.mxu0
        %v1473 = vadd.f32 0.0, %v1472
        %1474 = vmatmul.bf16.gmra.mxu0 %v1409
        %v1475 = vpop.f32.mrf.mxu0
        %v1476 = vadd.f32 0.0, %v1475
        %v1477 = vpop.f32.mrf.mxu0
        %v1478 = vadd.f32 0.0, %v1477
        %1479 = vmatmul.bf16.gmra.mxu0 %v1412
        %v1480 = vpop.f32.mrf.mxu0
        %v1481 = vadd.f32 0.0, %v1480
        %v1482 = vpop.f32.mrf.mxu0
        %v1483 = vadd.f32 0.0, %v1482
        %1484 = vmatmul.bf16.gmra.mxu0 %v1415
        %v1485 = vpop.f32.mrf.mxu0
        %v1486 = vadd.f32 0.0, %v1485
        %v1487 = vpop.f32.mrf.mxu0
        %v1488 = vadd.f32 0.0, %v1487
        %1489 = vmatmul.bf16.gmra.mxu0 %v1418
        %v1490 = vpop.f32.mrf.mxu0
        %v1491 = vadd.f32 0.0, %v1490
        %v1492 = vpop.f32.mrf.mxu0
        %v1493 = vadd.f32 0.0, %v1492
        %1494 = vmatmul.bf16.gmra.mxu0 %v1421
        %v1495 = vpop.f32.mrf.mxu0
        %v1496 = vadd.f32 0.0, %v1495
        %v1497 = vpop.f32.mrf.mxu0
        %v1498 = vadd.f32 0.0, %v1497
        %1499 = vmatmul.bf16.gmra.mxu0 %v1424
        %v1500 = vpop.f32.mrf.mxu0
        %v1501 = vadd.f32 0.0, %v1500
        %v1502 = vpop.f32.mrf.mxu0
        %v1503 = vadd.f32 0.0, %v1502
        %1504 = vmatmul.bf16.gmra.mxu0 %v1427
        %v1505 = vpop.f32.mrf.mxu0
        %v1506 = vadd.f32 0.0, %v1505
        %v1507 = vpop.f32.mrf.mxu0
        %v1508 = vadd.f32 0.0, %v1507
        %1509 = vmatmul.bf16.gmra.mxu0 %v1430
        %v1510 = vpop.f32.mrf.mxu0
        %v1511 = vadd.f32 0.0, %v1510
        %v1512 = vpop.f32.mrf.mxu0
        %v1513 = vadd.f32 0.0, %v1512
        %1514 = vmatmul.bf16.gmra.mxu0 %v1433
        %v1515 = vpop.f32.mrf.mxu0
        %v1516 = vadd.f32 0.0, %v1515
        %v1517 = vpop.f32.mrf.mxu0
        %v1518 = vadd.f32 0.0, %v1517
        %1519 = vmatmul.bf16.gmra.mxu0 %v1436
        %v1520 = vpop.f32.mrf.mxu0
        %v1521 = vadd.f32 0.0, %v1520
        %v1522 = vpop.f32.mrf.mxu0
        %v1523 = vadd.f32 0.0, %v1522
        %1524 = vmatmul.bf16.gmra.mxu0 %v1439
        %v1525 = vpop.f32.mrf.mxu0
        %v1526 = vadd.f32 0.0, %v1525
        %v1527 = vpop.f32.mrf.mxu0
        %v1528 = vadd.f32 0.0, %v1527
        %1529 = vdwg.mxu0
        %v1530 = vadd.f32 %v1078, %v1451
        %v1531 = vadd.f32 %v1080, %v1453
        %v1532 = vadd.f32 %v1083, %v1456
        %v1533 = vadd.f32 %v1085, %v1458
        %v1534 = vadd.f32 %v1088, %v1461
        %v1535 = vadd.f32 %v1090, %v1463
        %v1536 = vadd.f32 %v1093, %v1466
        %v1537 = vadd.f32 %v1095, %v1468
        %v1538 = vadd.f32 %v1098, %v1471
        %v1539 = vadd.f32 %v1100, %v1473
        %v1540 = vadd.f32 %v1103, %v1476
        %v1541 = vadd.f32 %v1105, %v1478
        %v1542 = vadd.f32 %v1108, %v1481
        %v1543 = vadd.f32 %v1110, %v1483
        %v1544 = vadd.f32 %v1113, %v1486
        %v1545 = vadd.f32 %v1115, %v1488
        %v1546 = vadd.f32 %v1118, %v1491
        %v1547 = vadd.f32 %v1120, %v1493
        %v1548 = vadd.f32 %v1123, %v1496
        %v1549 = vadd.f32 %v1125, %v1498
        %v1550 = vadd.f32 %v1128, %v1501
        %v1551 = vadd.f32 %v1130, %v1503
        %v1552 = vadd.f32 %v1133, %v1506
        %v1553 = vadd.f32 %v1135, %v1508
        %v1554 = vadd.f32 %v1138, %v1511
        %v1555 = vadd.f32 %v1140, %v1513
        %v1556 = vadd.f32 %v1143, %v1516
        %v1557 = vadd.f32 %v1145, %v1518
        %v1558 = vadd.f32 %v1148, %v1521
        %v1559 = vadd.f32 %v1150, %v1523
        %v1560 = vadd.f32 %v1153, %v1526
        %v1561 = vadd.f32 %v1155, %v1528
        %s1562 = sadd.s32 %s266, 1
        %s1563 = smul.u32 %s1562, 3
        %s1564 = smul.addr %s1563, 4
        %s1565 = scalar_lea.vmem %s253, %s1564
        %v1566 = vld [vmem:[%s1565] sm:$0xf]
        %v1567 = vld [vmem:[%s1565 + $0x4] sm:$0xf]
        %v1568 = vld [vmem:[%s1565 + $0xc] sm:$0xf]
        %v1569 = vld [vmem:[%s1565 + $0x10] sm:$0xf]
        %v1570 = vld [vmem:[%s1565 + $0x18] sm:$0xf]
        %v1571 = vld [vmem:[%s1565 + $0x1c] sm:$0xf]
        %v1572 = vld [vmem:[%s1565 + $0x24] sm:$0xf]
        %v1573 = vld [vmem:[%s1565 + $0x28] sm:$0xf]
        %v1574 = vld [vmem:[%s1565 + $0x30] sm:$0xf]
        %v1575 = vld [vmem:[%s1565 + $0x34] sm:$0xf]
        %v1576 = vld [vmem:[%s1565 + $0x3c] sm:$0xf]
        %v1577 = vld [vmem:[%s1565 + $0x40] sm:$0xf]
        %v1578 = vld [vmem:[%s1565 + $0x48] sm:$0xf]
        %v1579 = vld [vmem:[%s1565 + $0x4c] sm:$0xf]
        %v1580 = vld [vmem:[%s1565 + $0x54] sm:$0xf]
        %v1581 = vld [vmem:[%s1565 + $0x58] sm:$0xf]
        %v1582 = vld [vmem:[%s1565 + $0x60] sm:$0xf]
        %v1583 = vld [vmem:[%s1565 + $0x64] sm:$0xf]
        %v1584 = vld [vmem:[%s1565 + $0x6c] sm:$0xf]
        %v1585 = vld [vmem:[%s1565 + $0x70] sm:$0xf]
        %v1586 = vld [vmem:[%s1565 + $0x78] sm:$0xf]
        %v1587 = vld [vmem:[%s1565 + $0x7c] sm:$0xf]
        %v1588 = vld [vmem:[%s1565 + $0x84] sm:$0xf]
        %v1589 = vld [vmem:[%s1565 + $0x88] sm:$0xf]
        %v1590 = vld [vmem:[%s1565 + $0x90] sm:$0xf]
        %v1591 = vld [vmem:[%s1565 + $0x94] sm:$0xf]
        %v1592 = vld [vmem:[%s1565 + $0x9c] sm:$0xf]
        %v1593 = vld [vmem:[%s1565 + $0xa0] sm:$0xf]
        %v1594 = vld [vmem:[%s1565 + $0xa8] sm:$0xf]
        %v1595 = vld [vmem:[%s1565 + $0xac] sm:$0xf]
        %v1596 = vld [vmem:[%s1565 + $0xb4] sm:$0xf]
        %v1597 = vld [vmem:[%s1565 + $0xb8] sm:$0xf]
        %s1598 = scalar_lea.vmem %s257, 72
        %v1599 = vld [vmem:[%s1598] sm:$0xf]
        %v1600 = vld [vmem:[%s1598 + $0x4] sm:$0xf]
        %v1601 = vld [vmem:[%s1598 + $0x8] sm:$0xf]
        %v1602 = vld [vmem:[%s1598 + $0xc] sm:$0xf]
        %v1603 = vld [vmem:[%s1598 + $0x10] sm:$0xf]
        %v1604 = vld [vmem:[%s1598 + $0x14] sm:$0xf]
        %v1637 = vunpack.c.l.b16 %v1566
        %v1638 = vunpack.c.l.b16 %v1567
        %v1639 = vunpack.c.l.b16 %v1568
        %v1640 = vunpack.c.l.b16 %v1569
        %v1641 = vunpack.c.l.b16 %v1570
        %v1642 = vunpack.c.l.b16 %v1571
        %v1643 = vunpack.c.l.b16 %v1572
        %v1644 = vunpack.c.l.b16 %v1573
        %v1645 = vunpack.c.l.b16 %v1574
        %v1646 = vunpack.c.l.b16 %v1575
        %v1647 = vunpack.c.l.b16 %v1576
        %v1648 = vunpack.c.l.b16 %v1577
        %v1649 = vunpack.c.l.b16 %v1578
        %v1650 = vunpack.c.l.b16 %v1579
        %v1651 = vunpack.c.l.b16 %v1580
        %v1652 = vunpack.c.l.b16 %v1581
        %v1653 = vunpack.c.l.b16 %v1582
        %v1654 = vunpack.c.l.b16 %v1583
        %v1655 = vunpack.c.l.b16 %v1584
        %v1656 = vunpack.c.l.b16 %v1585
        %v1657 = vunpack.c.l.b16 %v1586
        %v1658 = vunpack.c.l.b16 %v1587
        %v1659 = vunpack.c.l.b16 %v1588
        %v1660 = vunpack.c.l.b16 %v1589
        %v1661 = vunpack.c.l.b16 %v1590
        %v1662 = vunpack.c.l.b16 %v1591
        %v1663 = vunpack.c.l.b16 %v1592
        %v1664 = vunpack.c.l.b16 %v1593
        %v1665 = vunpack.c.l.b16 %v1594
        %v1666 = vunpack.c.l.b16 %v1595
        %v1667 = vunpack.c.l.b16 %v1596
        %v1668 = vunpack.c.l.b16 %v1597
        %v1669 = vpack.c.b16 %v1638, %v1637
        %v1670 = vpack.c.b16 %v1640, %v1639
        %v1671 = vpack.c.b16 %v1642, %v1641
        %v1672 = vpack.c.b16 %v1644, %v1643
        %v1673 = vpack.c.b16 %v1646, %v1645
        %v1674 = vpack.c.b16 %v1648, %v1647
        %v1675 = vpack.c.b16 %v1650, %v1649
        %v1676 = vpack.c.b16 %v1652, %v1651
        %v1677 = vpack.c.b16 %v1654, %v1653
        %v1678 = vpack.c.b16 %v1656, %v1655
        %v1679 = vpack.c.b16 %v1658, %v1657
        %v1680 = vpack.c.b16 %v1660, %v1659
        %v1681 = vpack.c.b16 %v1662, %v1661
        %v1682 = vpack.c.b16 %v1664, %v1663
        %v1683 = vpack.c.b16 %v1666, %v1665
        %v1684 = vpack.c.b16 %v1668, %v1667
        %v1691 = vunpack.c.l.b16 %v1599
        %v1692 = vunpack.c.l.b16 %v1600
        %v1693 = vunpack.c.l.b16 %v1601
        %v1694 = vunpack.c.l.b16 %v1602
        %v1695 = vunpack.c.l.b16 %v1603
        %v1696 = vunpack.c.l.b16 %v1604
        %v1697 = vpack.c.b16 %v1692, %v1691
        %v1698 = vpack.c.b16 %v1694, %v1693
        %v1699 = vpack.c.b16 %v1696, %v1695
        %v1704 = vsel %vm784, %v1669, 0
        %v1707 = vsel %vm784, %v1670, 0
        %v1710 = vsel %vm784, %v1671, 0
        %v1713 = vsel %vm784, %v1672, 0
        %v1716 = vsel %vm784, %v1673, 0
        %v1719 = vsel %vm784, %v1674, 0
        %v1722 = vsel %vm784, %v1675, 0
        %v1725 = vsel %vm784, %v1676, 0
        %v1728 = vsel %vm784, %v1677, 0
        %v1731 = vsel %vm784, %v1678, 0
        %v1734 = vsel %vm784, %v1679, 0
        %v1737 = vsel %vm784, %v1680, 0
        %v1740 = vsel %vm784, %v1681, 0
        %v1743 = vsel %vm784, %v1682, 0
        %v1746 = vsel %vm784, %v1683, 0
        %v1749 = vsel %vm784, %v1684, 0
        %1751 = vmatpush.bf16.msra.mxu0 0
        %1752 = vmatpush.bf16.msra.mxu0 0
        %1753 = vmatpush.bf16.msra.mxu0 0
        %1754 = vmatpush.bf16.msra.mxu0 0
        %1755 = vmatpush.bf16.msra.mxu0 0
        %1756 = vmatpush.bf16.msra.mxu0 %v1699
        %1757 = vmatpush.bf16.msra.mxu0 %v1698
        %1758 = vmatpush.bf16.msra.mxu0 %v1697
        %1759 = vmatmul.bf16.gmra.mxu0 %v1704
        %v1760 = vpop.f32.mrf.mxu0
        %v1761 = vadd.f32 0.0, %v1760
        %v1762 = vpop.f32.mrf.mxu0
        %v1763 = vadd.f32 0.0, %v1762
        %1764 = vmatmul.bf16.gmra.mxu0 %v1707
        %v1765 = vpop.f32.mrf.mxu0
        %v1766 = vadd.f32 0.0, %v1765
        %v1767 = vpop.f32.mrf.mxu0
        %v1768 = vadd.f32 0.0, %v1767
        %1769 = vmatmul.bf16.gmra.mxu0 %v1710
        %v1770 = vpop.f32.mrf.mxu0
        %v1771 = vadd.f32 0.0, %v1770
        %v1772 = vpop.f32.mrf.mxu0
        %v1773 = vadd.f32 0.0, %v1772
        %1774 = vmatmul.bf16.gmra.mxu0 %v1713
        %v1775 = vpop.f32.mrf.mxu0
        %v1776 = vadd.f32 0.0, %v1775
        %v1777 = vpop.f32.mrf.mxu0
        %v1778 = vadd.f32 0.0, %v1777
        %1779 = vmatmul.bf16.gmra.mxu0 %v1716
        %v1780 = vpop.f32.mrf.mxu0
        %v1781 = vadd.f32 0.0, %v1780
        %v1782 = vpop.f32.mrf.mxu0
        %v1783 = vadd.f32 0.0, %v1782
        %1784 = vmatmul.bf16.gmra.mxu0 %v1719
        %v1785 = vpop.f32.mrf.mxu0
        %v1786 = vadd.f32 0.0, %v1785
        %v1787 = vpop.f32.mrf.mxu0
        %v1788 = vadd.f32 0.0, %v1787
        %1789 = vmatmul.bf16.gmra.mxu0 %v1722
        %v1790 = vpop.f32.mrf.mxu0
        %v1791 = vadd.f32 0.0, %v1790
        %v1792 = vpop.f32.mrf.mxu0
        %v1793 = vadd.f32 0.0, %v1792
        %1794 = vmatmul.bf16.gmra.mxu0 %v1725
        %v1795 = vpop.f32.mrf.mxu0
        %v1796 = vadd.f32 0.0, %v1795
        %v1797 = vpop.f32.mrf.mxu0
        %v1798 = vadd.f32 0.0, %v1797
        %1799 = vmatmul.bf16.gmra.mxu0 %v1728
        %v1800 = vpop.f32.mrf.mxu0
        %v1801 = vadd.f32 0.0, %v1800
        %v1802 = vpop.f32.mrf.mxu0
        %v1803 = vadd.f32 0.0, %v1802
        %1804 = vmatmul.bf16.gmra.mxu0 %v1731
        %v1805 = vpop.f32.mrf.mxu0
        %v1806 = vadd.f32 0.0, %v1805
        %v1807 = vpop.f32.mrf.mxu0
        %v1808 = vadd.f32 0.0, %v1807
        %1809 = vmatmul.bf16.gmra.mxu0 %v1734
        %v1810 = vpop.f32.mrf.mxu0
        %v1811 = vadd.f32 0.0, %v1810
        %v1812 = vpop.f32.mrf.mxu0
        %v1813 = vadd.f32 0.0, %v1812
        %1814 = vmatmul.bf16.gmra.mxu0 %v1737
        %v1815 = vpop.f32.mrf.mxu0
        %v1816 = vadd.f32 0.0, %v1815
        %v1817 = vpop.f32.mrf.mxu0
        %v1818 = vadd.f32 0.0, %v1817
        %1819 = vmatmul.bf16.gmra.mxu0 %v1740
        %v1820 = vpop.f32.mrf.mxu0
        %v1821 = vadd.f32 0.0, %v1820
        %v1822 = vpop.f32.mrf.mxu0
        %v1823 = vadd.f32 0.0, %v1822
        %1824 = vmatmul.bf16.gmra.mxu0 %v1743
        %v1825 = vpop.f32.mrf.mxu0
        %v1826 = vadd.f32 0.0, %v1825
        %v1827 = vpop.f32.mrf.mxu0
        %v1828 = vadd.f32 0.0, %v1827
        %1829 = vmatmul.bf16.gmra.mxu0 %v1746
        %v1830 = vpop.f32.mrf.mxu0
        %v1831 = vadd.f32 0.0, %v1830
        %v1832 = vpop.f32.mrf.mxu0
        %v1833 = vadd.f32 0.0, %v1832
        %1834 = vmatmul.bf16.gmra.mxu0 %v1749
        %v1835 = vpop.f32.mrf.mxu0
        %v1836 = vadd.f32 0.0, %v1835
        %v1837 = vpop.f32.mrf.mxu0
        %v1838 = vadd.f32 0.0, %v1837
        %1839 = vdwg.mxu0
        %v1840 = vadd.f32 %v1530, %v1761
        %v1841 = vadd.f32 %v1531, %v1763
        %v1842 = vadd.f32 %v1532, %v1766
        %v1843 = vadd.f32 %v1533, %v1768
        %v1844 = vadd.f32 %v1534, %v1771
        %v1845 = vadd.f32 %v1535, %v1773
        %v1846 = vadd.f32 %v1536, %v1776
        %v1847 = vadd.f32 %v1537, %v1778
        %v1848 = vadd.f32 %v1538, %v1781
        %v1849 = vadd.f32 %v1539, %v1783
        %v1850 = vadd.f32 %v1540, %v1786
        %v1851 = vadd.f32 %v1541, %v1788
        %v1852 = vadd.f32 %v1542, %v1791
        %v1853 = vadd.f32 %v1543, %v1793
        %v1854 = vadd.f32 %v1544, %v1796
        %v1855 = vadd.f32 %v1545, %v1798
        %v1856 = vadd.f32 %v1546, %v1801
        %v1857 = vadd.f32 %v1547, %v1803
        %v1858 = vadd.f32 %v1548, %v1806
        %v1859 = vadd.f32 %v1549, %v1808
        %v1860 = vadd.f32 %v1550, %v1811
        %v1861 = vadd.f32 %v1551, %v1813
        %v1862 = vadd.f32 %v1552, %v1816
        %v1863 = vadd.f32 %v1553, %v1818
        %v1864 = vadd.f32 %v1554, %v1821
        %v1865 = vadd.f32 %v1555, %v1823
        %v1866 = vadd.f32 %v1556, %v1826
        %v1867 = vadd.f32 %v1557, %v1828
        %v1868 = vadd.f32 %v1558, %v1831
        %v1869 = vadd.f32 %v1559, %v1833
        %v1870 = vadd.f32 %v1560, %v1836
        %v1871 = vadd.f32 %v1561, %v1838
        %v1872 = vld [vmem:[%s1565] sm:$0xf]
        %v1873 = vld [vmem:[%s1565 + $0x4] sm:$0xf]
        %v1874 = vld [vmem:[%s1565 + $0x8] sm:$0x1]
        %v1875 = vld [vmem:[%s1565 + $0xc] sm:$0xf]
        %v1876 = vld [vmem:[%s1565 + $0x10] sm:$0xf]
        %v1877 = vld [vmem:[%s1565 + $0x14] sm:$0x1]
        %v1878 = vld [vmem:[%s1565 + $0x18] sm:$0xf]
        %v1879 = vld [vmem:[%s1565 + $0x1c] sm:$0xf]
        %v1880 = vld [vmem:[%s1565 + $0x20] sm:$0x1]
        %v1881 = vld [vmem:[%s1565 + $0x24] sm:$0xf]
        %v1882 = vld [vmem:[%s1565 + $0x28] sm:$0xf]
        %v1883 = vld [vmem:[%s1565 + $0x2c] sm:$0x1]
        %v1884 = vld [vmem:[%s1565 + $0x30] sm:$0xf]
        %v1885 = vld [vmem:[%s1565 + $0x34] sm:$0xf]
        %v1886 = vld [vmem:[%s1565 + $0x38] sm:$0x1]
        %v1887 = vld [vmem:[%s1565 + $0x3c] sm:$0xf]
        %v1888 = vld [vmem:[%s1565 + $0x40] sm:$0xf]
        %v1889 = vld [vmem:[%s1565 + $0x44] sm:$0x1]
        %v1890 = vld [vmem:[%s1565 + $0x48] sm:$0xf]
        %v1891 = vld [vmem:[%s1565 + $0x4c] sm:$0xf]
        %v1892 = vld [vmem:[%s1565 + $0x50] sm:$0x1]
        %v1893 = vld [vmem:[%s1565 + $0x54] sm:$0xf]
        %v1894 = vld [vmem:[%s1565 + $0x58] sm:$0xf]
        %v1895 = vld [vmem:[%s1565 + $0x5c] sm:$0x1]
        %v1896 = vld [vmem:[%s1565 + $0x60] sm:$0xf]
        %v1897 = vld [vmem:[%s1565 + $0x64] sm:$0xf]
        %v1898 = vld [vmem:[%s1565 + $0x68] sm:$0x1]
        %v1899 = vld [vmem:[%s1565 + $0x6c] sm:$0xf]
        %v1900 = vld [vmem:[%s1565 + $0x70] sm:$0xf]
        %v1901 = vld [vmem:[%s1565 + $0x74] sm:$0x1]
        %v1902 = vld [vmem:[%s1565 + $0x78] sm:$0xf]
        %v1903 = vld [vmem:[%s1565 + $0x7c] sm:$0xf]
        %v1904 = vld [vmem:[%s1565 + $0x80] sm:$0x1]
        %v1905 = vld [vmem:[%s1565 + $0x84] sm:$0xf]
        %v1906 = vld [vmem:[%s1565 + $0x88] sm:$0xf]
        %v1907 = vld [vmem:[%s1565 + $0x8c] sm:$0x1]
        %v1908 = vld [vmem:[%s1565 + $0x90] sm:$0xf]
        %v1909 = vld [vmem:[%s1565 + $0x94] sm:$0xf]
        %v1910 = vld [vmem:[%s1565 + $0x98] sm:$0x1]
        %v1911 = vld [vmem:[%s1565 + $0x9c] sm:$0xf]
        %v1912 = vld [vmem:[%s1565 + $0xa0] sm:$0xf]
        %v1913 = vld [vmem:[%s1565 + $0xa4] sm:$0x1]
        %v1914 = vld [vmem:[%s1565 + $0xa8] sm:$0xf]
        %v1915 = vld [vmem:[%s1565 + $0xac] sm:$0xf]
        %v1916 = vld [vmem:[%s1565 + $0xb0] sm:$0x1]
        %v1917 = vld [vmem:[%s1565 + $0xb4] sm:$0xf]
        %v1918 = vld [vmem:[%s1565 + $0xb8] sm:$0xf]
        %v1919 = vld [vmem:[%s1565 + $0xbc] sm:$0x1]
        %v1921 = vshrl.u32 %v1872, 16
        %v1923 = vrot.slane %v1921, 4
        %v1924 = vshll.u32 %v1872, 16
        %v1926 = vrot.slane %v1924, 5
        %v1927 = vor.u32 %v1923, %v1926
        %v1928 = vrot.slane %v1927, 4
        %v1930 = vshll.u32 %v1873, 16
        %v1932 = vrot.slane %v1930, 5
        %v1933 = vsel %vm326, %v1928, %v1932
        %v1934 = vshrl.u32 %v1873, 16
        %v1936 = vrot.slane %v1934, 4
        %v1937 = vor.u32 %v1936, %v1932
        %v1938 = vrot.slane %v1937, 4
        %v1940 = vshll.u32 %v1874, 16
        %v1942 = vrot.slane %v1940, 5
        %v1943 = vsel %vm326, %v1938, %v1942
        %v1945 = vshrl.u32 %v1875, 16
        %v1947 = vrot.slane %v1945, 4
        %v1948 = vshll.u32 %v1875, 16
        %v1950 = vrot.slane %v1948, 5
        %v1951 = vor.u32 %v1947, %v1950
        %v1952 = vrot.slane %v1951, 4
        %v1954 = vshll.u32 %v1876, 16
        %v1956 = vrot.slane %v1954, 5
        %v1957 = vsel %vm326, %v1952, %v1956
        %v1958 = vshrl.u32 %v1876, 16
        %v1960 = vrot.slane %v1958, 4
        %v1961 = vor.u32 %v1960, %v1956
        %v1962 = vrot.slane %v1961, 4
        %v1964 = vshll.u32 %v1877, 16
        %v1966 = vrot.slane %v1964, 5
        %v1967 = vsel %vm326, %v1962, %v1966
        %v1969 = vshrl.u32 %v1878, 16
        %v1971 = vrot.slane %v1969, 4
        %v1972 = vshll.u32 %v1878, 16
        %v1974 = vrot.slane %v1972, 5
        %v1975 = vor.u32 %v1971, %v1974
        %v1976 = vrot.slane %v1975, 4
        %v1978 = vshll.u32 %v1879, 16
        %v1980 = vrot.slane %v1978, 5
        %v1981 = vsel %vm326, %v1976, %v1980
        %v1982 = vshrl.u32 %v1879, 16
        %v1984 = vrot.slane %v1982, 4
        %v1985 = vor.u32 %v1984, %v1980
        %v1986 = vrot.slane %v1985, 4
        %v1988 = vshll.u32 %v1880, 16
        %v1990 = vrot.slane %v1988, 5
        %v1991 = vsel %vm326, %v1986, %v1990
        %v1993 = vshrl.u32 %v1881, 16
        %v1995 = vrot.slane %v1993, 4
        %v1996 = vshll.u32 %v1881, 16
        %v1998 = vrot.slane %v1996, 5
        %v1999 = vor.u32 %v1995, %v1998
        %v2000 = vrot.slane %v1999, 4
        %v2002 = vshll.u32 %v1882, 16
        %v2004 = vrot.slane %v2002, 5
        %v2005 = vsel %vm326, %v2000, %v2004
        %v2006 = vshrl.u32 %v1882, 16
        %v2008 = vrot.slane %v2006, 4
        %v2009 = vor.u32 %v2008, %v2004
        %v2010 = vrot.slane %v2009, 4
        %v2012 = vshll.u32 %v1883, 16
        %v2014 = vrot.slane %v2012, 5
        %v2015 = vsel %vm326, %v2010, %v2014
        %v2017 = vshrl.u32 %v1884, 16
        %v2019 = vrot.slane %v2017, 4
        %v2020 = vshll.u32 %v1884, 16
        %v2022 = vrot.slane %v2020, 5
        %v2023 = vor.u32 %v2019, %v2022
        %v2024 = vrot.slane %v2023, 4
        %v2026 = vshll.u32 %v1885, 16
        %v2028 = vrot.slane %v2026, 5
        %v2029 = vsel %vm326, %v2024, %v2028
        %v2030 = vshrl.u32 %v1885, 16
        %v2032 = vrot.slane %v2030, 4
        %v2033 = vor.u32 %v2032, %v2028
        %v2034 = vrot.slane %v2033, 4
        %v2036 = vshll.u32 %v1886, 16
        %v2038 = vrot.slane %v2036, 5
        %v2039 = vsel %vm326, %v2034, %v2038
        %v2041 = vshrl.u32 %v1887, 16
        %v2043 = vrot.slane %v2041, 4
        %v2044 = vshll.u32 %v1887, 16
        %v2046 = vrot.slane %v2044, 5
        %v2047 = vor.u32 %v2043, %v2046
        %v2048 = vrot.slane %v2047, 4
        %v2050 = vshll.u32 %v1888, 16
        %v2052 = vrot.slane %v2050, 5
        %v2053 = vsel %vm326, %v2048, %v2052
        %v2054 = vshrl.u32 %v1888, 16
        %v2056 = vrot.slane %v2054, 4
        %v2057 = vor.u32 %v2056, %v2052
        %v2058 = vrot.slane %v2057, 4
        %v2060 = vshll.u32 %v1889, 16
        %v2062 = vrot.slane %v2060, 5
        %v2063 = vsel %vm326, %v2058, %v2062
        %v2065 = vshrl.u32 %v1890, 16
        %v2067 = vrot.slane %v2065, 4
        %v2068 = vshll.u32 %v1890, 16
        %v2070 = vrot.slane %v2068, 5
        %v2071 = vor.u32 %v2067, %v2070
        %v2072 = vrot.slane %v2071, 4
        %v2074 = vshll.u32 %v1891, 16
        %v2076 = vrot.slane %v2074, 5
        %v2077 = vsel %vm326, %v2072, %v2076
        %v2078 = vshrl.u32 %v1891, 16
        %v2080 = vrot.slane %v2078, 4
        %v2081 = vor.u32 %v2080, %v2076
        %v2082 = vrot.slane %v2081, 4
        %v2084 = vshll.u32 %v1892, 16
        %v2086 = vrot.slane %v2084, 5
        %v2087 = vsel %vm326, %v2082, %v2086
        %v2089 = vshrl.u32 %v1893, 16
        %v2091 = vrot.slane %v2089, 4
        %v2092 = vshll.u32 %v1893, 16
        %v2094 = vrot.slane %v2092, 5
        %v2095 = vor.u32 %v2091, %v2094
        %v2096 = vrot.slane %v2095, 4
        %v2098 = vshll.u32 %v1894, 16
        %v2100 = vrot.slane %v2098, 5
        %v2101 = vsel %vm326, %v2096, %v2100
        %v2102 = vshrl.u32 %v1894, 16
        %v2104 = vrot.slane %v2102, 4
        %v2105 = vor.u32 %v2104, %v2100
        %v2106 = vrot.slane %v2105, 4
        %v2108 = vshll.u32 %v1895, 16
        %v2110 = vrot.slane %v2108, 5
        %v2111 = vsel %vm326, %v2106, %v2110
        %v2113 = vshrl.u32 %v1896, 16
        %v2115 = vrot.slane %v2113, 4
        %v2116 = vshll.u32 %v1896, 16
        %v2118 = vrot.slane %v2116, 5
        %v2119 = vor.u32 %v2115, %v2118
        %v2120 = vrot.slane %v2119, 4
        %v2122 = vshll.u32 %v1897, 16
        %v2124 = vrot.slane %v2122, 5
        %v2125 = vsel %vm326, %v2120, %v2124
        %v2126 = vshrl.u32 %v1897, 16
        %v2128 = vrot.slane %v2126, 4
        %v2129 = vor.u32 %v2128, %v2124
        %v2130 = vrot.slane %v2129, 4
        %v2132 = vshll.u32 %v1898, 16
        %v2134 = vrot.slane %v2132, 5
        %v2135 = vsel %vm326, %v2130, %v2134
        %v2137 = vshrl.u32 %v1899, 16
        %v2139 = vrot.slane %v2137, 4
        %v2140 = vshll.u32 %v1899, 16
        %v2142 = vrot.slane %v2140, 5
        %v2143 = vor.u32 %v2139, %v2142
        %v2144 = vrot.slane %v2143, 4
        %v2146 = vshll.u32 %v1900, 16
        %v2148 = vrot.slane %v2146, 5
        %v2149 = vsel %vm326, %v2144, %v2148
        %v2150 = vshrl.u32 %v1900, 16
        %v2152 = vrot.slane %v2150, 4
        %v2153 = vor.u32 %v2152, %v2148
        %v2154 = vrot.slane %v2153, 4
        %v2156 = vshll.u32 %v1901, 16
        %v2158 = vrot.slane %v2156, 5
        %v2159 = vsel %vm326, %v2154, %v2158
        %v2161 = vshrl.u32 %v1902, 16
        %v2163 = vrot.slane %v2161, 4
        %v2164 = vshll.u32 %v1902, 16
        %v2166 = vrot.slane %v2164, 5
        %v2167 = vor.u32 %v2163, %v2166
        %v2168 = vrot.slane %v2167, 4
        %v2170 = vshll.u32 %v1903, 16
        %v2172 = vrot.slane %v2170, 5
        %v2173 = vsel %vm326, %v2168, %v2172
        %v2174 = vshrl.u32 %v1903, 16
        %v2176 = vrot.slane %v2174, 4
        %v2177 = vor.u32 %v2176, %v2172
        %v2178 = vrot.slane %v2177, 4
        %v2180 = vshll.u32 %v1904, 16
        %v2182 = vrot.slane %v2180, 5
        %v2183 = vsel %vm326, %v2178, %v2182
        %v2185 = vshrl.u32 %v1905, 16
        %v2187 = vrot.slane %v2185, 4
        %v2188 = vshll.u32 %v1905, 16
        %v2190 = vrot.slane %v2188, 5
        %v2191 = vor.u32 %v2187, %v2190
        %v2192 = vrot.slane %v2191, 4
        %v2194 = vshll.u32 %v1906, 16
        %v2196 = vrot.slane %v2194, 5
        %v2197 = vsel %vm326, %v2192, %v2196
        %v2198 = vshrl.u32 %v1906, 16
        %v2200 = vrot.slane %v2198, 4
        %v2201 = vor.u32 %v2200, %v2196
        %v2202 = vrot.slane %v2201, 4
        %v2204 = vshll.u32 %v1907, 16
        %v2206 = vrot.slane %v2204, 5
        %v2207 = vsel %vm326, %v2202, %v2206
        %v2209 = vshrl.u32 %v1908, 16
        %v2211 = vrot.slane %v2209, 4
        %v2212 = vshll.u32 %v1908, 16
        %v2214 = vrot.slane %v2212, 5
        %v2215 = vor.u32 %v2211, %v2214
        %v2216 = vrot.slane %v2215, 4
        %v2218 = vshll.u32 %v1909, 16
        %v2220 = vrot.slane %v2218, 5
        %v2221 = vsel %vm326, %v2216, %v2220
        %v2222 = vshrl.u32 %v1909, 16
        %v2224 = vrot.slane %v2222, 4
        %v2225 = vor.u32 %v2224, %v2220
        %v2226 = vrot.slane %v2225, 4
        %v2228 = vshll.u32 %v1910, 16
        %v2230 = vrot.slane %v2228, 5
        %v2231 = vsel %vm326, %v2226, %v2230
        %v2233 = vshrl.u32 %v1911, 16
        %v2235 = vrot.slane %v2233, 4
        %v2236 = vshll.u32 %v1911, 16
        %v2238 = vrot.slane %v2236, 5
        %v2239 = vor.u32 %v2235, %v2238
        %v2240 = vrot.slane %v2239, 4
        %v2242 = vshll.u32 %v1912, 16
        %v2244 = vrot.slane %v2242, 5
        %v2245 = vsel %vm326, %v2240, %v2244
        %v2246 = vshrl.u32 %v1912, 16
        %v2248 = vrot.slane %v2246, 4
        %v2249 = vor.u32 %v2248, %v2244
        %v2250 = vrot.slane %v2249, 4
        %v2252 = vshll.u32 %v1913, 16
        %v2254 = vrot.slane %v2252, 5
        %v2255 = vsel %vm326, %v2250, %v2254
        %v2257 = vshrl.u32 %v1914, 16
        %v2259 = vrot.slane %v2257, 4
        %v2260 = vshll.u32 %v1914, 16
        %v2262 = vrot.slane %v2260, 5
        %v2263 = vor.u32 %v2259, %v2262
        %v2264 = vrot.slane %v2263, 4
        %v2266 = vshll.u32 %v1915, 16
        %v2268 = vrot.slane %v2266, 5
        %v2269 = vsel %vm326, %v2264, %v2268
        %v2270 = vshrl.u32 %v1915, 16
        %v2272 = vrot.slane %v2270, 4
        %v2273 = vor.u32 %v2272, %v2268
        %v2274 = vrot.slane %v2273, 4
        %v2276 = vshll.u32 %v1916, 16
        %v2278 = vrot.slane %v2276, 5
        %v2279 = vsel %vm326, %v2274, %v2278
        %v2281 = vshrl.u32 %v1917, 16
        %v2283 = vrot.slane %v2281, 4
        %v2284 = vshll.u32 %v1917, 16
        %v2286 = vrot.slane %v2284, 5
        %v2287 = vor.u32 %v2283, %v2286
        %v2288 = vrot.slane %v2287, 4
        %v2290 = vshll.u32 %v1918, 16
        %v2292 = vrot.slane %v2290, 5
        %v2293 = vsel %vm326, %v2288, %v2292
        %v2294 = vshrl.u32 %v1918, 16
        %v2296 = vrot.slane %v2294, 4
        %v2297 = vor.u32 %v2296, %v2292
        %v2298 = vrot.slane %v2297, 4
        %v2300 = vshll.u32 %v1919, 16
        %v2302 = vrot.slane %v2300, 5
        %v2303 = vsel %vm326, %v2298, %v2302
        %s2304 = scalar_lea.vmem %s257, 96
        %v2305 = vld [vmem:[%s2304] sm:$0xf]
        %v2306 = vld [vmem:[%s2304 + $0x4] sm:$0xf]
        %v2307 = vld [vmem:[%s2304 + $0x8] sm:$0xf]
        %v2308 = vld [vmem:[%s2304 + $0xc] sm:$0xf]
        %v2309 = vld [vmem:[%s2304 + $0x10] sm:$0xf]
        %v2310 = vld [vmem:[%s2304 + $0x14] sm:$0xf]
        %v2311 = vunpack.c.l.b16 %v1933
        %v2312 = vunpack.c.l.b16 %v1943
        %v2313 = vunpack.c.l.b16 %v1957
        %v2314 = vunpack.c.l.b16 %v1967
        %v2315 = vunpack.c.l.b16 %v1981
        %v2316 = vunpack.c.l.b16 %v1991
        %v2317 = vunpack.c.l.b16 %v2005
        %v2318 = vunpack.c.l.b16 %v2015
        %v2319 = vunpack.c.l.b16 %v2029
        %v2320 = vunpack.c.l.b16 %v2039
        %v2321 = vunpack.c.l.b16 %v2053
        %v2322 = vunpack.c.l.b16 %v2063
        %v2323 = vunpack.c.l.b16 %v2077
        %v2324 = vunpack.c.l.b16 %v2087
        %v2325 = vunpack.c.l.b16 %v2101
        %v2326 = vunpack.c.l.b16 %v2111
        %v2327 = vunpack.c.l.b16 %v2125
        %v2328 = vunpack.c.l.b16 %v2135
        %v2329 = vunpack.c.l.b16 %v2149
        %v2330 = vunpack.c.l.b16 %v2159
        %v2331 = vunpack.c.l.b16 %v2173
        %v2332 = vunpack.c.l.b16 %v2183
        %v2333 = vunpack.c.l.b16 %v2197
        %v2334 = vunpack.c.l.b16 %v2207
        %v2335 = vunpack.c.l.b16 %v2221
        %v2336 = vunpack.c.l.b16 %v2231
        %v2337 = vunpack.c.l.b16 %v2245
        %v2338 = vunpack.c.l.b16 %v2255
        %v2339 = vunpack.c.l.b16 %v2269
        %v2340 = vunpack.c.l.b16 %v2279
        %v2341 = vunpack.c.l.b16 %v2293
        %v2342 = vunpack.c.l.b16 %v2303
        %v2343 = vpack.c.b16 %v2312, %v2311
        %v2344 = vpack.c.b16 %v2314, %v2313
        %v2345 = vpack.c.b16 %v2316, %v2315
        %v2346 = vpack.c.b16 %v2318, %v2317
        %v2347 = vpack.c.b16 %v2320, %v2319
        %v2348 = vpack.c.b16 %v2322, %v2321
        %v2349 = vpack.c.b16 %v2324, %v2323
        %v2350 = vpack.c.b16 %v2326, %v2325
        %v2351 = vpack.c.b16 %v2328, %v2327
        %v2352 = vpack.c.b16 %v2330, %v2329
        %v2353 = vpack.c.b16 %v2332, %v2331
        %v2354 = vpack.c.b16 %v2334, %v2333
        %v2355 = vpack.c.b16 %v2336, %v2335
        %v2356 = vpack.c.b16 %v2338, %v2337
        %v2357 = vpack.c.b16 %v2340, %v2339
        %v2358 = vpack.c.b16 %v2342, %v2341
        %v2365 = vunpack.c.l.b16 %v2305
        %v2366 = vunpack.c.l.b16 %v2306
        %v2367 = vunpack.c.l.b16 %v2307
        %v2368 = vunpack.c.l.b16 %v2308
        %v2369 = vunpack.c.l.b16 %v2309
        %v2370 = vunpack.c.l.b16 %v2310
        %v2371 = vpack.c.b16 %v2366, %v2365
        %v2372 = vpack.c.b16 %v2368, %v2367
        %v2373 = vpack.c.b16 %v2370, %v2369
        %v2378 = vsel %vm784, %v2343, 0
        %v2381 = vsel %vm784, %v2344, 0
        %v2384 = vsel %vm784, %v2345, 0
        %v2387 = vsel %vm784, %v2346, 0
        %v2390 = vsel %vm784, %v2347, 0
        %v2393 = vsel %vm784, %v2348, 0
        %v2396 = vsel %vm784, %v2349, 0
        %v2399 = vsel %vm784, %v2350, 0
        %v2402 = vsel %vm784, %v2351, 0
        %v2405 = vsel %vm784, %v2352, 0
        %v2408 = vsel %vm784, %v2353, 0
        %v2411 = vsel %vm784, %v2354, 0
        %v2414 = vsel %vm784, %v2355, 0
        %v2417 = vsel %vm784, %v2356, 0
        %v2420 = vsel %vm784, %v2357, 0
        %v2423 = vsel %vm784, %v2358, 0
        %2425 = vmatpush.bf16.msra.mxu0 0
        %2426 = vmatpush.bf16.msra.mxu0 0
        %2427 = vmatpush.bf16.msra.mxu0 0
        %2428 = vmatpush.bf16.msra.mxu0 0
        %2429 = vmatpush.bf16.msra.mxu0 0
        %2430 = vmatpush.bf16.msra.mxu0 %v2373
        %2431 = vmatpush.bf16.msra.mxu0 %v2372
        %2432 = vmatpush.bf16.msra.mxu0 %v2371
        %2433 = vmatmul.bf16.gmra.mxu0 %v2378
        %v2434 = vpop.f32.mrf.mxu0
        %v2435 = vadd.f32 0.0, %v2434
        %v2436 = vpop.f32.mrf.mxu0
        %v2437 = vadd.f32 0.0, %v2436
        %2438 = vmatmul.bf16.gmra.mxu0 %v2381
        %v2439 = vpop.f32.mrf.mxu0
        %v2440 = vadd.f32 0.0, %v2439
        %v2441 = vpop.f32.mrf.mxu0
        %v2442 = vadd.f32 0.0, %v2441
        %2443 = vmatmul.bf16.gmra.mxu0 %v2384
        %v2444 = vpop.f32.mrf.mxu0
        %v2445 = vadd.f32 0.0, %v2444
        %v2446 = vpop.f32.mrf.mxu0
        %v2447 = vadd.f32 0.0, %v2446
        %2448 = vmatmul.bf16.gmra.mxu0 %v2387
        %v2449 = vpop.f32.mrf.mxu0
        %v2450 = vadd.f32 0.0, %v2449
        %v2451 = vpop.f32.mrf.mxu0
        %v2452 = vadd.f32 0.0, %v2451
        %2453 = vmatmul.bf16.gmra.mxu0 %v2390
        %v2454 = vpop.f32.mrf.mxu0
        %v2455 = vadd.f32 0.0, %v2454
        %v2456 = vpop.f32.mrf.mxu0
        %v2457 = vadd.f32 0.0, %v2456
        %2458 = vmatmul.bf16.gmra.mxu0 %v2393
        %v2459 = vpop.f32.mrf.mxu0
        %v2460 = vadd.f32 0.0, %v2459
        %v2461 = vpop.f32.mrf.mxu0
        %v2462 = vadd.f32 0.0, %v2461
        %2463 = vmatmul.bf16.gmra.mxu0 %v2396
        %v2464 = vpop.f32.mrf.mxu0
        %v2465 = vadd.f32 0.0, %v2464
        %v2466 = vpop.f32.mrf.mxu0
        %v2467 = vadd.f32 0.0, %v2466
        %2468 = vmatmul.bf16.gmra.mxu0 %v2399
        %v2469 = vpop.f32.mrf.mxu0
        %v2470 = vadd.f32 0.0, %v2469
        %v2471 = vpop.f32.mrf.mxu0
        %v2472 = vadd.f32 0.0, %v2471
        %2473 = vmatmul.bf16.gmra.mxu0 %v2402
        %v2474 = vpop.f32.mrf.mxu0
        %v2475 = vadd.f32 0.0, %v2474
        %v2476 = vpop.f32.mrf.mxu0
        %v2477 = vadd.f32 0.0, %v2476
        %2478 = vmatmul.bf16.gmra.mxu0 %v2405
        %v2479 = vpop.f32.mrf.mxu0
        %v2480 = vadd.f32 0.0, %v2479
        %v2481 = vpop.f32.mrf.mxu0
        %v2482 = vadd.f32 0.0, %v2481
        %2483 = vmatmul.bf16.gmra.mxu0 %v2408
        %v2484 = vpop.f32.mrf.mxu0
        %v2485 = vadd.f32 0.0, %v2484
        %v2486 = vpop.f32.mrf.mxu0
        %v2487 = vadd.f32 0.0, %v2486
        %2488 = vmatmul.bf16.gmra.mxu0 %v2411
        %v2489 = vpop.f32.mrf.mxu0
        %v2490 = vadd.f32 0.0, %v2489
        %v2491 = vpop.f32.mrf.mxu0
        %v2492 = vadd.f32 0.0, %v2491
        %2493 = vmatmul.bf16.gmra.mxu0 %v2414
        %v2494 = vpop.f32.mrf.mxu0
        %v2495 = vadd.f32 0.0, %v2494
        %v2496 = vpop.f32.mrf.mxu0
        %v2497 = vadd.f32 0.0, %v2496
        %2498 = vmatmul.bf16.gmra.mxu0 %v2417
        %v2499 = vpop.f32.mrf.mxu0
        %v2500 = vadd.f32 0.0, %v2499
        %v2501 = vpop.f32.mrf.mxu0
        %v2502 = vadd.f32 0.0, %v2501
        %2503 = vmatmul.bf16.gmra.mxu0 %v2420
        %v2504 = vpop.f32.mrf.mxu0
        %v2505 = vadd.f32 0.0, %v2504
        %v2506 = vpop.f32.mrf.mxu0
        %v2507 = vadd.f32 0.0, %v2506
        %2508 = vmatmul.bf16.gmra.mxu0 %v2423
        %v2509 = vpop.f32.mrf.mxu0
        %v2510 = vadd.f32 0.0, %v2509
        %v2511 = vpop.f32.mrf.mxu0
        %v2512 = vadd.f32 0.0, %v2511
        %2513 = vdwg.mxu0
        %v2514 = vadd.f32 %v1840, %v2435
        %v2515 = vadd.f32 %v1841, %v2437
        %v2516 = vadd.f32 %v1842, %v2440
        %v2517 = vadd.f32 %v1843, %v2442
        %v2518 = vadd.f32 %v1844, %v2445
        %v2519 = vadd.f32 %v1845, %v2447
        %v2520 = vadd.f32 %v1846, %v2450
        %v2521 = vadd.f32 %v1847, %v2452
        %v2522 = vadd.f32 %v1848, %v2455
        %v2523 = vadd.f32 %v1849, %v2457
        %v2524 = vadd.f32 %v1850, %v2460
        %v2525 = vadd.f32 %v1851, %v2462
        %v2526 = vadd.f32 %v1852, %v2465
        %v2527 = vadd.f32 %v1853, %v2467
        %v2528 = vadd.f32 %v1854, %v2470
        %v2529 = vadd.f32 %v1855, %v2472
        %v2530 = vadd.f32 %v1856, %v2475
        %v2531 = vadd.f32 %v1857, %v2477
        %v2532 = vadd.f32 %v1858, %v2480
        %v2533 = vadd.f32 %v1859, %v2482
        %v2534 = vadd.f32 %v1860, %v2485
        %v2535 = vadd.f32 %v1861, %v2487
        %v2536 = vadd.f32 %v1862, %v2490
        %v2537 = vadd.f32 %v1863, %v2492
        %v2538 = vadd.f32 %v1864, %v2495
        %v2539 = vadd.f32 %v1865, %v2497
        %v2540 = vadd.f32 %v1866, %v2500
        %v2541 = vadd.f32 %v1867, %v2502
        %v2542 = vadd.f32 %v1868, %v2505
        %v2543 = vadd.f32 %v1869, %v2507
        %v2544 = vadd.f32 %v1870, %v2510
        %v2545 = vadd.f32 %v1871, %v2512
        %v2546 = vld [vmem:[%s1565] sm:$0xe]
        %v2547 = vld [vmem:[%s1565 + $0xc] sm:$0xe]
        %v2548 = vld [vmem:[%s1565 + $0x18] sm:$0xe]
        %v2549 = vld [vmem:[%s1565 + $0x24] sm:$0xe]
        %v2550 = vld [vmem:[%s1565 + $0x30] sm:$0xe]
        %v2551 = vld [vmem:[%s1565 + $0x3c] sm:$0xe]
        %v2552 = vld [vmem:[%s1565 + $0x48] sm:$0xe]
        %v2553 = vld [vmem:[%s1565 + $0x54] sm:$0xe]
        %v2554 = vld [vmem:[%s1565 + $0x60] sm:$0xe]
        %v2555 = vld [vmem:[%s1565 + $0x6c] sm:$0xe]
        %v2556 = vld [vmem:[%s1565 + $0x78] sm:$0xe]
        %v2557 = vld [vmem:[%s1565 + $0x84] sm:$0xe]
        %v2558 = vld [vmem:[%s1565 + $0x90] sm:$0xe]
        %v2559 = vld [vmem:[%s1565 + $0x9c] sm:$0xe]
        %v2560 = vld [vmem:[%s1565 + $0xa8] sm:$0xe]
        %v2561 = vld [vmem:[%s1565 + $0xb4] sm:$0xe]
        %v2610 = vrot.slane %v2546, 5
        %v2611 = vrot.slane %v2610, 4
        %v2612 = vrot.slane %v1873, 5
        %v2613 = vsel %vm1207, %v2611, %v2612
        %v2614 = vrot.slane %v2612, 4
        %v2615 = vrot.slane %v1874, 5
        %v2616 = vsel %vm1207, %v2614, %v2615
        %v2617 = vrot.slane %v2547, 5
        %v2618 = vrot.slane %v2617, 4
        %v2619 = vrot.slane %v1876, 5
        %v2620 = vsel %vm1207, %v2618, %v2619
        %v2621 = vrot.slane %v2619, 4
        %v2622 = vrot.slane %v1877, 5
        %v2623 = vsel %vm1207, %v2621, %v2622
        %v2624 = vrot.slane %v2548, 5
        %v2625 = vrot.slane %v2624, 4
        %v2626 = vrot.slane %v1879, 5
        %v2627 = vsel %vm1207, %v2625, %v2626
        %v2628 = vrot.slane %v2626, 4
        %v2629 = vrot.slane %v1880, 5
        %v2630 = vsel %vm1207, %v2628, %v2629
        %v2631 = vrot.slane %v2549, 5
        %v2632 = vrot.slane %v2631, 4
        %v2633 = vrot.slane %v1882, 5
        %v2634 = vsel %vm1207, %v2632, %v2633
        %v2635 = vrot.slane %v2633, 4
        %v2636 = vrot.slane %v1883, 5
        %v2637 = vsel %vm1207, %v2635, %v2636
        %v2638 = vrot.slane %v2550, 5
        %v2639 = vrot.slane %v2638, 4
        %v2640 = vrot.slane %v1885, 5
        %v2641 = vsel %vm1207, %v2639, %v2640
        %v2642 = vrot.slane %v2640, 4
        %v2643 = vrot.slane %v1886, 5
        %v2644 = vsel %vm1207, %v2642, %v2643
        %v2645 = vrot.slane %v2551, 5
        %v2646 = vrot.slane %v2645, 4
        %v2647 = vrot.slane %v1888, 5
        %v2648 = vsel %vm1207, %v2646, %v2647
        %v2649 = vrot.slane %v2647, 4
        %v2650 = vrot.slane %v1889, 5
        %v2651 = vsel %vm1207, %v2649, %v2650
        %v2652 = vrot.slane %v2552, 5
        %v2653 = vrot.slane %v2652, 4
        %v2654 = vrot.slane %v1891, 5
        %v2655 = vsel %vm1207, %v2653, %v2654
        %v2656 = vrot.slane %v2654, 4
        %v2657 = vrot.slane %v1892, 5
        %v2658 = vsel %vm1207, %v2656, %v2657
        %v2659 = vrot.slane %v2553, 5
        %v2660 = vrot.slane %v2659, 4
        %v2661 = vrot.slane %v1894, 5
        %v2662 = vsel %vm1207, %v2660, %v2661
        %v2663 = vrot.slane %v2661, 4
        %v2664 = vrot.slane %v1895, 5
        %v2665 = vsel %vm1207, %v2663, %v2664
        %v2666 = vrot.slane %v2554, 5
        %v2667 = vrot.slane %v2666, 4
        %v2668 = vrot.slane %v1897, 5
        %v2669 = vsel %vm1207, %v2667, %v2668
        %v2670 = vrot.slane %v2668, 4
        %v2671 = vrot.slane %v1898, 5
        %v2672 = vsel %vm1207, %v2670, %v2671
        %v2673 = vrot.slane %v2555, 5
        %v2674 = vrot.slane %v2673, 4
        %v2675 = vrot.slane %v1900, 5
        %v2676 = vsel %vm1207, %v2674, %v2675
        %v2677 = vrot.slane %v2675, 4
        %v2678 = vrot.slane %v1901, 5
        %v2679 = vsel %vm1207, %v2677, %v2678
        %v2680 = vrot.slane %v2556, 5
        %v2681 = vrot.slane %v2680, 4
        %v2682 = vrot.slane %v1903, 5
        %v2683 = vsel %vm1207, %v2681, %v2682
        %v2684 = vrot.slane %v2682, 4
        %v2685 = vrot.slane %v1904, 5
        %v2686 = vsel %vm1207, %v2684, %v2685
        %v2687 = vrot.slane %v2557, 5
        %v2688 = vrot.slane %v2687, 4
        %v2689 = vrot.slane %v1906, 5
        %v2690 = vsel %vm1207, %v2688, %v2689
        %v2691 = vrot.slane %v2689, 4
        %v2692 = vrot.slane %v1907, 5
        %v2693 = vsel %vm1207, %v2691, %v2692
        %v2694 = vrot.slane %v2558, 5
        %v2695 = vrot.slane %v2694, 4
        %v2696 = vrot.slane %v1909, 5
        %v2697 = vsel %vm1207, %v2695, %v2696
        %v2698 = vrot.slane %v2696, 4
        %v2699 = vrot.slane %v1910, 5
        %v2700 = vsel %vm1207, %v2698, %v2699
        %v2701 = vrot.slane %v2559, 5
        %v2702 = vrot.slane %v2701, 4
        %v2703 = vrot.slane %v1912, 5
        %v2704 = vsel %vm1207, %v2702, %v2703
        %v2705 = vrot.slane %v2703, 4
        %v2706 = vrot.slane %v1913, 5
        %v2707 = vsel %vm1207, %v2705, %v2706
        %v2708 = vrot.slane %v2560, 5
        %v2709 = vrot.slane %v2708, 4
        %v2710 = vrot.slane %v1915, 5
        %v2711 = vsel %vm1207, %v2709, %v2710
        %v2712 = vrot.slane %v2710, 4
        %v2713 = vrot.slane %v1916, 5
        %v2714 = vsel %vm1207, %v2712, %v2713
        %v2715 = vrot.slane %v2561, 5
        %v2716 = vrot.slane %v2715, 4
        %v2717 = vrot.slane %v1918, 5
        %v2718 = vsel %vm1207, %v2716, %v2717
        %v2719 = vrot.slane %v2717, 4
        %v2720 = vrot.slane %v1919, 5
        %v2721 = vsel %vm1207, %v2719, %v2720
        %s2722 = scalar_lea.vmem %s257, 120
        %v2723 = vld [vmem:[%s2722] sm:$0xf]
        %v2724 = vld [vmem:[%s2722 + $0x4] sm:$0xf]
        %v2725 = vld [vmem:[%s2722 + $0x8] sm:$0xf]
        %v2726 = vld [vmem:[%s2722 + $0xc] sm:$0xf]
        %v2727 = vld [vmem:[%s2722 + $0x10] sm:$0xf]
        %v2728 = vld [vmem:[%s2722 + $0x14] sm:$0xf]
        %v2729 = vunpack.c.l.b16 %v2613
        %v2730 = vunpack.c.l.b16 %v2616
        %v2731 = vunpack.c.l.b16 %v2620
        %v2732 = vunpack.c.l.b16 %v2623
        %v2733 = vunpack.c.l.b16 %v2627
        %v2734 = vunpack.c.l.b16 %v2630
        %v2735 = vunpack.c.l.b16 %v2634
        %v2736 = vunpack.c.l.b16 %v2637
        %v2737 = vunpack.c.l.b16 %v2641
        %v2738 = vunpack.c.l.b16 %v2644
        %v2739 = vunpack.c.l.b16 %v2648
        %v2740 = vunpack.c.l.b16 %v2651
        %v2741 = vunpack.c.l.b16 %v2655
        %v2742 = vunpack.c.l.b16 %v2658
        %v2743 = vunpack.c.l.b16 %v2662
        %v2744 = vunpack.c.l.b16 %v2665
        %v2745 = vunpack.c.l.b16 %v2669
        %v2746 = vunpack.c.l.b16 %v2672
        %v2747 = vunpack.c.l.b16 %v2676
        %v2748 = vunpack.c.l.b16 %v2679
        %v2749 = vunpack.c.l.b16 %v2683
        %v2750 = vunpack.c.l.b16 %v2686
        %v2751 = vunpack.c.l.b16 %v2690
        %v2752 = vunpack.c.l.b16 %v2693
        %v2753 = vunpack.c.l.b16 %v2697
        %v2754 = vunpack.c.l.b16 %v2700
        %v2755 = vunpack.c.l.b16 %v2704
        %v2756 = vunpack.c.l.b16 %v2707
        %v2757 = vunpack.c.l.b16 %v2711
        %v2758 = vunpack.c.l.b16 %v2714
        %v2759 = vunpack.c.l.b16 %v2718
        %v2760 = vunpack.c.l.b16 %v2721
        %v2761 = vpack.c.b16 %v2730, %v2729
        %v2762 = vpack.c.b16 %v2732, %v2731
        %v2763 = vpack.c.b16 %v2734, %v2733
        %v2764 = vpack.c.b16 %v2736, %v2735
        %v2765 = vpack.c.b16 %v2738, %v2737
        %v2766 = vpack.c.b16 %v2740, %v2739
        %v2767 = vpack.c.b16 %v2742, %v2741
        %v2768 = vpack.c.b16 %v2744, %v2743
        %v2769 = vpack.c.b16 %v2746, %v2745
        %v2770 = vpack.c.b16 %v2748, %v2747
        %v2771 = vpack.c.b16 %v2750, %v2749
        %v2772 = vpack.c.b16 %v2752, %v2751
        %v2773 = vpack.c.b16 %v2754, %v2753
        %v2774 = vpack.c.b16 %v2756, %v2755
        %v2775 = vpack.c.b16 %v2758, %v2757
        %v2776 = vpack.c.b16 %v2760, %v2759
        %v2783 = vunpack.c.l.b16 %v2723
        %v2784 = vunpack.c.l.b16 %v2724
        %v2785 = vunpack.c.l.b16 %v2725
        %v2786 = vunpack.c.l.b16 %v2726
        %v2787 = vunpack.c.l.b16 %v2727
        %v2788 = vunpack.c.l.b16 %v2728
        %v2789 = vpack.c.b16 %v2784, %v2783
        %v2790 = vpack.c.b16 %v2786, %v2785
        %v2791 = vpack.c.b16 %v2788, %v2787
        %v2796 = vsel %vm784, %v2761, 0
        %v2799 = vsel %vm784, %v2762, 0
        %v2802 = vsel %vm784, %v2763, 0
        %v2805 = vsel %vm784, %v2764, 0
        %v2808 = vsel %vm784, %v2765, 0
        %v2811 = vsel %vm784, %v2766, 0
        %v2814 = vsel %vm784, %v2767, 0
        %v2817 = vsel %vm784, %v2768, 0
        %v2820 = vsel %vm784, %v2769, 0
        %v2823 = vsel %vm784, %v2770, 0
        %v2826 = vsel %vm784, %v2771, 0
        %v2829 = vsel %vm784, %v2772, 0
        %v2832 = vsel %vm784, %v2773, 0
        %v2835 = vsel %vm784, %v2774, 0
        %v2838 = vsel %vm784, %v2775, 0
        %v2841 = vsel %vm784, %v2776, 0
        %2843 = vmatpush.bf16.msra.mxu0 0
        %2844 = vmatpush.bf16.msra.mxu0 0
        %2845 = vmatpush.bf16.msra.mxu0 0
        %2846 = vmatpush.bf16.msra.mxu0 0
        %2847 = vmatpush.bf16.msra.mxu0 0
        %2848 = vmatpush.bf16.msra.mxu0 %v2791
        %2849 = vmatpush.bf16.msra.mxu0 %v2790
        %2850 = vmatpush.bf16.msra.mxu0 %v2789
        %2851 = vmatmul.bf16.gmra.mxu0 %v2796
        %v2852 = vpop.f32.mrf.mxu0
        %v2853 = vadd.f32 0.0, %v2852
        %v2854 = vpop.f32.mrf.mxu0
        %v2855 = vadd.f32 0.0, %v2854
        %2856 = vmatmul.bf16.gmra.mxu0 %v2799
        %v2857 = vpop.f32.mrf.mxu0
        %v2858 = vadd.f32 0.0, %v2857
        %v2859 = vpop.f32.mrf.mxu0
        %v2860 = vadd.f32 0.0, %v2859
        %2861 = vmatmul.bf16.gmra.mxu0 %v2802
        %v2862 = vpop.f32.mrf.mxu0
        %v2863 = vadd.f32 0.0, %v2862
        %v2864 = vpop.f32.mrf.mxu0
        %v2865 = vadd.f32 0.0, %v2864
        %2866 = vmatmul.bf16.gmra.mxu0 %v2805
        %v2867 = vpop.f32.mrf.mxu0
        %v2868 = vadd.f32 0.0, %v2867
        %v2869 = vpop.f32.mrf.mxu0
        %v2870 = vadd.f32 0.0, %v2869
        %2871 = vmatmul.bf16.gmra.mxu0 %v2808
        %v2872 = vpop.f32.mrf.mxu0
        %v2873 = vadd.f32 0.0, %v2872
        %v2874 = vpop.f32.mrf.mxu0
        %v2875 = vadd.f32 0.0, %v2874
        %2876 = vmatmul.bf16.gmra.mxu0 %v2811
        %v2877 = vpop.f32.mrf.mxu0
        %v2878 = vadd.f32 0.0, %v2877
        %v2879 = vpop.f32.mrf.mxu0
        %v2880 = vadd.f32 0.0, %v2879
        %2881 = vmatmul.bf16.gmra.mxu0 %v2814
        %v2882 = vpop.f32.mrf.mxu0
        %v2883 = vadd.f32 0.0, %v2882
        %v2884 = vpop.f32.mrf.mxu0
        %v2885 = vadd.f32 0.0, %v2884
        %2886 = vmatmul.bf16.gmra.mxu0 %v2817
        %v2887 = vpop.f32.mrf.mxu0
        %v2888 = vadd.f32 0.0, %v2887
        %v2889 = vpop.f32.mrf.mxu0
        %v2890 = vadd.f32 0.0, %v2889
        %2891 = vmatmul.bf16.gmra.mxu0 %v2820
        %v2892 = vpop.f32.mrf.mxu0
        %v2893 = vadd.f32 0.0, %v2892
        %v2894 = vpop.f32.mrf.mxu0
        %v2895 = vadd.f32 0.0, %v2894
        %2896 = vmatmul.bf16.gmra.mxu0 %v2823
        %v2897 = vpop.f32.mrf.mxu0
        %v2898 = vadd.f32 0.0, %v2897
        %v2899 = vpop.f32.mrf.mxu0
        %v2900 = vadd.f32 0.0, %v2899
        %2901 = vmatmul.bf16.gmra.mxu0 %v2826
        %v2902 = vpop.f32.mrf.mxu0
        %v2903 = vadd.f32 0.0, %v2902
        %v2904 = vpop.f32.mrf.mxu0
        %v2905 = vadd.f32 0.0, %v2904
        %2906 = vmatmul.bf16.gmra.mxu0 %v2829
        %v2907 = vpop.f32.mrf.mxu0
        %v2908 = vadd.f32 0.0, %v2907
        %v2909 = vpop.f32.mrf.mxu0
        %v2910 = vadd.f32 0.0, %v2909
        %2911 = vmatmul.bf16.gmra.mxu0 %v2832
        %v2912 = vpop.f32.mrf.mxu0
        %v2913 = vadd.f32 0.0, %v2912
        %v2914 = vpop.f32.mrf.mxu0
        %v2915 = vadd.f32 0.0, %v2914
        %2916 = vmatmul.bf16.gmra.mxu0 %v2835
        %v2917 = vpop.f32.mrf.mxu0
        %v2918 = vadd.f32 0.0, %v2917
        %v2919 = vpop.f32.mrf.mxu0
        %v2920 = vadd.f32 0.0, %v2919
        %2921 = vmatmul.bf16.gmra.mxu0 %v2838
        %v2922 = vpop.f32.mrf.mxu0
        %v2923 = vadd.f32 0.0, %v2922
        %v2924 = vpop.f32.mrf.mxu0
        %v2925 = vadd.f32 0.0, %v2924
        %2926 = vmatmul.bf16.gmra.mxu0 %v2841
        %v2927 = vpop.f32.mrf.mxu0
        %v2928 = vadd.f32 0.0, %v2927
        %v2929 = vpop.f32.mrf.mxu0
        %v2930 = vadd.f32 0.0, %v2929
        %2931 = vdwg.mxu0
        %v2932 = vadd.f32 %v2514, %v2853
        %v2933 = vadd.f32 %v2515, %v2855
        %v2934 = vadd.f32 %v2516, %v2858
        %v2935 = vadd.f32 %v2517, %v2860
        %v2936 = vadd.f32 %v2518, %v2863
        %v2937 = vadd.f32 %v2519, %v2865
        %v2938 = vadd.f32 %v2520, %v2868
        %v2939 = vadd.f32 %v2521, %v2870
        %v2940 = vadd.f32 %v2522, %v2873
        %v2941 = vadd.f32 %v2523, %v2875
        %v2942 = vadd.f32 %v2524, %v2878
        %v2943 = vadd.f32 %v2525, %v2880
        %v2944 = vadd.f32 %v2526, %v2883
        %v2945 = vadd.f32 %v2527, %v2885
        %v2946 = vadd.f32 %v2528, %v2888
        %v2947 = vadd.f32 %v2529, %v2890
        %v2948 = vadd.f32 %v2530, %v2893
        %v2949 = vadd.f32 %v2531, %v2895
        %v2950 = vadd.f32 %v2532, %v2898
        %v2951 = vadd.f32 %v2533, %v2900
        %v2952 = vadd.f32 %v2534, %v2903
        %v2953 = vadd.f32 %v2535, %v2905
        %v2954 = vadd.f32 %v2536, %v2908
        %v2955 = vadd.f32 %v2537, %v2910
        %v2956 = vadd.f32 %v2538, %v2913
        %v2957 = vadd.f32 %v2539, %v2915
        %v2958 = vadd.f32 %v2540, %v2918
        %v2959 = vadd.f32 %v2541, %v2920
        %v2960 = vadd.f32 %v2542, %v2923
        %v2961 = vadd.f32 %v2543, %v2925
        %v2962 = vadd.f32 %v2544, %v2928
        %v2963 = vadd.f32 %v2545, %v2930
        %s2964 = sadd.s32 %s266, 2
        %s2965 = smul.u32 %s2964, 3
        %s2966 = smul.addr %s2965, 4
        %s2967 = scalar_lea.vmem %s253, %s2966
        %v2968 = vld [vmem:[%s2967] sm:$0xf]
        %v2969 = vld [vmem:[%s2967 + $0x4] sm:$0xf]
        %v2970 = vld [vmem:[%s2967 + $0xc] sm:$0xf]
        %v2971 = vld [vmem:[%s2967 + $0x10] sm:$0xf]
        %v2972 = vld [vmem:[%s2967 + $0x18] sm:$0xf]
        %v2973 = vld [vmem:[%s2967 + $0x1c] sm:$0xf]
        %v2974 = vld [vmem:[%s2967 + $0x24] sm:$0xf]
        %v2975 = vld [vmem:[%s2967 + $0x28] sm:$0xf]
        %v2976 = vld [vmem:[%s2967 + $0x30] sm:$0xf]
        %v2977 = vld [vmem:[%s2967 + $0x34] sm:$0xf]
        %v2978 = vld [vmem:[%s2967 + $0x3c] sm:$0xf]
        %v2979 = vld [vmem:[%s2967 + $0x40] sm:$0xf]
        %v2980 = vld [vmem:[%s2967 + $0x48] sm:$0xf]
        %v2981 = vld [vmem:[%s2967 + $0x4c] sm:$0xf]
        %v2982 = vld [vmem:[%s2967 + $0x54] sm:$0xf]
        %v2983 = vld [vmem:[%s2967 + $0x58] sm:$0xf]
        %v2984 = vld [vmem:[%s2967 + $0x60] sm:$0xf]
        %v2985 = vld [vmem:[%s2967 + $0x64] sm:$0xf]
        %v2986 = vld [vmem:[%s2967 + $0x6c] sm:$0xf]
        %v2987 = vld [vmem:[%s2967 + $0x70] sm:$0xf]
        %v2988 = vld [vmem:[%s2967 + $0x78] sm:$0xf]
        %v2989 = vld [vmem:[%s2967 + $0x7c] sm:$0xf]
        %v2990 = vld [vmem:[%s2967 + $0x84] sm:$0xf]
        %v2991 = vld [vmem:[%s2967 + $0x88] sm:$0xf]
        %v2992 = vld [vmem:[%s2967 + $0x90] sm:$0xf]
        %v2993 = vld [vmem:[%s2967 + $0x94] sm:$0xf]
        %v2994 = vld [vmem:[%s2967 + $0x9c] sm:$0xf]
        %v2995 = vld [vmem:[%s2967 + $0xa0] sm:$0xf]
        %v2996 = vld [vmem:[%s2967 + $0xa8] sm:$0xf]
        %v2997 = vld [vmem:[%s2967 + $0xac] sm:$0xf]
        %v2998 = vld [vmem:[%s2967 + $0xb4] sm:$0xf]
        %v2999 = vld [vmem:[%s2967 + $0xb8] sm:$0xf]
        %s3000 = scalar_lea.vmem %s257, 144
        %v3001 = vld [vmem:[%s3000] sm:$0xf]
        %v3002 = vld [vmem:[%s3000 + $0x4] sm:$0xf]
        %v3003 = vld [vmem:[%s3000 + $0x8] sm:$0xf]
        %v3004 = vld [vmem:[%s3000 + $0xc] sm:$0xf]
        %v3005 = vld [vmem:[%s3000 + $0x10] sm:$0xf]
        %v3006 = vld [vmem:[%s3000 + $0x14] sm:$0xf]
        %v3039 = vunpack.c.l.b16 %v2968
        %v3040 = vunpack.c.l.b16 %v2969
        %v3041 = vunpack.c.l.b16 %v2970
        %v3042 = vunpack.c.l.b16 %v2971
        %v3043 = vunpack.c.l.b16 %v2972
        %v3044 = vunpack.c.l.b16 %v2973
        %v3045 = vunpack.c.l.b16 %v2974
        %v3046 = vunpack.c.l.b16 %v2975
        %v3047 = vunpack.c.l.b16 %v2976
        %v3048 = vunpack.c.l.b16 %v2977
        %v3049 = vunpack.c.l.b16 %v2978
        %v3050 = vunpack.c.l.b16 %v2979
        %v3051 = vunpack.c.l.b16 %v2980
        %v3052 = vunpack.c.l.b16 %v2981
        %v3053 = vunpack.c.l.b16 %v2982
        %v3054 = vunpack.c.l.b16 %v2983
        %v3055 = vunpack.c.l.b16 %v2984
        %v3056 = vunpack.c.l.b16 %v2985
        %v3057 = vunpack.c.l.b16 %v2986
        %v3058 = vunpack.c.l.b16 %v2987
        %v3059 = vunpack.c.l.b16 %v2988
        %v3060 = vunpack.c.l.b16 %v2989
        %v3061 = vunpack.c.l.b16 %v2990
        %v3062 = vunpack.c.l.b16 %v2991
        %v3063 = vunpack.c.l.b16 %v2992
        %v3064 = vunpack.c.l.b16 %v2993
        %v3065 = vunpack.c.l.b16 %v2994
        %v3066 = vunpack.c.l.b16 %v2995
        %v3067 = vunpack.c.l.b16 %v2996
        %v3068 = vunpack.c.l.b16 %v2997
        %v3069 = vunpack.c.l.b16 %v2998
        %v3070 = vunpack.c.l.b16 %v2999
        %v3071 = vpack.c.b16 %v3040, %v3039
        %v3072 = vpack.c.b16 %v3042, %v3041
        %v3073 = vpack.c.b16 %v3044, %v3043
        %v3074 = vpack.c.b16 %v3046, %v3045
        %v3075 = vpack.c.b16 %v3048, %v3047
        %v3076 = vpack.c.b16 %v3050, %v3049
        %v3077 = vpack.c.b16 %v3052, %v3051
        %v3078 = vpack.c.b16 %v3054, %v3053
        %v3079 = vpack.c.b16 %v3056, %v3055
        %v3080 = vpack.c.b16 %v3058, %v3057
        %v3081 = vpack.c.b16 %v3060, %v3059
        %v3082 = vpack.c.b16 %v3062, %v3061
        %v3083 = vpack.c.b16 %v3064, %v3063
        %v3084 = vpack.c.b16 %v3066, %v3065
        %v3085 = vpack.c.b16 %v3068, %v3067
        %v3086 = vpack.c.b16 %v3070, %v3069
        %v3093 = vunpack.c.l.b16 %v3001
        %v3094 = vunpack.c.l.b16 %v3002
        %v3095 = vunpack.c.l.b16 %v3003
        %v3096 = vunpack.c.l.b16 %v3004
        %v3097 = vunpack.c.l.b16 %v3005
        %v3098 = vunpack.c.l.b16 %v3006
        %v3099 = vpack.c.b16 %v3094, %v3093
        %v3100 = vpack.c.b16 %v3096, %v3095
        %v3101 = vpack.c.b16 %v3098, %v3097
        %v3106 = vsel %vm784, %v3071, 0
        %v3109 = vsel %vm784, %v3072, 0
        %v3112 = vsel %vm784, %v3073, 0
        %v3115 = vsel %vm784, %v3074, 0
        %v3118 = vsel %vm784, %v3075, 0
        %v3121 = vsel %vm784, %v3076, 0
        %v3124 = vsel %vm784, %v3077, 0
        %v3127 = vsel %vm784, %v3078, 0
        %v3130 = vsel %vm784, %v3079, 0
        %v3133 = vsel %vm784, %v3080, 0
        %v3136 = vsel %vm784, %v3081, 0
        %v3139 = vsel %vm784, %v3082, 0
        %v3142 = vsel %vm784, %v3083, 0
        %v3145 = vsel %vm784, %v3084, 0
        %v3148 = vsel %vm784, %v3085, 0
        %v3151 = vsel %vm784, %v3086, 0
        %3153 = vmatpush.bf16.msra.mxu0 0
        %3154 = vmatpush.bf16.msra.mxu0 0
        %3155 = vmatpush.bf16.msra.mxu0 0
        %3156 = vmatpush.bf16.msra.mxu0 0
        %3157 = vmatpush.bf16.msra.mxu0 0
        %3158 = vmatpush.bf16.msra.mxu0 %v3101
        %3159 = vmatpush.bf16.msra.mxu0 %v3100
        %3160 = vmatpush.bf16.msra.mxu0 %v3099
        %3161 = vmatmul.bf16.gmra.mxu0 %v3106
        %v3162 = vpop.f32.mrf.mxu0
        %v3163 = vadd.f32 0.0, %v3162
        %v3164 = vpop.f32.mrf.mxu0
        %v3165 = vadd.f32 0.0, %v3164
        %3166 = vmatmul.bf16.gmra.mxu0 %v3109
        %v3167 = vpop.f32.mrf.mxu0
        %v3168 = vadd.f32 0.0, %v3167
        %v3169 = vpop.f32.mrf.mxu0
        %v3170 = vadd.f32 0.0, %v3169
        %3171 = vmatmul.bf16.gmra.mxu0 %v3112
        %v3172 = vpop.f32.mrf.mxu0
        %v3173 = vadd.f32 0.0, %v3172
        %v3174 = vpop.f32.mrf.mxu0
        %v3175 = vadd.f32 0.0, %v3174
        %3176 = vmatmul.bf16.gmra.mxu0 %v3115
        %v3177 = vpop.f32.mrf.mxu0
        %v3178 = vadd.f32 0.0, %v3177
        %v3179 = vpop.f32.mrf.mxu0
        %v3180 = vadd.f32 0.0, %v3179
        %3181 = vmatmul.bf16.gmra.mxu0 %v3118
        %v3182 = vpop.f32.mrf.mxu0
        %v3183 = vadd.f32 0.0, %v3182
        %v3184 = vpop.f32.mrf.mxu0
        %v3185 = vadd.f32 0.0, %v3184
        %3186 = vmatmul.bf16.gmra.mxu0 %v3121
        %v3187 = vpop.f32.mrf.mxu0
        %v3188 = vadd.f32 0.0, %v3187
        %v3189 = vpop.f32.mrf.mxu0
        %v3190 = vadd.f32 0.0, %v3189
        %3191 = vmatmul.bf16.gmra.mxu0 %v3124
        %v3192 = vpop.f32.mrf.mxu0
        %v3193 = vadd.f32 0.0, %v3192
        %v3194 = vpop.f32.mrf.mxu0
        %v3195 = vadd.f32 0.0, %v3194
        %3196 = vmatmul.bf16.gmra.mxu0 %v3127
        %v3197 = vpop.f32.mrf.mxu0
        %v3198 = vadd.f32 0.0, %v3197
        %v3199 = vpop.f32.mrf.mxu0
        %v3200 = vadd.f32 0.0, %v3199
        %3201 = vmatmul.bf16.gmra.mxu0 %v3130
        %v3202 = vpop.f32.mrf.mxu0
        %v3203 = vadd.f32 0.0, %v3202
        %v3204 = vpop.f32.mrf.mxu0
        %v3205 = vadd.f32 0.0, %v3204
        %3206 = vmatmul.bf16.gmra.mxu0 %v3133
        %v3207 = vpop.f32.mrf.mxu0
        %v3208 = vadd.f32 0.0, %v3207
        %v3209 = vpop.f32.mrf.mxu0
        %v3210 = vadd.f32 0.0, %v3209
        %3211 = vmatmul.bf16.gmra.mxu0 %v3136
        %v3212 = vpop.f32.mrf.mxu0
        %v3213 = vadd.f32 0.0, %v3212
        %v3214 = vpop.f32.mrf.mxu0
        %v3215 = vadd.f32 0.0, %v3214
        %3216 = vmatmul.bf16.gmra.mxu0 %v3139
        %v3217 = vpop.f32.mrf.mxu0
        %v3218 = vadd.f32 0.0, %v3217
        %v3219 = vpop.f32.mrf.mxu0
        %v3220 = vadd.f32 0.0, %v3219
        %3221 = vmatmul.bf16.gmra.mxu0 %v3142
        %v3222 = vpop.f32.mrf.mxu0
        %v3223 = vadd.f32 0.0, %v3222
        %v3224 = vpop.f32.mrf.mxu0
        %v3225 = vadd.f32 0.0, %v3224
        %3226 = vmatmul.bf16.gmra.mxu0 %v3145
        %v3227 = vpop.f32.mrf.mxu0
        %v3228 = vadd.f32 0.0, %v3227
        %v3229 = vpop.f32.mrf.mxu0
        %v3230 = vadd.f32 0.0, %v3229
        %3231 = vmatmul.bf16.gmra.mxu0 %v3148
        %v3232 = vpop.f32.mrf.mxu0
        %v3233 = vadd.f32 0.0, %v3232
        %v3234 = vpop.f32.mrf.mxu0
        %v3235 = vadd.f32 0.0, %v3234
        %3236 = vmatmul.bf16.gmra.mxu0 %v3151
        %v3237 = vpop.f32.mrf.mxu0
        %v3238 = vadd.f32 0.0, %v3237
        %v3239 = vpop.f32.mrf.mxu0
        %v3240 = vadd.f32 0.0, %v3239
        %3241 = vdwg.mxu0
        %v3242 = vadd.f32 %v2932, %v3163
        %v3243 = vadd.f32 %v2933, %v3165
        %v3244 = vadd.f32 %v2934, %v3168
        %v3245 = vadd.f32 %v2935, %v3170
        %v3246 = vadd.f32 %v2936, %v3173
        %v3247 = vadd.f32 %v2937, %v3175
        %v3248 = vadd.f32 %v2938, %v3178
        %v3249 = vadd.f32 %v2939, %v3180
        %v3250 = vadd.f32 %v2940, %v3183
        %v3251 = vadd.f32 %v2941, %v3185
        %v3252 = vadd.f32 %v2942, %v3188
        %v3253 = vadd.f32 %v2943, %v3190
        %v3254 = vadd.f32 %v2944, %v3193
        %v3255 = vadd.f32 %v2945, %v3195
        %v3256 = vadd.f32 %v2946, %v3198
        %v3257 = vadd.f32 %v2947, %v3200
        %v3258 = vadd.f32 %v2948, %v3203
        %v3259 = vadd.f32 %v2949, %v3205
        %v3260 = vadd.f32 %v2950, %v3208
        %v3261 = vadd.f32 %v2951, %v3210
        %v3262 = vadd.f32 %v2952, %v3213
        %v3263 = vadd.f32 %v2953, %v3215
        %v3264 = vadd.f32 %v2954, %v3218
        %v3265 = vadd.f32 %v2955, %v3220
        %v3266 = vadd.f32 %v2956, %v3223
        %v3267 = vadd.f32 %v2957, %v3225
        %v3268 = vadd.f32 %v2958, %v3228
        %v3269 = vadd.f32 %v2959, %v3230
        %v3270 = vadd.f32 %v2960, %v3233
        %v3271 = vadd.f32 %v2961, %v3235
        %v3272 = vadd.f32 %v2962, %v3238
        %v3273 = vadd.f32 %v2963, %v3240
        %v3274 = vld [vmem:[%s2967] sm:$0xf]
        %v3275 = vld [vmem:[%s2967 + $0x4] sm:$0xf]
        %v3276 = vld [vmem:[%s2967 + $0x8] sm:$0x1]
        %v3277 = vld [vmem:[%s2967 + $0xc] sm:$0xf]
        %v3278 = vld [vmem:[%s2967 + $0x10] sm:$0xf]
        %v3279 = vld [vmem:[%s2967 + $0x14] sm:$0x1]
        %v3280 = vld [vmem:[%s2967 + $0x18] sm:$0xf]
        %v3281 = vld [vmem:[%s2967 + $0x1c] sm:$0xf]
        %v3282 = vld [vmem:[%s2967 + $0x20] sm:$0x1]
        %v3283 = vld [vmem:[%s2967 + $0x24] sm:$0xf]
        %v3284 = vld [vmem:[%s2967 + $0x28] sm:$0xf]
        %v3285 = vld [vmem:[%s2967 + $0x2c] sm:$0x1]
        %v3286 = vld [vmem:[%s2967 + $0x30] sm:$0xf]
        %v3287 = vld [vmem:[%s2967 + $0x34] sm:$0xf]
        %v3288 = vld [vmem:[%s2967 + $0x38] sm:$0x1]
        %v3289 = vld [vmem:[%s2967 + $0x3c] sm:$0xf]
        %v3290 = vld [vmem:[%s2967 + $0x40] sm:$0xf]
        %v3291 = vld [vmem:[%s2967 + $0x44] sm:$0x1]
        %v3292 = vld [vmem:[%s2967 + $0x48] sm:$0xf]
        %v3293 = vld [vmem:[%s2967 + $0x4c] sm:$0xf]
        %v3294 = vld [vmem:[%s2967 + $0x50] sm:$0x1]
        %v3295 = vld [vmem:[%s2967 + $0x54] sm:$0xf]
        %v3296 = vld [vmem:[%s2967 + $0x58] sm:$0xf]
        %v3297 = vld [vmem:[%s2967 + $0x5c] sm:$0x1]
        %v3298 = vld [vmem:[%s2967 + $0x60] sm:$0xf]
        %v3299 = vld [vmem:[%s2967 + $0x64] sm:$0xf]
        %v3300 = vld [vmem:[%s2967 + $0x68] sm:$0x1]
        %v3301 = vld [vmem:[%s2967 + $0x6c] sm:$0xf]
        %v3302 = vld [vmem:[%s2967 + $0x70] sm:$0xf]
        %v3303 = vld [vmem:[%s2967 + $0x74] sm:$0x1]
        %v3304 = vld [vmem:[%s2967 + $0x78] sm:$0xf]
        %v3305 = vld [vmem:[%s2967 + $0x7c] sm:$0xf]
        %v3306 = vld [vmem:[%s2967 + $0x80] sm:$0x1]
        %v3307 = vld [vmem:[%s2967 + $0x84] sm:$0xf]
        %v3308 = vld [vmem:[%s2967 + $0x88] sm:$0xf]
        %v3309 = vld [vmem:[%s2967 + $0x8c] sm:$0x1]
        %v3310 = vld [vmem:[%s2967 + $0x90] sm:$0xf]
        %v3311 = vld [vmem:[%s2967 + $0x94] sm:$0xf]
        %v3312 = vld [vmem:[%s2967 + $0x98] sm:$0x1]
        %v3313 = vld [vmem:[%s2967 + $0x9c] sm:$0xf]
        %v3314 = vld [vmem:[%s2967 + $0xa0] sm:$0xf]
        %v3315 = vld [vmem:[%s2967 + $0xa4] sm:$0x1]
        %v3316 = vld [vmem:[%s2967 + $0xa8] sm:$0xf]
        %v3317 = vld [vmem:[%s2967 + $0xac] sm:$0xf]
        %v3318 = vld [vmem:[%s2967 + $0xb0] sm:$0x1]
        %v3319 = vld [vmem:[%s2967 + $0xb4] sm:$0xf]
        %v3320 = vld [vmem:[%s2967 + $0xb8] sm:$0xf]
        %v3321 = vld [vmem:[%s2967 + $0xbc] sm:$0x1]
        %v3323 = vshrl.u32 %v3274, 16
        %v3325 = vrot.slane %v3323, 4
        %v3326 = vshll.u32 %v3274, 16
        %v3328 = vrot.slane %v3326, 5
        %v3329 = vor.u32 %v3325, %v3328
        %v3330 = vrot.slane %v3329, 4
        %v3332 = vshll.u32 %v3275, 16
        %v3334 = vrot.slane %v3332, 5
        %v3335 = vsel %vm326, %v3330, %v3334
        %v3336 = vshrl.u32 %v3275, 16
        %v3338 = vrot.slane %v3336, 4
        %v3339 = vor.u32 %v3338, %v3334
        %v3340 = vrot.slane %v3339, 4
        %v3342 = vshll.u32 %v3276, 16
        %v3344 = vrot.slane %v3342, 5
        %v3345 = vsel %vm326, %v3340, %v3344
        %v3347 = vshrl.u32 %v3277, 16
        %v3349 = vrot.slane %v3347, 4
        %v3350 = vshll.u32 %v3277, 16
        %v3352 = vrot.slane %v3350, 5
        %v3353 = vor.u32 %v3349, %v3352
        %v3354 = vrot.slane %v3353, 4
        %v3356 = vshll.u32 %v3278, 16
        %v3358 = vrot.slane %v3356, 5
        %v3359 = vsel %vm326, %v3354, %v3358
        %v3360 = vshrl.u32 %v3278, 16
        %v3362 = vrot.slane %v3360, 4
        %v3363 = vor.u32 %v3362, %v3358
        %v3364 = vrot.slane %v3363, 4
        %v3366 = vshll.u32 %v3279, 16
        %v3368 = vrot.slane %v3366, 5
        %v3369 = vsel %vm326, %v3364, %v3368
        %v3371 = vshrl.u32 %v3280, 16
        %v3373 = vrot.slane %v3371, 4
        %v3374 = vshll.u32 %v3280, 16
        %v3376 = vrot.slane %v3374, 5
        %v3377 = vor.u32 %v3373, %v3376
        %v3378 = vrot.slane %v3377, 4
        %v3380 = vshll.u32 %v3281, 16
        %v3382 = vrot.slane %v3380, 5
        %v3383 = vsel %vm326, %v3378, %v3382
        %v3384 = vshrl.u32 %v3281, 16
        %v3386 = vrot.slane %v3384, 4
        %v3387 = vor.u32 %v3386, %v3382
        %v3388 = vrot.slane %v3387, 4
        %v3390 = vshll.u32 %v3282, 16
        %v3392 = vrot.slane %v3390, 5
        %v3393 = vsel %vm326, %v3388, %v3392
        %v3395 = vshrl.u32 %v3283, 16
        %v3397 = vrot.slane %v3395, 4
        %v3398 = vshll.u32 %v3283, 16
        %v3400 = vrot.slane %v3398, 5
        %v3401 = vor.u32 %v3397, %v3400
        %v3402 = vrot.slane %v3401, 4
        %v3404 = vshll.u32 %v3284, 16
        %v3406 = vrot.slane %v3404, 5
        %v3407 = vsel %vm326, %v3402, %v3406
        %v3408 = vshrl.u32 %v3284, 16
        %v3410 = vrot.slane %v3408, 4
        %v3411 = vor.u32 %v3410, %v3406
        %v3412 = vrot.slane %v3411, 4
        %v3414 = vshll.u32 %v3285, 16
        %v3416 = vrot.slane %v3414, 5
        %v3417 = vsel %vm326, %v3412, %v3416
        %v3419 = vshrl.u32 %v3286, 16
        %v3421 = vrot.slane %v3419, 4
        %v3422 = vshll.u32 %v3286, 16
        %v3424 = vrot.slane %v3422, 5
        %v3425 = vor.u32 %v3421, %v3424
        %v3426 = vrot.slane %v3425, 4
        %v3428 = vshll.u32 %v3287, 16
        %v3430 = vrot.slane %v3428, 5
        %v3431 = vsel %vm326, %v3426, %v3430
        %v3432 = vshrl.u32 %v3287, 16
        %v3434 = vrot.slane %v3432, 4
        %v3435 = vor.u32 %v3434, %v3430
        %v3436 = vrot.slane %v3435, 4
        %v3438 = vshll.u32 %v3288, 16
        %v3440 = vrot.slane %v3438, 5
        %v3441 = vsel %vm326, %v3436, %v3440
        %v3443 = vshrl.u32 %v3289, 16
        %v3445 = vrot.slane %v3443, 4
        %v3446 = vshll.u32 %v3289, 16
        %v3448 = vrot.slane %v3446, 5
        %v3449 = vor.u32 %v3445, %v3448
        %v3450 = vrot.slane %v3449, 4
        %v3452 = vshll.u32 %v3290, 16
        %v3454 = vrot.slane %v3452, 5
        %v3455 = vsel %vm326, %v3450, %v3454
        %v3456 = vshrl.u32 %v3290, 16
        %v3458 = vrot.slane %v3456, 4
        %v3459 = vor.u32 %v3458, %v3454
        %v3460 = vrot.slane %v3459, 4
        %v3462 = vshll.u32 %v3291, 16
        %v3464 = vrot.slane %v3462, 5
        %v3465 = vsel %vm326, %v3460, %v3464
        %v3467 = vshrl.u32 %v3292, 16
        %v3469 = vrot.slane %v3467, 4
        %v3470 = vshll.u32 %v3292, 16
        %v3472 = vrot.slane %v3470, 5
        %v3473 = vor.u32 %v3469, %v3472
        %v3474 = vrot.slane %v3473, 4
        %v3476 = vshll.u32 %v3293, 16
        %v3478 = vrot.slane %v3476, 5
        %v3479 = vsel %vm326, %v3474, %v3478
        %v3480 = vshrl.u32 %v3293, 16
        %v3482 = vrot.slane %v3480, 4
        %v3483 = vor.u32 %v3482, %v3478
        %v3484 = vrot.slane %v3483, 4
        %v3486 = vshll.u32 %v3294, 16
        %v3488 = vrot.slane %v3486, 5
        %v3489 = vsel %vm326, %v3484, %v3488
        %v3491 = vshrl.u32 %v3295, 16
        %v3493 = vrot.slane %v3491, 4
        %v3494 = vshll.u32 %v3295, 16
        %v3496 = vrot.slane %v3494, 5
        %v3497 = vor.u32 %v3493, %v3496
        %v3498 = vrot.slane %v3497, 4
        %v3500 = vshll.u32 %v3296, 16
        %v3502 = vrot.slane %v3500, 5
        %v3503 = vsel %vm326, %v3498, %v3502
        %v3504 = vshrl.u32 %v3296, 16
        %v3506 = vrot.slane %v3504, 4
        %v3507 = vor.u32 %v3506, %v3502
        %v3508 = vrot.slane %v3507, 4
        %v3510 = vshll.u32 %v3297, 16
        %v3512 = vrot.slane %v3510, 5
        %v3513 = vsel %vm326, %v3508, %v3512
        %v3515 = vshrl.u32 %v3298, 16
        %v3517 = vrot.slane %v3515, 4
        %v3518 = vshll.u32 %v3298, 16
        %v3520 = vrot.slane %v3518, 5
        %v3521 = vor.u32 %v3517, %v3520
        %v3522 = vrot.slane %v3521, 4
        %v3524 = vshll.u32 %v3299, 16
        %v3526 = vrot.slane %v3524, 5
        %v3527 = vsel %vm326, %v3522, %v3526
        %v3528 = vshrl.u32 %v3299, 16
        %v3530 = vrot.slane %v3528, 4
        %v3531 = vor.u32 %v3530, %v3526
        %v3532 = vrot.slane %v3531, 4
        %v3534 = vshll.u32 %v3300, 16
        %v3536 = vrot.slane %v3534, 5
        %v3537 = vsel %vm326, %v3532, %v3536
        %v3539 = vshrl.u32 %v3301, 16
        %v3541 = vrot.slane %v3539, 4
        %v3542 = vshll.u32 %v3301, 16
        %v3544 = vrot.slane %v3542, 5
        %v3545 = vor.u32 %v3541, %v3544
        %v3546 = vrot.slane %v3545, 4
        %v3548 = vshll.u32 %v3302, 16
        %v3550 = vrot.slane %v3548, 5
        %v3551 = vsel %vm326, %v3546, %v3550
        %v3552 = vshrl.u32 %v3302, 16
        %v3554 = vrot.slane %v3552, 4
        %v3555 = vor.u32 %v3554, %v3550
        %v3556 = vrot.slane %v3555, 4
        %v3558 = vshll.u32 %v3303, 16
        %v3560 = vrot.slane %v3558, 5
        %v3561 = vsel %vm326, %v3556, %v3560
        %v3563 = vshrl.u32 %v3304, 16
        %v3565 = vrot.slane %v3563, 4
        %v3566 = vshll.u32 %v3304, 16
        %v3568 = vrot.slane %v3566, 5
        %v3569 = vor.u32 %v3565, %v3568
        %v3570 = vrot.slane %v3569, 4
        %v3572 = vshll.u32 %v3305, 16
        %v3574 = vrot.slane %v3572, 5
        %v3575 = vsel %vm326, %v3570, %v3574
        %v3576 = vshrl.u32 %v3305, 16
        %v3578 = vrot.slane %v3576, 4
        %v3579 = vor.u32 %v3578, %v3574
        %v3580 = vrot.slane %v3579, 4
        %v3582 = vshll.u32 %v3306, 16
        %v3584 = vrot.slane %v3582, 5
        %v3585 = vsel %vm326, %v3580, %v3584
        %v3587 = vshrl.u32 %v3307, 16
        %v3589 = vrot.slane %v3587, 4
        %v3590 = vshll.u32 %v3307, 16
        %v3592 = vrot.slane %v3590, 5
        %v3593 = vor.u32 %v3589, %v3592
        %v3594 = vrot.slane %v3593, 4
        %v3596 = vshll.u32 %v3308, 16
        %v3598 = vrot.slane %v3596, 5
        %v3599 = vsel %vm326, %v3594, %v3598
        %v3600 = vshrl.u32 %v3308, 16
        %v3602 = vrot.slane %v3600, 4
        %v3603 = vor.u32 %v3602, %v3598
        %v3604 = vrot.slane %v3603, 4
        %v3606 = vshll.u32 %v3309, 16
        %v3608 = vrot.slane %v3606, 5
        %v3609 = vsel %vm326, %v3604, %v3608
        %v3611 = vshrl.u32 %v3310, 16
        %v3613 = vrot.slane %v3611, 4
        %v3614 = vshll.u32 %v3310, 16
        %v3616 = vrot.slane %v3614, 5
        %v3617 = vor.u32 %v3613, %v3616
        %v3618 = vrot.slane %v3617, 4
        %v3620 = vshll.u32 %v3311, 16
        %v3622 = vrot.slane %v3620, 5
        %v3623 = vsel %vm326, %v3618, %v3622
        %v3624 = vshrl.u32 %v3311, 16
        %v3626 = vrot.slane %v3624, 4
        %v3627 = vor.u32 %v3626, %v3622
        %v3628 = vrot.slane %v3627, 4
        %v3630 = vshll.u32 %v3312, 16
        %v3632 = vrot.slane %v3630, 5
        %v3633 = vsel %vm326, %v3628, %v3632
        %v3635 = vshrl.u32 %v3313, 16
        %v3637 = vrot.slane %v3635, 4
        %v3638 = vshll.u32 %v3313, 16
        %v3640 = vrot.slane %v3638, 5
        %v3641 = vor.u32 %v3637, %v3640
        %v3642 = vrot.slane %v3641, 4
        %v3644 = vshll.u32 %v3314, 16
        %v3646 = vrot.slane %v3644, 5
        %v3647 = vsel %vm326, %v3642, %v3646
        %v3648 = vshrl.u32 %v3314, 16
        %v3650 = vrot.slane %v3648, 4
        %v3651 = vor.u32 %v3650, %v3646
        %v3652 = vrot.slane %v3651, 4
        %v3654 = vshll.u32 %v3315, 16
        %v3656 = vrot.slane %v3654, 5
        %v3657 = vsel %vm326, %v3652, %v3656
        %v3659 = vshrl.u32 %v3316, 16
        %v3661 = vrot.slane %v3659, 4
        %v3662 = vshll.u32 %v3316, 16
        %v3664 = vrot.slane %v3662, 5
        %v3665 = vor.u32 %v3661, %v3664
        %v3666 = vrot.slane %v3665, 4
        %v3668 = vshll.u32 %v3317, 16
        %v3670 = vrot.slane %v3668, 5
        %v3671 = vsel %vm326, %v3666, %v3670
        %v3672 = vshrl.u32 %v3317, 16
        %v3674 = vrot.slane %v3672, 4
        %v3675 = vor.u32 %v3674, %v3670
        %v3676 = vrot.slane %v3675, 4
        %v3678 = vshll.u32 %v3318, 16
        %v3680 = vrot.slane %v3678, 5
        %v3681 = vsel %vm326, %v3676, %v3680
        %v3683 = vshrl.u32 %v3319, 16
        %v3685 = vrot.slane %v3683, 4
        %v3686 = vshll.u32 %v3319, 16
        %v3688 = vrot.slane %v3686, 5
        %v3689 = vor.u32 %v3685, %v3688
        %v3690 = vrot.slane %v3689, 4
        %v3692 = vshll.u32 %v3320, 16
        %v3694 = vrot.slane %v3692, 5
        %v3695 = vsel %vm326, %v3690, %v3694
        %v3696 = vshrl.u32 %v3320, 16
        %v3698 = vrot.slane %v3696, 4
        %v3699 = vor.u32 %v3698, %v3694
        %v3700 = vrot.slane %v3699, 4
        %v3702 = vshll.u32 %v3321, 16
        %v3704 = vrot.slane %v3702, 5
        %v3705 = vsel %vm326, %v3700, %v3704
        %s3706 = scalar_lea.vmem %s257, 168
        %v3707 = vld [vmem:[%s3706] sm:$0xf]
        %v3708 = vld [vmem:[%s3706 + $0x4] sm:$0xf]
        %v3709 = vld [vmem:[%s3706 + $0x8] sm:$0xf]
        %v3710 = vld [vmem:[%s3706 + $0xc] sm:$0xf]
        %v3711 = vld [vmem:[%s3706 + $0x10] sm:$0xf]
        %v3712 = vld [vmem:[%s3706 + $0x14] sm:$0xf]
        %v3713 = vunpack.c.l.b16 %v3335
        %v3714 = vunpack.c.l.b16 %v3345
        %v3715 = vunpack.c.l.b16 %v3359
        %v3716 = vunpack.c.l.b16 %v3369
        %v3717 = vunpack.c.l.b16 %v3383
        %v3718 = vunpack.c.l.b16 %v3393
        %v3719 = vunpack.c.l.b16 %v3407
        %v3720 = vunpack.c.l.b16 %v3417
        %v3721 = vunpack.c.l.b16 %v3431
        %v3722 = vunpack.c.l.b16 %v3441
        %v3723 = vunpack.c.l.b16 %v3455
        %v3724 = vunpack.c.l.b16 %v3465
        %v3725 = vunpack.c.l.b16 %v3479
        %v3726 = vunpack.c.l.b16 %v3489
        %v3727 = vunpack.c.l.b16 %v3503
        %v3728 = vunpack.c.l.b16 %v3513
        %v3729 = vunpack.c.l.b16 %v3527
        %v3730 = vunpack.c.l.b16 %v3537
        %v3731 = vunpack.c.l.b16 %v3551
        %v3732 = vunpack.c.l.b16 %v3561
        %v3733 = vunpack.c.l.b16 %v3575
        %v3734 = vunpack.c.l.b16 %v3585
        %v3735 = vunpack.c.l.b16 %v3599
        %v3736 = vunpack.c.l.b16 %v3609
        %v3737 = vunpack.c.l.b16 %v3623
        %v3738 = vunpack.c.l.b16 %v3633
        %v3739 = vunpack.c.l.b16 %v3647
        %v3740 = vunpack.c.l.b16 %v3657
        %v3741 = vunpack.c.l.b16 %v3671
        %v3742 = vunpack.c.l.b16 %v3681
        %v3743 = vunpack.c.l.b16 %v3695
        %v3744 = vunpack.c.l.b16 %v3705
        %v3745 = vpack.c.b16 %v3714, %v3713
        %v3746 = vpack.c.b16 %v3716, %v3715
        %v3747 = vpack.c.b16 %v3718, %v3717
        %v3748 = vpack.c.b16 %v3720, %v3719
        %v3749 = vpack.c.b16 %v3722, %v3721
        %v3750 = vpack.c.b16 %v3724, %v3723
        %v3751 = vpack.c.b16 %v3726, %v3725
        %v3752 = vpack.c.b16 %v3728, %v3727
        %v3753 = vpack.c.b16 %v3730, %v3729
        %v3754 = vpack.c.b16 %v3732, %v3731
        %v3755 = vpack.c.b16 %v3734, %v3733
        %v3756 = vpack.c.b16 %v3736, %v3735
        %v3757 = vpack.c.b16 %v3738, %v3737
        %v3758 = vpack.c.b16 %v3740, %v3739
        %v3759 = vpack.c.b16 %v3742, %v3741
        %v3760 = vpack.c.b16 %v3744, %v3743
        %v3767 = vunpack.c.l.b16 %v3707
        %v3768 = vunpack.c.l.b16 %v3708
        %v3769 = vunpack.c.l.b16 %v3709
        %v3770 = vunpack.c.l.b16 %v3710
        %v3771 = vunpack.c.l.b16 %v3711
        %v3772 = vunpack.c.l.b16 %v3712
        %v3773 = vpack.c.b16 %v3768, %v3767
        %v3774 = vpack.c.b16 %v3770, %v3769
        %v3775 = vpack.c.b16 %v3772, %v3771
        %v3780 = vsel %vm784, %v3745, 0
        %v3783 = vsel %vm784, %v3746, 0
        %v3786 = vsel %vm784, %v3747, 0
        %v3789 = vsel %vm784, %v3748, 0
        %v3792 = vsel %vm784, %v3749, 0
        %v3795 = vsel %vm784, %v3750, 0
        %v3798 = vsel %vm784, %v3751, 0
        %v3801 = vsel %vm784, %v3752, 0
        %v3804 = vsel %vm784, %v3753, 0
        %v3807 = vsel %vm784, %v3754, 0
        %v3810 = vsel %vm784, %v3755, 0
        %v3813 = vsel %vm784, %v3756, 0
        %v3816 = vsel %vm784, %v3757, 0
        %v3819 = vsel %vm784, %v3758, 0
        %v3822 = vsel %vm784, %v3759, 0
        %v3825 = vsel %vm784, %v3760, 0
        %3827 = vmatpush.bf16.msra.mxu0 0
        %3828 = vmatpush.bf16.msra.mxu0 0
        %3829 = vmatpush.bf16.msra.mxu0 0
        %3830 = vmatpush.bf16.msra.mxu0 0
        %3831 = vmatpush.bf16.msra.mxu0 0
        %3832 = vmatpush.bf16.msra.mxu0 %v3775
        %3833 = vmatpush.bf16.msra.mxu0 %v3774
        %3834 = vmatpush.bf16.msra.mxu0 %v3773
        %3835 = vmatmul.bf16.gmra.mxu0 %v3780
        %v3836 = vpop.f32.mrf.mxu0
        %v3837 = vadd.f32 0.0, %v3836
        %v3838 = vpop.f32.mrf.mxu0
        %v3839 = vadd.f32 0.0, %v3838
        %3840 = vmatmul.bf16.gmra.mxu0 %v3783
        %v3841 = vpop.f32.mrf.mxu0
        %v3842 = vadd.f32 0.0, %v3841
        %v3843 = vpop.f32.mrf.mxu0
        %v3844 = vadd.f32 0.0, %v3843
        %3845 = vmatmul.bf16.gmra.mxu0 %v3786
        %v3846 = vpop.f32.mrf.mxu0
        %v3847 = vadd.f32 0.0, %v3846
        %v3848 = vpop.f32.mrf.mxu0
        %v3849 = vadd.f32 0.0, %v3848
        %3850 = vmatmul.bf16.gmra.mxu0 %v3789
        %v3851 = vpop.f32.mrf.mxu0
        %v3852 = vadd.f32 0.0, %v3851
        %v3853 = vpop.f32.mrf.mxu0
        %v3854 = vadd.f32 0.0, %v3853
        %3855 = vmatmul.bf16.gmra.mxu0 %v3792
        %v3856 = vpop.f32.mrf.mxu0
        %v3857 = vadd.f32 0.0, %v3856
        %v3858 = vpop.f32.mrf.mxu0
        %v3859 = vadd.f32 0.0, %v3858
        %3860 = vmatmul.bf16.gmra.mxu0 %v3795
        %v3861 = vpop.f32.mrf.mxu0
        %v3862 = vadd.f32 0.0, %v3861
        %v3863 = vpop.f32.mrf.mxu0
        %v3864 = vadd.f32 0.0, %v3863
        %3865 = vmatmul.bf16.gmra.mxu0 %v3798
        %v3866 = vpop.f32.mrf.mxu0
        %v3867 = vadd.f32 0.0, %v3866
        %v3868 = vpop.f32.mrf.mxu0
        %v3869 = vadd.f32 0.0, %v3868
        %3870 = vmatmul.bf16.gmra.mxu0 %v3801
        %v3871 = vpop.f32.mrf.mxu0
        %v3872 = vadd.f32 0.0, %v3871
        %v3873 = vpop.f32.mrf.mxu0
        %v3874 = vadd.f32 0.0, %v3873
        %3875 = vmatmul.bf16.gmra.mxu0 %v3804
        %v3876 = vpop.f32.mrf.mxu0
        %v3877 = vadd.f32 0.0, %v3876
        %v3878 = vpop.f32.mrf.mxu0
        %v3879 = vadd.f32 0.0, %v3878
        %3880 = vmatmul.bf16.gmra.mxu0 %v3807
        %v3881 = vpop.f32.mrf.mxu0
        %v3882 = vadd.f32 0.0, %v3881
        %v3883 = vpop.f32.mrf.mxu0
        %v3884 = vadd.f32 0.0, %v3883
        %3885 = vmatmul.bf16.gmra.mxu0 %v3810
        %v3886 = vpop.f32.mrf.mxu0
        %v3887 = vadd.f32 0.0, %v3886
        %v3888 = vpop.f32.mrf.mxu0
        %v3889 = vadd.f32 0.0, %v3888
        %3890 = vmatmul.bf16.gmra.mxu0 %v3813
        %v3891 = vpop.f32.mrf.mxu0
        %v3892 = vadd.f32 0.0, %v3891
        %v3893 = vpop.f32.mrf.mxu0
        %v3894 = vadd.f32 0.0, %v3893
        %3895 = vmatmul.bf16.gmra.mxu0 %v3816
        %v3896 = vpop.f32.mrf.mxu0
        %v3897 = vadd.f32 0.0, %v3896
        %v3898 = vpop.f32.mrf.mxu0
        %v3899 = vadd.f32 0.0, %v3898
        %3900 = vmatmul.bf16.gmra.mxu0 %v3819
        %v3901 = vpop.f32.mrf.mxu0
        %v3902 = vadd.f32 0.0, %v3901
        %v3903 = vpop.f32.mrf.mxu0
        %v3904 = vadd.f32 0.0, %v3903
        %3905 = vmatmul.bf16.gmra.mxu0 %v3822
        %v3906 = vpop.f32.mrf.mxu0
        %v3907 = vadd.f32 0.0, %v3906
        %v3908 = vpop.f32.mrf.mxu0
        %v3909 = vadd.f32 0.0, %v3908
        %3910 = vmatmul.bf16.gmra.mxu0 %v3825
        %v3911 = vpop.f32.mrf.mxu0
        %v3912 = vadd.f32 0.0, %v3911
        %v3913 = vpop.f32.mrf.mxu0
        %v3914 = vadd.f32 0.0, %v3913
        %3915 = vdwg.mxu0
        %v3916 = vadd.f32 %v3242, %v3837
        %v3917 = vadd.f32 %v3243, %v3839
        %v3918 = vadd.f32 %v3244, %v3842
        %v3919 = vadd.f32 %v3245, %v3844
        %v3920 = vadd.f32 %v3246, %v3847
        %v3921 = vadd.f32 %v3247, %v3849
        %v3922 = vadd.f32 %v3248, %v3852
        %v3923 = vadd.f32 %v3249, %v3854
        %v3924 = vadd.f32 %v3250, %v3857
        %v3925 = vadd.f32 %v3251, %v3859
        %v3926 = vadd.f32 %v3252, %v3862
        %v3927 = vadd.f32 %v3253, %v3864
        %v3928 = vadd.f32 %v3254, %v3867
        %v3929 = vadd.f32 %v3255, %v3869
        %v3930 = vadd.f32 %v3256, %v3872
        %v3931 = vadd.f32 %v3257, %v3874
        %v3932 = vadd.f32 %v3258, %v3877
        %v3933 = vadd.f32 %v3259, %v3879
        %v3934 = vadd.f32 %v3260, %v3882
        %v3935 = vadd.f32 %v3261, %v3884
        %v3936 = vadd.f32 %v3262, %v3887
        %v3937 = vadd.f32 %v3263, %v3889
        %v3938 = vadd.f32 %v3264, %v3892
        %v3939 = vadd.f32 %v3265, %v3894
        %v3940 = vadd.f32 %v3266, %v3897
        %v3941 = vadd.f32 %v3267, %v3899
        %v3942 = vadd.f32 %v3268, %v3902
        %v3943 = vadd.f32 %v3269, %v3904
        %v3944 = vadd.f32 %v3270, %v3907
        %v3945 = vadd.f32 %v3271, %v3909
        %v3946 = vadd.f32 %v3272, %v3912
        %v3947 = vadd.f32 %v3273, %v3914
        %v3948 = vld [vmem:[%s2967] sm:$0xe]
        %v3949 = vld [vmem:[%s2967 + $0xc] sm:$0xe]
        %v3950 = vld [vmem:[%s2967 + $0x18] sm:$0xe]
        %v3951 = vld [vmem:[%s2967 + $0x24] sm:$0xe]
        %v3952 = vld [vmem:[%s2967 + $0x30] sm:$0xe]
        %v3953 = vld [vmem:[%s2967 + $0x3c] sm:$0xe]
        %v3954 = vld [vmem:[%s2967 + $0x48] sm:$0xe]
        %v3955 = vld [vmem:[%s2967 + $0x54] sm:$0xe]
        %v3956 = vld [vmem:[%s2967 + $0x60] sm:$0xe]
        %v3957 = vld [vmem:[%s2967 + $0x6c] sm:$0xe]
        %v3958 = vld [vmem:[%s2967 + $0x78] sm:$0xe]
        %v3959 = vld [vmem:[%s2967 + $0x84] sm:$0xe]
        %v3960 = vld [vmem:[%s2967 + $0x90] sm:$0xe]
        %v3961 = vld [vmem:[%s2967 + $0x9c] sm:$0xe]
        %v3962 = vld [vmem:[%s2967 + $0xa8] sm:$0xe]
        %v3963 = vld [vmem:[%s2967 + $0xb4] sm:$0xe]
        %v4012 = vrot.slane %v3948, 5
        %v4013 = vrot.slane %v4012, 4
        %v4014 = vrot.slane %v3275, 5
        %v4015 = vsel %vm1207, %v4013, %v4014
        %v4016 = vrot.slane %v4014, 4
        %v4017 = vrot.slane %v3276, 5
        %v4018 = vsel %vm1207, %v4016, %v4017
        %v4019 = vrot.slane %v3949, 5
        %v4020 = vrot.slane %v4019, 4
        %v4021 = vrot.slane %v3278, 5
        %v4022 = vsel %vm1207, %v4020, %v4021
        %v4023 = vrot.slane %v4021, 4
        %v4024 = vrot.slane %v3279, 5
        %v4025 = vsel %vm1207, %v4023, %v4024
        %v4026 = vrot.slane %v3950, 5
        %v4027 = vrot.slane %v4026, 4
        %v4028 = vrot.slane %v3281, 5
        %v4029 = vsel %vm1207, %v4027, %v4028
        %v4030 = vrot.slane %v4028, 4
        %v4031 = vrot.slane %v3282, 5
        %v4032 = vsel %vm1207, %v4030, %v4031
        %v4033 = vrot.slane %v3951, 5
        %v4034 = vrot.slane %v4033, 4
        %v4035 = vrot.slane %v3284, 5
        %v4036 = vsel %vm1207, %v4034, %v4035
        %v4037 = vrot.slane %v4035, 4
        %v4038 = vrot.slane %v3285, 5
        %v4039 = vsel %vm1207, %v4037, %v4038
        %v4040 = vrot.slane %v3952, 5
        %v4041 = vrot.slane %v4040, 4
        %v4042 = vrot.slane %v3287, 5
        %v4043 = vsel %vm1207, %v4041, %v4042
        %v4044 = vrot.slane %v4042, 4
        %v4045 = vrot.slane %v3288, 5
        %v4046 = vsel %vm1207, %v4044, %v4045
        %v4047 = vrot.slane %v3953, 5
        %v4048 = vrot.slane %v4047, 4
        %v4049 = vrot.slane %v3290, 5
        %v4050 = vsel %vm1207, %v4048, %v4049
        %v4051 = vrot.slane %v4049, 4
        %v4052 = vrot.slane %v3291, 5
        %v4053 = vsel %vm1207, %v4051, %v4052
        %v4054 = vrot.slane %v3954, 5
        %v4055 = vrot.slane %v4054, 4
        %v4056 = vrot.slane %v3293, 5
        %v4057 = vsel %vm1207, %v4055, %v4056
        %v4058 = vrot.slane %v4056, 4
        %v4059 = vrot.slane %v3294, 5
        %v4060 = vsel %vm1207, %v4058, %v4059
        %v4061 = vrot.slane %v3955, 5
        %v4062 = vrot.slane %v4061, 4
        %v4063 = vrot.slane %v3296, 5
        %v4064 = vsel %vm1207, %v4062, %v4063
        %v4065 = vrot.slane %v4063, 4
        %v4066 = vrot.slane %v3297, 5
        %v4067 = vsel %vm1207, %v4065, %v4066
        %v4068 = vrot.slane %v3956, 5
        %v4069 = vrot.slane %v4068, 4
        %v4070 = vrot.slane %v3299, 5
        %v4071 = vsel %vm1207, %v4069, %v4070
        %v4072 = vrot.slane %v4070, 4
        %v4073 = vrot.slane %v3300, 5
        %v4074 = vsel %vm1207, %v4072, %v4073
        %v4075 = vrot.slane %v3957, 5
        %v4076 = vrot.slane %v4075, 4
        %v4077 = vrot.slane %v3302, 5
        %v4078 = vsel %vm1207, %v4076, %v4077
        %v4079 = vrot.slane %v4077, 4
        %v4080 = vrot.slane %v3303, 5
        %v4081 = vsel %vm1207, %v4079, %v4080
        %v4082 = vrot.slane %v3958, 5
        %v4083 = vrot.slane %v4082, 4
        %v4084 = vrot.slane %v3305, 5
        %v4085 = vsel %vm1207, %v4083, %v4084
        %v4086 = vrot.slane %v4084, 4
        %v4087 = vrot.slane %v3306, 5
        %v4088 = vsel %vm1207, %v4086, %v4087
        %v4089 = vrot.slane %v3959, 5
        %v4090 = vrot.slane %v4089, 4
        %v4091 = vrot.slane %v3308, 5
        %v4092 = vsel %vm1207, %v4090, %v4091
        %v4093 = vrot.slane %v4091, 4
        %v4094 = vrot.slane %v3309, 5
        %v4095 = vsel %vm1207, %v4093, %v4094
        %v4096 = vrot.slane %v3960, 5
        %v4097 = vrot.slane %v4096, 4
        %v4098 = vrot.slane %v3311, 5
        %v4099 = vsel %vm1207, %v4097, %v4098
        %v4100 = vrot.slane %v4098, 4
        %v4101 = vrot.slane %v3312, 5
        %v4102 = vsel %vm1207, %v4100, %v4101
        %v4103 = vrot.slane %v3961, 5
        %v4104 = vrot.slane %v4103, 4
        %v4105 = vrot.slane %v3314, 5
        %v4106 = vsel %vm1207, %v4104, %v4105
        %v4107 = vrot.slane %v4105, 4
        %v4108 = vrot.slane %v3315, 5
        %v4109 = vsel %vm1207, %v4107, %v4108
        %v4110 = vrot.slane %v3962, 5
        %v4111 = vrot.slane %v4110, 4
        %v4112 = vrot.slane %v3317, 5
        %v4113 = vsel %vm1207, %v4111, %v4112
        %v4114 = vrot.slane %v4112, 4
        %v4115 = vrot.slane %v3318, 5
        %v4116 = vsel %vm1207, %v4114, %v4115
        %v4117 = vrot.slane %v3963, 5
        %v4118 = vrot.slane %v4117, 4
        %v4119 = vrot.slane %v3320, 5
        %v4120 = vsel %vm1207, %v4118, %v4119
        %v4121 = vrot.slane %v4119, 4
        %v4122 = vrot.slane %v3321, 5
        %v4123 = vsel %vm1207, %v4121, %v4122
        %s4124 = scalar_lea.vmem %s257, 192
        %v4125 = vld [vmem:[%s4124] sm:$0xf]
        %v4126 = vld [vmem:[%s4124 + $0x4] sm:$0xf]
        %v4127 = vld [vmem:[%s4124 + $0x8] sm:$0xf]
        %v4128 = vld [vmem:[%s4124 + $0xc] sm:$0xf]
        %v4129 = vld [vmem:[%s4124 + $0x10] sm:$0xf]
        %v4130 = vld [vmem:[%s4124 + $0x14] sm:$0xf]
        %v4131 = vunpack.c.l.b16 %v4015
        %v4132 = vunpack.c.l.b16 %v4018
        %v4133 = vunpack.c.l.b16 %v4022
        %v4134 = vunpack.c.l.b16 %v4025
        %v4135 = vunpack.c.l.b16 %v4029
        %v4136 = vunpack.c.l.b16 %v4032
        %v4137 = vunpack.c.l.b16 %v4036
        %v4138 = vunpack.c.l.b16 %v4039
        %v4139 = vunpack.c.l.b16 %v4043
        %v4140 = vunpack.c.l.b16 %v4046
        %v4141 = vunpack.c.l.b16 %v4050
        %v4142 = vunpack.c.l.b16 %v4053
        %v4143 = vunpack.c.l.b16 %v4057
        %v4144 = vunpack.c.l.b16 %v4060
        %v4145 = vunpack.c.l.b16 %v4064
        %v4146 = vunpack.c.l.b16 %v4067
        %v4147 = vunpack.c.l.b16 %v4071
        %v4148 = vunpack.c.l.b16 %v4074
        %v4149 = vunpack.c.l.b16 %v4078
        %v4150 = vunpack.c.l.b16 %v4081
        %v4151 = vunpack.c.l.b16 %v4085
        %v4152 = vunpack.c.l.b16 %v4088
        %v4153 = vunpack.c.l.b16 %v4092
        %v4154 = vunpack.c.l.b16 %v4095
        %v4155 = vunpack.c.l.b16 %v4099
        %v4156 = vunpack.c.l.b16 %v4102
        %v4157 = vunpack.c.l.b16 %v4106
        %v4158 = vunpack.c.l.b16 %v4109
        %v4159 = vunpack.c.l.b16 %v4113
        %v4160 = vunpack.c.l.b16 %v4116
        %v4161 = vunpack.c.l.b16 %v4120
        %v4162 = vunpack.c.l.b16 %v4123
        %v4163 = vpack.c.b16 %v4132, %v4131
        %v4164 = vpack.c.b16 %v4134, %v4133
        %v4165 = vpack.c.b16 %v4136, %v4135
        %v4166 = vpack.c.b16 %v4138, %v4137
        %v4167 = vpack.c.b16 %v4140, %v4139
        %v4168 = vpack.c.b16 %v4142, %v4141
        %v4169 = vpack.c.b16 %v4144, %v4143
        %v4170 = vpack.c.b16 %v4146, %v4145
        %v4171 = vpack.c.b16 %v4148, %v4147
        %v4172 = vpack.c.b16 %v4150, %v4149
        %v4173 = vpack.c.b16 %v4152, %v4151
        %v4174 = vpack.c.b16 %v4154, %v4153
        %v4175 = vpack.c.b16 %v4156, %v4155
        %v4176 = vpack.c.b16 %v4158, %v4157
        %v4177 = vpack.c.b16 %v4160, %v4159
        %v4178 = vpack.c.b16 %v4162, %v4161
        %v4185 = vunpack.c.l.b16 %v4125
        %v4186 = vunpack.c.l.b16 %v4126
        %v4187 = vunpack.c.l.b16 %v4127
        %v4188 = vunpack.c.l.b16 %v4128
        %v4189 = vunpack.c.l.b16 %v4129
        %v4190 = vunpack.c.l.b16 %v4130
        %v4191 = vpack.c.b16 %v4186, %v4185
        %v4192 = vpack.c.b16 %v4188, %v4187
        %v4193 = vpack.c.b16 %v4190, %v4189
        %v4198 = vsel %vm784, %v4163, 0
        %v4201 = vsel %vm784, %v4164, 0
        %v4204 = vsel %vm784, %v4165, 0
        %v4207 = vsel %vm784, %v4166, 0
        %v4210 = vsel %vm784, %v4167, 0
        %v4213 = vsel %vm784, %v4168, 0
        %v4216 = vsel %vm784, %v4169, 0
        %v4219 = vsel %vm784, %v4170, 0
        %v4222 = vsel %vm784, %v4171, 0
        %v4225 = vsel %vm784, %v4172, 0
        %v4228 = vsel %vm784, %v4173, 0
        %v4231 = vsel %vm784, %v4174, 0
        %v4234 = vsel %vm784, %v4175, 0
        %v4237 = vsel %vm784, %v4176, 0
        %v4240 = vsel %vm784, %v4177, 0
        %v4243 = vsel %vm784, %v4178, 0
        %4245 = vmatpush.bf16.msra.mxu0 0
        %4246 = vmatpush.bf16.msra.mxu0 0
        %4247 = vmatpush.bf16.msra.mxu0 0
        %4248 = vmatpush.bf16.msra.mxu0 0
        %4249 = vmatpush.bf16.msra.mxu0 0
        %4250 = vmatpush.bf16.msra.mxu0 %v4193
        %4251 = vmatpush.bf16.msra.mxu0 %v4192
        %4252 = vmatpush.bf16.msra.mxu0 %v4191
        %4253 = vmatmul.bf16.gmra.mxu0 %v4198
        %v4254 = vpop.f32.mrf.mxu0
        %v4255 = vadd.f32 0.0, %v4254
        %v4256 = vpop.f32.mrf.mxu0
        %v4257 = vadd.f32 0.0, %v4256
        %4258 = vmatmul.bf16.gmra.mxu0 %v4201
        %v4259 = vpop.f32.mrf.mxu0
        %v4260 = vadd.f32 0.0, %v4259
        %v4261 = vpop.f32.mrf.mxu0
        %v4262 = vadd.f32 0.0, %v4261
        %4263 = vmatmul.bf16.gmra.mxu0 %v4204
        %v4264 = vpop.f32.mrf.mxu0
        %v4265 = vadd.f32 0.0, %v4264
        %v4266 = vpop.f32.mrf.mxu0
        %v4267 = vadd.f32 0.0, %v4266
        %4268 = vmatmul.bf16.gmra.mxu0 %v4207
        %v4269 = vpop.f32.mrf.mxu0
        %v4270 = vadd.f32 0.0, %v4269
        %v4271 = vpop.f32.mrf.mxu0
        %v4272 = vadd.f32 0.0, %v4271
        %4273 = vmatmul.bf16.gmra.mxu0 %v4210
        %v4274 = vpop.f32.mrf.mxu0
        %v4275 = vadd.f32 0.0, %v4274
        %v4276 = vpop.f32.mrf.mxu0
        %v4277 = vadd.f32 0.0, %v4276
        %4278 = vmatmul.bf16.gmra.mxu0 %v4213
        %v4279 = vpop.f32.mrf.mxu0
        %v4280 = vadd.f32 0.0, %v4279
        %v4281 = vpop.f32.mrf.mxu0
        %v4282 = vadd.f32 0.0, %v4281
        %4283 = vmatmul.bf16.gmra.mxu0 %v4216
        %v4284 = vpop.f32.mrf.mxu0
        %v4285 = vadd.f32 0.0, %v4284
        %v4286 = vpop.f32.mrf.mxu0
        %v4287 = vadd.f32 0.0, %v4286
        %4288 = vmatmul.bf16.gmra.mxu0 %v4219
        %v4289 = vpop.f32.mrf.mxu0
        %v4290 = vadd.f32 0.0, %v4289
        %v4291 = vpop.f32.mrf.mxu0
        %v4292 = vadd.f32 0.0, %v4291
        %4293 = vmatmul.bf16.gmra.mxu0 %v4222
        %v4294 = vpop.f32.mrf.mxu0
        %v4295 = vadd.f32 0.0, %v4294
        %v4296 = vpop.f32.mrf.mxu0
        %v4297 = vadd.f32 0.0, %v4296
        %4298 = vmatmul.bf16.gmra.mxu0 %v4225
        %v4299 = vpop.f32.mrf.mxu0
        %v4300 = vadd.f32 0.0, %v4299
        %v4301 = vpop.f32.mrf.mxu0
        %v4302 = vadd.f32 0.0, %v4301
        %4303 = vmatmul.bf16.gmra.mxu0 %v4228
        %v4304 = vpop.f32.mrf.mxu0
        %v4305 = vadd.f32 0.0, %v4304
        %v4306 = vpop.f32.mrf.mxu0
        %v4307 = vadd.f32 0.0, %v4306
        %4308 = vmatmul.bf16.gmra.mxu0 %v4231
        %v4309 = vpop.f32.mrf.mxu0
        %v4310 = vadd.f32 0.0, %v4309
        %v4311 = vpop.f32.mrf.mxu0
        %v4312 = vadd.f32 0.0, %v4311
        %4313 = vmatmul.bf16.gmra.mxu0 %v4234
        %v4314 = vpop.f32.mrf.mxu0
        %v4315 = vadd.f32 0.0, %v4314
        %v4316 = vpop.f32.mrf.mxu0
        %v4317 = vadd.f32 0.0, %v4316
        %4318 = vmatmul.bf16.gmra.mxu0 %v4237
        %v4319 = vpop.f32.mrf.mxu0
        %v4320 = vadd.f32 0.0, %v4319
        %v4321 = vpop.f32.mrf.mxu0
        %v4322 = vadd.f32 0.0, %v4321
        %4323 = vmatmul.bf16.gmra.mxu0 %v4240
        %v4324 = vpop.f32.mrf.mxu0
        %v4325 = vadd.f32 0.0, %v4324
        %v4326 = vpop.f32.mrf.mxu0
        %v4327 = vadd.f32 0.0, %v4326
        %4328 = vmatmul.bf16.gmra.mxu0 %v4243
        %v4329 = vpop.f32.mrf.mxu0
        %v4330 = vadd.f32 0.0, %v4329
        %v4331 = vpop.f32.mrf.mxu0
        %v4332 = vadd.f32 0.0, %v4331
        %4333 = vdwg.mxu0
        %v4334 = vadd.f32 %v3916, %v4255
        %v4335 = vadd.f32 %v3917, %v4257
        %v4336 = vadd.f32 %v3918, %v4260
        %v4337 = vadd.f32 %v3919, %v4262
        %v4338 = vadd.f32 %v3920, %v4265
        %v4339 = vadd.f32 %v3921, %v4267
        %v4340 = vadd.f32 %v3922, %v4270
        %v4341 = vadd.f32 %v3923, %v4272
        %v4342 = vadd.f32 %v3924, %v4275
        %v4343 = vadd.f32 %v3925, %v4277
        %v4344 = vadd.f32 %v3926, %v4280
        %v4345 = vadd.f32 %v3927, %v4282
        %v4346 = vadd.f32 %v3928, %v4285
        %v4347 = vadd.f32 %v3929, %v4287
        %v4348 = vadd.f32 %v3930, %v4290
        %v4349 = vadd.f32 %v3931, %v4292
        %v4350 = vadd.f32 %v3932, %v4295
        %v4351 = vadd.f32 %v3933, %v4297
        %v4352 = vadd.f32 %v3934, %v4300
        %v4353 = vadd.f32 %v3935, %v4302
        %v4354 = vadd.f32 %v3936, %v4305
        %v4355 = vadd.f32 %v3937, %v4307
        %v4356 = vadd.f32 %v3938, %v4310
        %v4357 = vadd.f32 %v3939, %v4312
        %v4358 = vadd.f32 %v3940, %v4315
        %v4359 = vadd.f32 %v3941, %v4317
        %v4360 = vadd.f32 %v3942, %v4320
        %v4361 = vadd.f32 %v3943, %v4322
        %v4362 = vadd.f32 %v3944, %v4325
        %v4363 = vadd.f32 %v3945, %v4327
        %v4364 = vadd.f32 %v3946, %v4330
        %v4365 = vadd.f32 %v3947, %v4332
        %v4366 = vld [vmem:[%s260] sm:$0x1]
        %v4367 = vld [vmem:[%s263] sm:$0x1]
        %v4369 = vperm.slane %v4366, 0
        %v4371 = vmul.f32 %v4334, %v4369
        %v4372 = vmul.f32 %v4335, %v4369
        %v4373 = vmul.f32 %v4336, %v4369
        %v4374 = vmul.f32 %v4337, %v4369
        %v4375 = vmul.f32 %v4338, %v4369
        %v4376 = vmul.f32 %v4339, %v4369
        %v4377 = vmul.f32 %v4340, %v4369
        %v4378 = vmul.f32 %v4341, %v4369
        %v4379 = vmul.f32 %v4342, %v4369
        %v4380 = vmul.f32 %v4343, %v4369
        %v4381 = vmul.f32 %v4344, %v4369
        %v4382 = vmul.f32 %v4345, %v4369
        %v4383 = vmul.f32 %v4346, %v4369
        %v4384 = vmul.f32 %v4347, %v4369
        %v4385 = vmul.f32 %v4348, %v4369
        %v4386 = vmul.f32 %v4349, %v4369
        %v4387 = vmul.f32 %v4350, %v4369
        %v4388 = vmul.f32 %v4351, %v4369
        %v4389 = vmul.f32 %v4352, %v4369
        %v4390 = vmul.f32 %v4353, %v4369
        %v4391 = vmul.f32 %v4354, %v4369
        %v4392 = vmul.f32 %v4355, %v4369
        %v4393 = vmul.f32 %v4356, %v4369
        %v4394 = vmul.f32 %v4357, %v4369
        %v4395 = vmul.f32 %v4358, %v4369
        %v4396 = vmul.f32 %v4359, %v4369
        %v4397 = vmul.f32 %v4360, %v4369
        %v4398 = vmul.f32 %v4361, %v4369
        %v4399 = vmul.f32 %v4362, %v4369
        %v4400 = vmul.f32 %v4363, %v4369
        %v4401 = vmul.f32 %v4364, %v4369
        %v4402 = vmul.f32 %v4365, %v4369
        %v4404 = vperm.slane %v4367, 0
        %v4406 = vadd.f32 %v4371, %v4404
        %v4407 = vadd.f32 %v4372, %v4404
        %v4408 = vadd.f32 %v4373, %v4404
        %v4409 = vadd.f32 %v4374, %v4404
        %v4410 = vadd.f32 %v4375, %v4404
        %v4411 = vadd.f32 %v4376, %v4404
        %v4412 = vadd.f32 %v4377, %v4404
        %v4413 = vadd.f32 %v4378, %v4404
        %v4414 = vadd.f32 %v4379, %v4404
        %v4415 = vadd.f32 %v4380, %v4404
        %v4416 = vadd.f32 %v4381, %v4404
        %v4417 = vadd.f32 %v4382, %v4404
        %v4418 = vadd.f32 %v4383, %v4404
        %v4419 = vadd.f32 %v4384, %v4404
        %v4420 = vadd.f32 %v4385, %v4404
        %v4421 = vadd.f32 %v4386, %v4404
        %v4422 = vadd.f32 %v4387, %v4404
        %v4423 = vadd.f32 %v4388, %v4404
        %v4424 = vadd.f32 %v4389, %v4404
        %v4425 = vadd.f32 %v4390, %v4404
        %v4426 = vadd.f32 %v4391, %v4404
        %v4427 = vadd.f32 %v4392, %v4404
        %v4428 = vadd.f32 %v4393, %v4404
        %v4429 = vadd.f32 %v4394, %v4404
        %v4430 = vadd.f32 %v4395, %v4404
        %v4431 = vadd.f32 %v4396, %v4404
        %v4432 = vadd.f32 %v4397, %v4404
        %v4433 = vadd.f32 %v4398, %v4404
        %v4434 = vadd.f32 %v4399, %v4404
        %v4435 = vadd.f32 %v4400, %v4404
        %v4436 = vadd.f32 %v4401, %v4404
        %v4437 = vadd.f32 %v4402, %v4404
        %vm4438 = vcmp.ge.f32.partialorder %v4406, 0.0
        %vm4439 = vcmp.ge.f32.partialorder %v4407, 0.0
        %vm4440 = vcmp.ge.f32.partialorder %v4408, 0.0
        %vm4441 = vcmp.ge.f32.partialorder %v4409, 0.0
        %vm4442 = vcmp.ge.f32.partialorder %v4410, 0.0
        %vm4443 = vcmp.ge.f32.partialorder %v4411, 0.0
        %vm4444 = vcmp.ge.f32.partialorder %v4412, 0.0
        %vm4445 = vcmp.ge.f32.partialorder %v4413, 0.0
        %vm4446 = vcmp.ge.f32.partialorder %v4414, 0.0
        %vm4447 = vcmp.ge.f32.partialorder %v4415, 0.0
        %vm4448 = vcmp.ge.f32.partialorder %v4416, 0.0
        %vm4449 = vcmp.ge.f32.partialorder %v4417, 0.0
        %vm4450 = vcmp.ge.f32.partialorder %v4418, 0.0
        %vm4451 = vcmp.ge.f32.partialorder %v4419, 0.0
        %vm4452 = vcmp.ge.f32.partialorder %v4420, 0.0
        %vm4453 = vcmp.ge.f32.partialorder %v4421, 0.0
        %vm4454 = vcmp.ge.f32.partialorder %v4422, 0.0
        %vm4455 = vcmp.ge.f32.partialorder %v4423, 0.0
        %vm4456 = vcmp.ge.f32.partialorder %v4424, 0.0
        %vm4457 = vcmp.ge.f32.partialorder %v4425, 0.0
        %vm4458 = vcmp.ge.f32.partialorder %v4426, 0.0
        %vm4459 = vcmp.ge.f32.partialorder %v4427, 0.0
        %vm4460 = vcmp.ge.f32.partialorder %v4428, 0.0
        %vm4461 = vcmp.ge.f32.partialorder %v4429, 0.0
        %vm4462 = vcmp.ge.f32.partialorder %v4430, 0.0
        %vm4463 = vcmp.ge.f32.partialorder %v4431, 0.0
        %vm4464 = vcmp.ge.f32.partialorder %v4432, 0.0
        %vm4465 = vcmp.ge.f32.partialorder %v4433, 0.0
        %vm4466 = vcmp.ge.f32.partialorder %v4434, 0.0
        %vm4467 = vcmp.ge.f32.partialorder %v4435, 0.0
        %vm4468 = vcmp.ge.f32.partialorder %v4436, 0.0
        %vm4469 = vcmp.ge.f32.partialorder %v4437, 0.0
        %v4470 = vmul.f32 %v4406, 0.01
        %v4471 = vmul.f32 %v4407, 0.01
        %v4472 = vmul.f32 %v4408, 0.01
        %v4473 = vmul.f32 %v4409, 0.01
        %v4474 = vmul.f32 %v4410, 0.01
        %v4475 = vmul.f32 %v4411, 0.01
        %v4476 = vmul.f32 %v4412, 0.01
        %v4477 = vmul.f32 %v4413, 0.01
        %v4478 = vmul.f32 %v4414, 0.01
        %v4479 = vmul.f32 %v4415, 0.01
        %v4480 = vmul.f32 %v4416, 0.01
        %v4481 = vmul.f32 %v4417, 0.01
        %v4482 = vmul.f32 %v4418, 0.01
        %v4483 = vmul.f32 %v4419, 0.01
        %v4484 = vmul.f32 %v4420, 0.01
        %v4485 = vmul.f32 %v4421, 0.01
        %v4486 = vmul.f32 %v4422, 0.01
        %v4487 = vmul.f32 %v4423, 0.01
        %v4488 = vmul.f32 %v4424, 0.01
        %v4489 = vmul.f32 %v4425, 0.01
        %v4490 = vmul.f32 %v4426, 0.01
        %v4491 = vmul.f32 %v4427, 0.01
        %v4492 = vmul.f32 %v4428, 0.01
        %v4493 = vmul.f32 %v4429, 0.01
        %v4494 = vmul.f32 %v4430, 0.01
        %v4495 = vmul.f32 %v4431, 0.01
        %v4496 = vmul.f32 %v4432, 0.01
        %v4497 = vmul.f32 %v4433, 0.01
        %v4498 = vmul.f32 %v4434, 0.01
        %v4499 = vmul.f32 %v4435, 0.01
        %v4500 = vmul.f32 %v4436, 0.01
        %v4501 = vmul.f32 %v4437, 0.01
        %v4502 = vsel %vm4438, %v4406, %v4470
        %v4503 = vsel %vm4439, %v4407, %v4471
        %v4504 = vsel %vm4440, %v4408, %v4472
        %v4505 = vsel %vm4441, %v4409, %v4473
        %v4506 = vsel %vm4442, %v4410, %v4474
        %v4507 = vsel %vm4443, %v4411, %v4475
        %v4508 = vsel %vm4444, %v4412, %v4476
        %v4509 = vsel %vm4445, %v4413, %v4477
        %v4510 = vsel %vm4446, %v4414, %v4478
        %v4511 = vsel %vm4447, %v4415, %v4479
        %v4512 = vsel %vm4448, %v4416, %v4480
        %v4513 = vsel %vm4449, %v4417, %v4481
        %v4514 = vsel %vm4450, %v4418, %v4482
        %v4515 = vsel %vm4451, %v4419, %v4483
        %v4516 = vsel %vm4452, %v4420, %v4484
        %v4517 = vsel %vm4453, %v4421, %v4485
        %v4518 = vsel %vm4454, %v4422, %v4486
        %v4519 = vsel %vm4455, %v4423, %v4487
        %v4520 = vsel %vm4456, %v4424, %v4488
        %v4521 = vsel %vm4457, %v4425, %v4489
        %v4522 = vsel %vm4458, %v4426, %v4490
        %v4523 = vsel %vm4459, %v4427, %v4491
        %v4524 = vsel %vm4460, %v4428, %v4492
        %v4525 = vsel %vm4461, %v4429, %v4493
        %v4526 = vsel %vm4462, %v4430, %v4494
        %v4527 = vsel %vm4463, %v4431, %v4495
        %v4528 = vsel %vm4464, %v4432, %v4496
        %v4529 = vsel %vm4465, %v4433, %v4497
        %v4530 = vsel %vm4466, %v4434, %v4498
        %v4531 = vsel %vm4467, %v4435, %v4499
        %v4532 = vsel %vm4468, %v4436, %v4500
        %v4533 = vsel %vm4469, %v4437, %v4501
        %v4534 = vpack.c.bf16 %v4502, %v4502
        %v4535 = vpack.c.bf16 %v4503, %v4503
        %v4536 = vpack.c.bf16 %v4504, %v4504
        %v4537 = vpack.c.bf16 %v4505, %v4505
        %v4538 = vpack.c.bf16 %v4506, %v4506
        %v4539 = vpack.c.bf16 %v4507, %v4507
        %v4540 = vpack.c.bf16 %v4508, %v4508
        %v4541 = vpack.c.bf16 %v4509, %v4509
        %v4542 = vpack.c.bf16 %v4510, %v4510
        %v4543 = vpack.c.bf16 %v4511, %v4511
        %v4544 = vpack.c.bf16 %v4512, %v4512
        %v4545 = vpack.c.bf16 %v4513, %v4513
        %v4546 = vpack.c.bf16 %v4514, %v4514
        %v4547 = vpack.c.bf16 %v4515, %v4515
        %v4548 = vpack.c.bf16 %v4516, %v4516
        %v4549 = vpack.c.bf16 %v4517, %v4517
        %v4550 = vpack.c.bf16 %v4518, %v4518
        %v4551 = vpack.c.bf16 %v4519, %v4519
        %v4552 = vpack.c.bf16 %v4520, %v4520
        %v4553 = vpack.c.bf16 %v4521, %v4521
        %v4554 = vpack.c.bf16 %v4522, %v4522
        %v4555 = vpack.c.bf16 %v4523, %v4523
        %v4556 = vpack.c.bf16 %v4524, %v4524
        %v4557 = vpack.c.bf16 %v4525, %v4525
        %v4558 = vpack.c.bf16 %v4526, %v4526
        %v4559 = vpack.c.bf16 %v4527, %v4527
        %v4560 = vpack.c.bf16 %v4528, %v4528
        %v4561 = vpack.c.bf16 %v4529, %v4529
        %v4562 = vpack.c.bf16 %v4530, %v4530
        %v4563 = vpack.c.bf16 %v4531, %v4531
        %v4564 = vpack.c.bf16 %v4532, %v4532
        %v4565 = vpack.c.bf16 %v4533, %v4533
        %4566 = vst [vmem:[%s248] sm:$0xf] %v4534
        %4567 = vst [vmem:[%s248 + $0x4] sm:$0xf] %v4535
        %4568 = vst [vmem:[%s248 + $0x8] sm:$0xf] %v4536
        %4569 = vst [vmem:[%s248 + $0xc] sm:$0xf] %v4537
        %4570 = vst [vmem:[%s248 + $0x10] sm:$0xf] %v4538
        %4571 = vst [vmem:[%s248 + $0x14] sm:$0xf] %v4539
        %4572 = vst [vmem:[%s248 + $0x18] sm:$0xf] %v4540
        %4573 = vst [vmem:[%s248 + $0x1c] sm:$0xf] %v4541
        %4574 = vst [vmem:[%s248 + $0x20] sm:$0xf] %v4542
        %4575 = vst [vmem:[%s248 + $0x24] sm:$0xf] %v4543
        %4576 = vst [vmem:[%s248 + $0x28] sm:$0xf] %v4544
        %4577 = vst [vmem:[%s248 + $0x2c] sm:$0xf] %v4545
        %4578 = vst [vmem:[%s248 + $0x30] sm:$0xf] %v4546
        %4579 = vst [vmem:[%s248 + $0x34] sm:$0xf] %v4547
        %4580 = vst [vmem:[%s248 + $0x38] sm:$0xf] %v4548
        %4581 = vst [vmem:[%s248 + $0x3c] sm:$0xf] %v4549
        %4582 = vst [vmem:[%s248 + $0x40] sm:$0xf] %v4550
        %4583 = vst [vmem:[%s248 + $0x44] sm:$0xf] %v4551
        %4584 = vst [vmem:[%s248 + $0x48] sm:$0xf] %v4552
        %4585 = vst [vmem:[%s248 + $0x4c] sm:$0xf] %v4553
        %4586 = vst [vmem:[%s248 + $0x50] sm:$0xf] %v4554
        %4587 = vst [vmem:[%s248 + $0x54] sm:$0xf] %v4555
        %4588 = vst [vmem:[%s248 + $0x58] sm:$0xf] %v4556
        %4589 = vst [vmem:[%s248 + $0x5c] sm:$0xf] %v4557
        %4590 = vst [vmem:[%s248 + $0x60] sm:$0xf] %v4558
        %4591 = vst [vmem:[%s248 + $0x64] sm:$0xf] %v4559
        %4592 = vst [vmem:[%s248 + $0x68] sm:$0xf] %v4560
        %4593 = vst [vmem:[%s248 + $0x6c] sm:$0xf] %v4561
        %4594 = vst [vmem:[%s248 + $0x70] sm:$0xf] %v4562
        %4595 = vst [vmem:[%s248 + $0x74] sm:$0xf] %v4563
        %4596 = vst [vmem:[%s248 + $0x78] sm:$0xf] %v4564
        %4597 = vst [vmem:[%s248 + $0x7c] sm:$0xf] %v4565
        %s4598 = sand.u32 %s153, 1
        %s4599 = scalar_lea.sflag [#allocation3], %s4598
        %s4600 = sand.u32 %s153, 1
        %s4601 = smul.addr %s4600, 128
        %s4602 = scalar_lea.vmem [#allocation2], %s4601
        // Predicated region
        $region37: #{stem.1} parent=35 // pred_check
          %p4603 = pneg %p163
        $region38: #{stem.1} parent=35 // pred_check_branch
          %4605 = sbr.rel (%p4603) target = $region40
        $region39: #{stem.1} parent=35 // pred_region
          %s4606 = smul.u32 16, %s25
          %4608 = vsyncadd %s4599, 0
          %s4609 = smul.addr %s4606, 2
          %s4610 = sadd.s32 %s24, %s4609
          %s4611 = smul.addr %s23, 32
          %s4612 = sadd.s32 %s4610, %s4611
          %s4613 = smul.addr %s4612, 4
          %s4614 = scalar_lea.hbm %s4, %s4613
          %s4615 = sshll.u32 %s4602, 4
          %s4616 = int_to_ptr.vmem [resolvable:$true] %s4615
          %s4617 = sshll.u32 %s4614, 4
          %s4618 = int_to_ptr.hbm [resolvable:$true] %s4617
          %4623 = dma.vmem_to_hbm [thread:$0]  %s4616, 2048, %s4618, %s4599, 64, 64, 4
        $region40: #{stem.1} parent=35 // pred_fallthru
          _
      $region36: #{stem.1} parent=5 // pred_fallthru
        _
      %p4624 = scmp.le.s32.totalorder 2, %s13
      // Predicated region
      $region41: #{stem.1} parent=5 // pred_check
        %p4625 = pneg %p4624
      $region42: #{stem.1} parent=5 // pred_check_branch
        %4627 = sbr.rel (%p4625) target = $region44
      $region43: #{stem.1} parent=5 // pred_region
        %s4628 = ssub.s32 %s13, 2
        // Predicated region
        $region45: #{stem.1} parent=43 // pred_check
          %p4629 = pneg %p169
        $region46: #{stem.1} parent=43 // pred_check_branch
          %4631 = sbr.rel (%p4629) target = $region48
        $region47: #{stem.1} parent=43 // pred_region
          %s4632 = sand.u32 %s154, 1
          %s4633 = scalar_lea.sflag [#allocation3], %s4632
          %s4634 = sand.u32 %s154, 1
          %s4635 = smul.addr %s4634, 128
          %s4636 = scalar_lea.vmem [#allocation2], %s4635
          %4638 = dma.done %s4633, 2048
        $region48: #{stem.1} parent=43 // pred_fallthru
          _
      $region44: #{stem.1} parent=5 // pred_fallthru
        _
    $region6: #{stem.1} parent=1 // loop_footer
      %s17 = sadd.s32 1, %s13
    $region7: #{stem.1} parent=1 // loop_footer_branch
      %12 = sbr.rel target = $region3
    $region8: #{stem.1} parent=1 // loop_exit
      _
    %4639 = vsyncpa [#allocation3], 1
    %s4640 = scalar_lea.sflag [#allocation3], 1
    %4641 = vsyncpa %s4640, 1

</llo_original>
